<compile_context>
chip_gen: v6e
topology: v6e:2x2x1
jax: 0.10.0
libtpu: 0.0.40
codegen_flags: <defaults>
</compile_context>

<pallas_src>
import functools

import jax
import jax.numpy as jnp
from jax.experimental import pallas as pl
from jax.experimental.pallas import tpu as pltpu


def _leaky_relu(y, slope=0.01):
    return jnp.where(y > 0, y, slope * y)


# -----------------------------------------------------------------------------
# Fused GSConv kernel: 1x1 conv + BN + LeakyReLU -> 5x5 depthwise + BN + LeakyReLU
# -> (folded) channel shuffle.  One (batch, H-tile) per grid step.
# -----------------------------------------------------------------------------
def _gsconv_kernel(x_top_ref, x_mid_ref, x_bot_ref,
                   w1_ref, b1_ref, w2_ref, b2_ref,
                   o_ref, x1p_ref, *, TH, W, C1, c_, K):
    P = K // 2                      # halo / SAME pad = 2 for the 5x5 depthwise
    t = pl.program_id(1)
    n_t = pl.num_programs(1)

    # --- SAME padding: zero only the scratch border strips (not the whole tile).
    # W edges (image left/right border) every step:
    x1p_ref[:, 0:P, :] = jnp.zeros((TH + 2 * P, P, c_), jnp.float32)
    x1p_ref[:, P + W:P + W + P, :] = jnp.zeros((TH + 2 * P, P, c_), jnp.float32)

    # H edges only at the image top/bottom (interior tiles get real halo rows below).
    @pl.when(t == 0)
    def _():
        x1p_ref[0:P, :, :] = jnp.zeros((P, W + 2 * P, c_), jnp.float32)

    @pl.when(t == n_t - 1)
    def _():
        x1p_ref[TH + P:TH + 2 * P, :, :] = jnp.zeros((P, W + 2 * P, c_), jnp.float32)

    # --- cv1: 1x1 conv (BN folded) + LeakyReLU as one MXU matmul per row block.
    w1 = w1_ref[...].astype(jnp.float32)          # (C1, c_), BN-scale folded, shuffled
    b1 = b1_ref[0, :].astype(jnp.float32)         # (c_,)

    def conv1x1_act(x_rwc):                       # (R, W, C1) -> (R, W, c_)
        r = x_rwc.shape[0]
        y = jnp.dot(x_rwc.reshape(r * W, C1).astype(jnp.float32), w1,
                    preferred_element_type=jnp.float32)
        return _leaky_relu(y + b1).reshape(r, W, c_)

    # cv1 on the tile body; keep the value (it is also half of the output concat).
    a_mid = conv1x1_act(x_mid_ref[0])
    x1p_ref[P:P + TH, P:P + W, :] = a_mid

    # cv1 on the 2-row halos (skipped at the image border -> zero padding remains).
    @pl.when(t > 0)
    def _():
        x1p_ref[0:P, P:P + W, :] = conv1x1_act(x_top_ref[0])

    @pl.when(t < n_t - 1)
    def _():
        x1p_ref[TH + P:TH + 2 * P, P:P + W, :] = conv1x1_act(x_bot_ref[0])

    # --- cv2: depthwise KxK reading shifted windows straight from the VMEM scratch.
    w2 = w2_ref[...].astype(jnp.float32)                        # (K, K, c_)
    b2 = b2_ref[0, :].astype(jnp.float32)                       # (c_,)
    acc = jnp.broadcast_to(b2, (TH, W, c_))                     # bias folded into init
    for kh in range(K):
        for kw in range(K):
            acc = acc + x1p_ref[kh:kh + TH, kw:kw + W, :] * w2[kh, kw, :]
    d = _leaky_relu(acc)

    # --- channel shuffle (pre-folded offline): out = [x1_even, d_even, x1_odd, d_odd]
    h = c_ // 2
    o_ref[0, :, :, 0 * h:1 * h] = a_mid[:, :, :h].astype(o_ref.dtype)
    o_ref[0, :, :, 1 * h:2 * h] = d[:, :, :h].astype(o_ref.dtype)
    o_ref[0, :, :, 2 * h:3 * h] = a_mid[:, :, h:].astype(o_ref.dtype)
    o_ref[0, :, :, 3 * h:4 * h] = d[:, :, h:].astype(o_ref.dtype)


# -----------------------------------------------------------------------------
# Tile-height heuristic: biggest TH dividing H (multiple of the halo P) whose
# per-step VMEM footprint (scratch + double-buffered in/out tiles) fits a budget.
# Bigger TH => smaller halo-recompute fraction and fewer per-step overheads.
# -----------------------------------------------------------------------------
def _auto_tile_h(H, W, C1, c2, c_, P, itemsize, budget_bytes=8 * 1024 * 1024):
    best = None
    th = P
    while th <= H:
        if H % th == 0:
            vmem = ((th + 2 * P) * (W + 2 * P) * c_ * 4      # f32 scratch
                    + 2 * th * W * C1 * itemsize             # body input (x2 buffers)
                    + 4 * P * W * C1 * itemsize              # two halos (x2 buffers)
                    + 2 * th * W * c2 * itemsize)            # output tile (x2 buffers)
            if vmem <= budget_bytes:
                best = th
        th += P
    return best if best is not None else P


# -----------------------------------------------------------------------------
# Wrapper (NHWC module boundary).
# -----------------------------------------------------------------------------
def gsconv_forward(x_nhwc, params, *, tile_h=None):
    """Fused GSConv forward.  x_nhwc: (B, H, W, C1) channels-last.
    Returns (B, H, W, c2) with the exact PyTorch GSConv channel order."""
    B, H, W, C1 = x_nhwc.shape
    w1, b1, w2, b2 = params["w1"], params["b1"], params["w2"], params["b2"]
    c_ = w1.shape[1]
    K = w2.shape[0]
    P = K // 2
    c2 = 2 * c_
    assert c_ % 2 == 0
    assert H % P == 0, "H must be a multiple of K//2 for the halo BlockSpecs"

    itemsize = jnp.dtype(x_nhwc.dtype).itemsize
    if tile_h is not None and H % tile_h == 0 and tile_h % P == 0:
        TH = tile_h
    else:
        TH = _auto_tile_h(H, W, C1, c2, c_, P, itemsize)
    n_t = H // TH
    n_hb = H // P                                # number of P-row halo blocks in H

    def top_map(b, t):                           # rows [t*TH - P, t*TH)
        return (b, jnp.maximum(t * (TH // P) - 1, 0), 0, 0)

    def bot_map(b, t):                           # rows [(t+1)*TH, (t+1)*TH + P)
        return (b, jnp.minimum((t + 1) * (TH // P), n_hb - 1), 0, 0)

    kernel = functools.partial(_gsconv_kernel, TH=TH, W=W, C1=C1, c_=c_, K=K)

    return pl.pallas_call(
        kernel,
        out_shape=jax.ShapeDtypeStruct((B, H, W, c2), x_nhwc.dtype),
        grid=(B, n_t),
        in_specs=[
            pl.BlockSpec((1, P, W, C1), top_map),                      # top halo rows
            pl.BlockSpec((1, TH, W, C1), lambda b, t: (b, t, 0, 0)),   # tile body
            pl.BlockSpec((1, P, W, C1), bot_map),                      # bottom halo rows
            pl.BlockSpec((C1, c_), lambda b, t: (0, 0)),               # folded 1x1 weight
            pl.BlockSpec((1, c_), lambda b, t: (0, 0)),                # folded 1x1 bias
            pl.BlockSpec((K, K, c_), lambda b, t: (0, 0, 0)),          # folded dw weight
            pl.BlockSpec((1, c_), lambda b, t: (0, 0)),                # folded dw bias
        ],
        out_specs=pl.BlockSpec((1, TH, W, c2), lambda b, t: (b, t, 0, 0)),
        scratch_shapes=[pltpu.VMEM((TH + 2 * P, W + 2 * P, c_), jnp.float32)],
        compiler_params=pltpu.CompilerParams(
            dimension_semantics=("parallel", "parallel")),
    )(x_nhwc, x_nhwc, x_nhwc, w1, b1, w2, b2)


# -----------------------------------------------------------------------------
# Offline parameter preparation: fold eval-mode BN into the conv weights and
# pre-apply the channel shuffle as a static permutation of the output channels.
# -----------------------------------------------------------------------------
def fold_gsconv_params(w1_oihw, bn1, w2_oihw, bn2, eps=1e-5):
    c_ = w1_oihw.shape[0]
    assert c_ % 2 == 0, "c2//2 must be even for the folded channel shuffle"
    assert w2_oihw.shape[1] == 1, "cv2 must be depthwise (groups == c_)"

    def fold(gamma, beta, mean, var):
        s = gamma / jnp.sqrt(var + eps)
        return s, beta - mean * s

    s1, bb1 = fold(*bn1)
    s2, bb2 = fold(*bn2)

    # Torch shuffle == output channels are [even channels of concat(x1,d), odd ones].
    # Permute x1's / d's channels to "evens first, then odds" once, offline.
    perm = jnp.concatenate([jnp.arange(0, c_, 2), jnp.arange(1, c_, 2)])

    w1 = jnp.transpose(w1_oihw[:, :, 0, 0], (1, 0)) * s1[None, :]            # (C1, c_)
    w2 = jnp.transpose(w2_oihw[:, 0, :, :], (1, 2, 0)) * s2[None, None, :]   # (K, K, c_)
    return {
        "w1": w1[:, perm],
        "b1": bb1[perm].reshape(1, c_),
        "w2": w2[:, :, perm],
        "b2": bb2[perm].reshape(1, c_),
    }


# -----------------------------------------------------------------------------
# Pure-JAX reference mirroring the PyTorch GSConv.forward exactly (NCHW layout).
# -----------------------------------------------------------------------------
def ref_gsconv_nchw(x_nchw, w1_oihw, bn1, w2_oihw, bn2, eps=1e-5):
    def bn(y, p):
        g, b, m, v = p
        s = g / jnp.sqrt(v + eps)
        return y * s[None, :, None, None] + (b - m * s)[None, :, None, None]

    def lrelu(y):
        return jnp.where(y > 0, y, 0.01 * y)

    dn = ("NCHW", "OIHW", "NCHW")
    c_ = w1_oihw.shape[0]
    k = w2_oihw.shape[-1]
    p = k // 2
    x1 = lrelu(bn(jax.lax.conv_general_dilated(
        x_nchw, w1_oihw, (1, 1), "VALID", dimension_numbers=dn), bn1))
    d = lrelu(bn(jax.lax.conv_general_dilated(
        x1, w2_oihw, (1, 1), ((p, p), (p, p)), dimension_numbers=dn,
        feature_group_count=c_), bn2))
    x2 = jnp.concatenate([x1, d], axis=1)
    b, n, hh, ww = x2.shape
    y = x2.reshape(b * n // 2, 2, hh * ww)
    y = jnp.transpose(y, (1, 0, 2))
    y = y.reshape(2, -1, n // 2, hh, ww)
    return jnp.concatenate([y[0], y[1]], axis=1)


if __name__ == "__main__":
    # GSConv(c1=4, c2=8) with module defaults (k=1, s=1, act=True) -> c_ = 4, cv2 = 5x5 dw.
    B, C1, H, W = 2, 4, 16, 16
    C2, K = 8, 5
    c_ = C2 // 2

    key = jax.random.PRNGKey(0)
    kx, kw1, kw2, kb1, kb2 = jax.random.split(key, 5)
    x_nchw = jax.random.normal(kx, (B, C1, H, W), jnp.float32)
    w1_oihw = jax.random.normal(kw1, (c_, C1, 1, 1), jnp.float32) * 0.4
    w2_oihw = jax.random.normal(kw2, (c_, 1, K, K), jnp.float32) * 0.2

    def bn_stats(k, c):
        k1, k2, k3, k4 = jax.random.split(k, 4)
        gamma = 1.0 + 0.1 * jax.random.normal(k1, (c,), jnp.float32)
        beta = 0.1 * jax.random.normal(k2, (c,), jnp.float32)
        mean = 0.1 * jax.random.normal(k3, (c,), jnp.float32)
        var = 0.5 + jax.random.uniform(k4, (c,), jnp.float32)
        return (gamma, beta, mean, var)

    bn1 = bn_stats(kb1, c_)
    bn2 = bn_stats(kb2, c_)

    # Pallas path: channels-last module boundary (no transposes inside the op).
    x_nhwc = jnp.transpose(x_nchw, (0, 2, 3, 1))
    params = fold_gsconv_params(w1_oihw, bn1, w2_oihw, bn2)

    # Exact PyTorch-semantics reference (NCHW), compared in NHWC.
    ref_nchw = jax.block_until_ready(
        ref_gsconv_nchw(x_nchw, w1_oihw, bn1, w2_oihw, bn2))
    ref_nhwc = jnp.transpose(ref_nchw, (0, 2, 3, 1))

    # 1) auto tile height (single tile here -> no halo recompute)
    out_auto = jax.block_until_ready(gsconv_forward(x_nhwc, params))
    # 2) forced multi-tile path (exercises the halo / border branches)
    out_tiled = jax.block_until_ready(gsconv_forward(x_nhwc, params, tile_h=8))

    assert out_auto.shape == (B, H, W, C2), out_auto.shape
    err_a = float(jnp.max(jnp.abs(out_auto - ref_nhwc)))
    err_t = float(jnp.max(jnp.abs(out_tiled - ref_nhwc)))
    assert jnp.allclose(out_auto, ref_nhwc, rtol=1e-4, atol=1e-4), err_a
    assert jnp.allclose(out_tiled, ref_nhwc, rtol=1e-4, atol=1e-4), err_t
    print("KERNEL_OK")
</pallas_src>

<mosaic_0001>
module attributes {stable_mosaic.version = 11 : i64} {
  func.func @_gsconv_kernel(%arg0: i32, %arg1: i32, %arg2: memref<1x2x16x4xf32, #tpu.memory_space<vmem>>, %arg3: memref<1x16x16x4xf32, #tpu.memory_space<vmem>>, %arg4: memref<1x2x16x4xf32, #tpu.memory_space<vmem>>, %arg5: memref<4x4xf32, #tpu.memory_space<vmem>>, %arg6: memref<1x4xf32, #tpu.memory_space<vmem>>, %arg7: memref<5x5x4xf32, #tpu.memory_space<vmem>>, %arg8: memref<1x4xf32, #tpu.memory_space<vmem>>, %arg9: memref<1x16x16x8xf32, #tpu.memory_space<vmem>>, %arg10: memref<20x20x4xf32, #tpu.memory_space<vmem>>) attributes {dimension_semantics = [#tpu.dimension_semantics<parallel>, #tpu.dimension_semantics<parallel>], iteration_bounds = array<i64: 2, 1>, scalar_prefetch = 0 : i64, scratch_operands = 1 : i64, tpu.core_type = #tpu.core_type<tc>, window_params = [{transform_indices = @transform_0, window_bounds = array<i64: 1, 2, 16, 4>}, {transform_indices = @transform_1, window_bounds = array<i64: 1, 16, 16, 4>}, {transform_indices = @transform_2, window_bounds = array<i64: 1, 2, 16, 4>}, {pipeline_mode = #tpu.pipeline_mode<synchronous>, transform_indices = @transform_3, window_bounds = array<i64: 4, 4>}, {pipeline_mode = #tpu.pipeline_mode<synchronous>, transform_indices = @transform_4, window_bounds = array<i64: 1, 4>}, {pipeline_mode = #tpu.pipeline_mode<synchronous>, transform_indices = @transform_5, window_bounds = array<i64: 5, 5, 4>}, {pipeline_mode = #tpu.pipeline_mode<synchronous>, transform_indices = @transform_6, window_bounds = array<i64: 1, 4>}, {transform_indices = @transform_7, window_bounds = array<i64: 1, 16, 16, 8>}]} {
    %cst = arith.constant 0.000000e+00 : f32
    %0 = vector.broadcast %cst : f32 to vector<20x2x4xf32>
    %c0 = arith.constant 0 : index
    %c0_0 = arith.constant 0 : index
    %c0_1 = arith.constant 0 : index
    %1 = vector.load %arg10[%c0, %c0_0, %c0_1] : memref<20x20x4xf32, #tpu.memory_space<vmem>>, vector<20x2x4xf32>
    tpu.vector_store %arg10[%c0, %c0_0, %c0_1], %0 {strides = array<i32>} : memref<20x20x4xf32, #tpu.memory_space<vmem>>, vector<20x2x4xf32>,
    %cst_2 = arith.constant 0.000000e+00 : f32
    %2 = vector.broadcast %cst_2 : f32 to vector<20x2x4xf32>
    %c0_3 = arith.constant 0 : index
    %c18 = arith.constant 18 : index
    %c0_4 = arith.constant 0 : index
    %3 = vector.load %arg10[%c0_3, %c18, %c0_4] : memref<20x20x4xf32, #tpu.memory_space<vmem>>, vector<20x2x4xf32>
    tpu.vector_store %arg10[%c0_3, %c18, %c0_4], %2 {strides = array<i32>} : memref<20x20x4xf32, #tpu.memory_space<vmem>>, vector<20x2x4xf32>,
    %c0_i32 = arith.constant 0 : i32
    %4 = arith.cmpi eq, %arg1, %c0_i32 : i32
    %5 = arith.extui %4 : i1 to i32
    %c0_i32_5 = arith.constant 0 : i32
    %6 = arith.cmpi ne, %5, %c0_i32_5 : i32
    scf.if %6 {
      %cst_119 = arith.constant 0.000000e+00 : f32
      %234 = vector.broadcast %cst_119 : f32 to vector<2x20x4xf32>
      %c0_120 = arith.constant 0 : index
      %c0_121 = arith.constant 0 : index
      %c0_122 = arith.constant 0 : index
      %235 = vector.load %arg10[%c0_120, %c0_121, %c0_122] : memref<20x20x4xf32, #tpu.memory_space<vmem>>, vector<2x20x4xf32>
      tpu.vector_store %arg10[%c0_120, %c0_121, %c0_122], %234 {strides = array<i32>} : memref<20x20x4xf32, #tpu.memory_space<vmem>>, vector<2x20x4xf32>,
    } else {
    }
    %c0_i32_6 = arith.constant 0 : i32
    %7 = arith.cmpi eq, %arg1, %c0_i32_6 : i32
    %8 = arith.extui %7 : i1 to i32
    %c0_i32_7 = arith.constant 0 : i32
    %9 = arith.cmpi ne, %8, %c0_i32_7 : i32
    scf.if %9 {
      %cst_119 = arith.constant 0.000000e+00 : f32
      %234 = vector.broadcast %cst_119 : f32 to vector<2x20x4xf32>
      %c18_120 = arith.constant 18 : index
      %c0_121 = arith.constant 0 : index
      %c0_122 = arith.constant 0 : index
      %235 = vector.load %arg10[%c18_120, %c0_121, %c0_122] : memref<20x20x4xf32, #tpu.memory_space<vmem>>, vector<2x20x4xf32>
      tpu.vector_store %arg10[%c18_120, %c0_121, %c0_122], %234 {strides = array<i32>} : memref<20x20x4xf32, #tpu.memory_space<vmem>>, vector<2x20x4xf32>,
    } else {
    }
    %c0_8 = arith.constant 0 : index
    %c0_9 = arith.constant 0 : index
    %10 = vector.load %arg5[%c0_8, %c0_9] : memref<4x4xf32, #tpu.memory_space<vmem>>, vector<4x4xf32>
    %c0_10 = arith.constant 0 : index
    %c0_11 = arith.constant 0 : index
    %11 = vector.load %arg6[%c0_10, %c0_11] : memref<1x4xf32, #tpu.memory_space<vmem>>, vector<1x4xf32>
    %12 = vector.shape_cast %11 : vector<1x4xf32> to vector<4xf32>
    %c0_12 = arith.constant 0 : index
    %c0_13 = arith.constant 0 : index
    %c0_14 = arith.constant 0 : index
    %c0_15 = arith.constant 0 : index
    %13 = vector.load %arg3[%c0_12, %c0_13, %c0_14, %c0_15] : memref<1x16x16x4xf32, #tpu.memory_space<vmem>>, vector<1x16x16x4xf32>
    %14 = vector.shape_cast %13 : vector<1x16x16x4xf32> to vector<16x16x4xf32>
    %15 = vector.shape_cast %14 : vector<16x16x4xf32> to vector<256x4xf32>
    %cst_16 = arith.constant dense<0.000000e+00> : vector<256x4xf32>
    %16 = tpu.matmul %15, %10, %cst_16 {dimension_numbers = #tpu.dot_dimension_numbers<[1], [0], [0], [1], [0, 0, 1, 1], [], []>} : vector<256x4xf32>, vector<4x4xf32>, vector<256x4xf32> -> vector<256x4xf32>
    %17 = vector.shape_cast %12 : vector<4xf32> to vector<1x4xf32>
    %18 = vector.broadcast %17 : vector<1x4xf32> to vector<256x4xf32>
    %19 = arith.addf %16, %18 : vector<256x4xf32>
    %cst_17 = arith.constant 0.000000e+00 : f32
    %20 = vector.broadcast %cst_17 : f32 to vector<256x4xf32>
    %21 = arith.cmpf ogt, %19, %20 : vector<256x4xf32>
    %cst_18 = arith.constant 0.00999999977 : f32
    %22 = vector.broadcast %cst_18 : f32 to vector<256x4xf32>
    %23 = arith.mulf %22, %19 : vector<256x4xf32>
    %24 = arith.select %21, %19, %23 : vector<256x4xi1>, vector<256x4xf32>
    %25 = vector.shape_cast %24 : vector<256x4xf32> to vector<16x16x4xf32>
    %c2 = arith.constant 2 : index
    %c2_19 = arith.constant 2 : index
    %c0_20 = arith.constant 0 : index
    %26 = vector.load %arg10[%c2, %c2_19, %c0_20] : memref<20x20x4xf32, #tpu.memory_space<vmem>>, vector<16x16x4xf32>
    tpu.vector_store %arg10[%c2, %c2_19, %c0_20], %25 {strides = array<i32>} : memref<20x20x4xf32, #tpu.memory_space<vmem>>, vector<16x16x4xf32>,
    %c0_i32_21 = arith.constant 0 : i32
    %27 = arith.cmpi sgt, %arg1, %c0_i32_21 : i32
    %28 = arith.extui %27 : i1 to i32
    %c0_i32_22 = arith.constant 0 : i32
    %29 = arith.cmpi ne, %28, %c0_i32_22 : i32
    scf.if %29 {
      %c0_119 = arith.constant 0 : index
      %c0_120 = arith.constant 0 : index
      %c0_121 = arith.constant 0 : index
      %c0_122 = arith.constant 0 : index
      %234 = vector.load %arg2[%c0_119, %c0_120, %c0_121, %c0_122] : memref<1x2x16x4xf32, #tpu.memory_space<vmem>>, vector<1x2x16x4xf32>
      %235 = vector.shape_cast %234 : vector<1x2x16x4xf32> to vector<2x16x4xf32>
      %236 = vector.shape_cast %235 : vector<2x16x4xf32> to vector<32x4xf32>
      %cst_123 = arith.constant dense<0.000000e+00> : vector<32x4xf32>
      %237 = tpu.matmul %236, %10, %cst_123 {dimension_numbers = #tpu.dot_dimension_numbers<[1], [0], [0], [1], [0, 0, 1, 1], [], []>} : vector<32x4xf32>, vector<4x4xf32>, vector<32x4xf32> -> vector<32x4xf32>
      %238 = vector.shape_cast %12 : vector<4xf32> to vector<1x4xf32>
      %239 = vector.broadcast %238 : vector<1x4xf32> to vector<32x4xf32>
      %240 = arith.addf %237, %239 : vector<32x4xf32>
      %cst_124 = arith.constant 0.000000e+00 : f32
      %241 = vector.broadcast %cst_124 : f32 to vector<32x4xf32>
      %242 = arith.cmpf ogt, %240, %241 : vector<32x4xf32>
      %cst_125 = arith.constant 0.00999999977 : f32
      %243 = vector.broadcast %cst_125 : f32 to vector<32x4xf32>
      %244 = arith.mulf %243, %240 : vector<32x4xf32>
      %245 = arith.select %242, %240, %244 : vector<32x4xi1>, vector<32x4xf32>
      %246 = vector.shape_cast %245 : vector<32x4xf32> to vector<2x16x4xf32>
      %c0_126 = arith.constant 0 : index
      %c2_127 = arith.constant 2 : index
      %c0_128 = arith.constant 0 : index
      %247 = vector.load %arg10[%c0_126, %c2_127, %c0_128] : memref<20x20x4xf32, #tpu.memory_space<vmem>>, vector<2x16x4xf32>
      tpu.vector_store %arg10[%c0_126, %c2_127, %c0_128], %246 {strides = array<i32>} : memref<20x20x4xf32, #tpu.memory_space<vmem>>, vector<2x16x4xf32>,
    } else {
    }
    %c0_i32_23 = arith.constant 0 : i32
    %30 = arith.cmpi slt, %arg1, %c0_i32_23 : i32
    %31 = arith.extui %30 : i1 to i32
    %c0_i32_24 = arith.constant 0 : i32
    %32 = arith.cmpi ne, %31, %c0_i32_24 : i32
    scf.if %32 {
      %c0_119 = arith.constant 0 : index
      %c0_120 = arith.constant 0 : index
      %c0_121 = arith.constant 0 : index
      %c0_122 = arith.constant 0 : index
      %234 = vector.load %arg4[%c0_119, %c0_120, %c0_121, %c0_122] : memref<1x2x16x4xf32, #tpu.memory_space<vmem>>, vector<1x2x16x4xf32>
      %235 = vector.shape_cast %234 : vector<1x2x16x4xf32> to vector<2x16x4xf32>
      %236 = vector.shape_cast %235 : vector<2x16x4xf32> to vector<32x4xf32>
      %cst_123 = arith.constant dense<0.000000e+00> : vector<32x4xf32>
      %237 = tpu.matmul %236, %10, %cst_123 {dimension_numbers = #tpu.dot_dimension_numbers<[1], [0], [0], [1], [0, 0, 1, 1], [], []>} : vector<32x4xf32>, vector<4x4xf32>, vector<32x4xf32> -> vector<32x4xf32>
      %238 = vector.shape_cast %12 : vector<4xf32> to vector<1x4xf32>
      %239 = vector.broadcast %238 : vector<1x4xf32> to vector<32x4xf32>
      %240 = arith.addf %237, %239 : vector<32x4xf32>
      %cst_124 = arith.constant 0.000000e+00 : f32
      %241 = vector.broadcast %cst_124 : f32 to vector<32x4xf32>
      %242 = arith.cmpf ogt, %240, %241 : vector<32x4xf32>
      %cst_125 = arith.constant 0.00999999977 : f32
      %243 = vector.broadcast %cst_125 : f32 to vector<32x4xf32>
      %244 = arith.mulf %243, %240 : vector<32x4xf32>
      %245 = arith.select %242, %240, %244 : vector<32x4xi1>, vector<32x4xf32>
      %246 = vector.shape_cast %245 : vector<32x4xf32> to vector<2x16x4xf32>
      %c18_126 = arith.constant 18 : index
      %c2_127 = arith.constant 2 : index
      %c0_128 = arith.constant 0 : index
      %247 = vector.load %arg10[%c18_126, %c2_127, %c0_128] : memref<20x20x4xf32, #tpu.memory_space<vmem>>, vector<2x16x4xf32>
      tpu.vector_store %arg10[%c18_126, %c2_127, %c0_128], %246 {strides = array<i32>} : memref<20x20x4xf32, #tpu.memory_space<vmem>>, vector<2x16x4xf32>,
    } else {
    }
    %c0_25 = arith.constant 0 : index
    %c0_26 = arith.constant 0 : index
    %c0_27 = arith.constant 0 : index
    %33 = vector.load %arg7[%c0_25, %c0_26, %c0_27] : memref<5x5x4xf32, #tpu.memory_space<vmem>>, vector<5x5x4xf32>
    %c0_28 = arith.constant 0 : index
    %c0_29 = arith.constant 0 : index
    %34 = vector.load %arg8[%c0_28, %c0_29] : memref<1x4xf32, #tpu.memory_space<vmem>>, vector<1x4xf32>
    %35 = vector.shape_cast %34 : vector<1x4xf32> to vector<4xf32>
    %36 = vector.shape_cast %35 : vector<4xf32> to vector<1x1x4xf32>
    %37 = vector.broadcast %36 : vector<1x1x4xf32> to vector<16x16x4xf32>
    %c0_30 = arith.constant 0 : index
    %c0_31 = arith.constant 0 : index
    %c0_32 = arith.constant 0 : index
    %38 = vector.load %arg10[%c0_30, %c0_31, %c0_32] : memref<20x20x4xf32, #tpu.memory_space<vmem>>, vector<16x16x4xf32>
    %39 = vector.extract_strided_slice %33 {offsets = [0, 0, 0], sizes = [1, 1, 4], strides = [1, 1, 1]} : vector<5x5x4xf32> to vector<1x1x4xf32>
    %40 = vector.shape_cast %39 : vector<1x1x4xf32> to vector<4xf32>
    %41 = vector.shape_cast %40 : vector<4xf32> to vector<1x1x4xf32>
    %42 = vector.broadcast %41 : vector<1x1x4xf32> to vector<16x16x4xf32>
    %43 = arith.mulf %38, %42 : vector<16x16x4xf32>
    %44 = arith.addf %37, %43 : vector<16x16x4xf32>
    %c0_33 = arith.constant 0 : index
    %c1 = arith.constant 1 : index
    %c0_34 = arith.constant 0 : index
    %45 = vector.load %arg10[%c0_33, %c1, %c0_34] : memref<20x20x4xf32, #tpu.memory_space<vmem>>, vector<16x16x4xf32>
    %46 = vector.extract_strided_slice %33 {offsets = [0, 1, 0], sizes = [1, 1, 4], strides = [1, 1, 1]} : vector<5x5x4xf32> to vector<1x1x4xf32>
    %47 = vector.shape_cast %46 : vector<1x1x4xf32> to vector<4xf32>
    %48 = vector.shape_cast %47 : vector<4xf32> to vector<1x1x4xf32>
    %49 = vector.broadcast %48 : vector<1x1x4xf32> to vector<16x16x4xf32>
    %50 = arith.mulf %45, %49 : vector<16x16x4xf32>
    %51 = arith.addf %44, %50 : vector<16x16x4xf32>
    %c0_35 = arith.constant 0 : index
    %c2_36 = arith.constant 2 : index
    %c0_37 = arith.constant 0 : index
    %52 = vector.load %arg10[%c0_35, %c2_36, %c0_37] : memref<20x20x4xf32, #tpu.memory_space<vmem>>, vector<16x16x4xf32>
    %53 = vector.extract_strided_slice %33 {offsets = [0, 2, 0], sizes = [1, 1, 4], strides = [1, 1, 1]} : vector<5x5x4xf32> to vector<1x1x4xf32>
    %54 = vector.shape_cast %53 : vector<1x1x4xf32> to vector<4xf32>
    %55 = vector.shape_cast %54 : vector<4xf32> to vector<1x1x4xf32>
    %56 = vector.broadcast %55 : vector<1x1x4xf32> to vector<16x16x4xf32>
    %57 = arith.mulf %52, %56 : vector<16x16x4xf32>
    %58 = arith.addf %51, %57 : vector<16x16x4xf32>
    %c0_38 = arith.constant 0 : index
    %c3 = arith.constant 3 : index
    %c0_39 = arith.constant 0 : index
    %59 = vector.load %arg10[%c0_38, %c3, %c0_39] : memref<20x20x4xf32, #tpu.memory_space<vmem>>, vector<16x16x4xf32>
    %60 = vector.extract_strided_slice %33 {offsets = [0, 3, 0], sizes = [1, 1, 4], strides = [1, 1, 1]} : vector<5x5x4xf32> to vector<1x1x4xf32>
    %61 = vector.shape_cast %60 : vector<1x1x4xf32> to vector<4xf32>
    %62 = vector.shape_cast %61 : vector<4xf32> to vector<1x1x4xf32>
    %63 = vector.broadcast %62 : vector<1x1x4xf32> to vector<16x16x4xf32>
    %64 = arith.mulf %59, %63 : vector<16x16x4xf32>
    %65 = arith.addf %58, %64 : vector<16x16x4xf32>
    %c0_40 = arith.constant 0 : index
    %c4 = arith.constant 4 : index
    %c0_41 = arith.constant 0 : index
    %66 = vector.load %arg10[%c0_40, %c4, %c0_41] : memref<20x20x4xf32, #tpu.memory_space<vmem>>, vector<16x16x4xf32>
    %67 = vector.extract_strided_slice %33 {offsets = [0, 4, 0], sizes = [1, 1, 4], strides = [1, 1, 1]} : vector<5x5x4xf32> to vector<1x1x4xf32>
    %68 = vector.shape_cast %67 : vector<1x1x4xf32> to vector<4xf32>
    %69 = vector.shape_cast %68 : vector<4xf32> to vector<1x1x4xf32>
    %70 = vector.broadcast %69 : vector<1x1x4xf32> to vector<16x16x4xf32>
    %71 = arith.mulf %66, %70 : vector<16x16x4xf32>
    %72 = arith.addf %65, %71 : vector<16x16x4xf32>
    %c1_42 = arith.constant 1 : index
    %c0_43 = arith.constant 0 : index
    %c0_44 = arith.constant 0 : index
    %73 = vector.load %arg10[%c1_42, %c0_43, %c0_44] : memref<20x20x4xf32, #tpu.memory_space<vmem>>, vector<16x16x4xf32>
    %74 = vector.extract_strided_slice %33 {offsets = [1, 0, 0], sizes = [1, 1, 4], strides = [1, 1, 1]} : vector<5x5x4xf32> to vector<1x1x4xf32>
    %75 = vector.shape_cast %74 : vector<1x1x4xf32> to vector<4xf32>
    %76 = vector.shape_cast %75 : vector<4xf32> to vector<1x1x4xf32>
    %77 = vector.broadcast %76 : vector<1x1x4xf32> to vector<16x16x4xf32>
    %78 = arith.mulf %73, %77 : vector<16x16x4xf32>
    %79 = arith.addf %72, %78 : vector<16x16x4xf32>
    %c1_45 = arith.constant 1 : index
    %c1_46 = arith.constant 1 : index
    %c0_47 = arith.constant 0 : index
    %80 = vector.load %arg10[%c1_45, %c1_46, %c0_47] : memref<20x20x4xf32, #tpu.memory_space<vmem>>, vector<16x16x4xf32>
    %81 = vector.extract_strided_slice %33 {offsets = [1, 1, 0], sizes = [1, 1, 4], strides = [1, 1, 1]} : vector<5x5x4xf32> to vector<1x1x4xf32>
    %82 = vector.shape_cast %81 : vector<1x1x4xf32> to vector<4xf32>
    %83 = vector.shape_cast %82 : vector<4xf32> to vector<1x1x4xf32>
    %84 = vector.broadcast %83 : vector<1x1x4xf32> to vector<16x16x4xf32>
    %85 = arith.mulf %80, %84 : vector<16x16x4xf32>
    %86 = arith.addf %79, %85 : vector<16x16x4xf32>
    %c1_48 = arith.constant 1 : index
    %c2_49 = arith.constant 2 : index
    %c0_50 = arith.constant 0 : index
    %87 = vector.load %arg10[%c1_48, %c2_49, %c0_50] : memref<20x20x4xf32, #tpu.memory_space<vmem>>, vector<16x16x4xf32>
    %88 = vector.extract_strided_slice %33 {offsets = [1, 2, 0], sizes = [1, 1, 4], strides = [1, 1, 1]} : vector<5x5x4xf32> to vector<1x1x4xf32>
    %89 = vector.shape_cast %88 : vector<1x1x4xf32> to vector<4xf32>
    %90 = vector.shape_cast %89 : vector<4xf32> to vector<1x1x4xf32>
    %91 = vector.broadcast %90 : vector<1x1x4xf32> to vector<16x16x4xf32>
    %92 = arith.mulf %87, %91 : vector<16x16x4xf32>
    %93 = arith.addf %86, %92 : vector<16x16x4xf32>
    %c1_51 = arith.constant 1 : index
    %c3_52 = arith.constant 3 : index
    %c0_53 = arith.constant 0 : index
    %94 = vector.load %arg10[%c1_51, %c3_52, %c0_53] : memref<20x20x4xf32, #tpu.memory_space<vmem>>, vector<16x16x4xf32>
    %95 = vector.extract_strided_slice %33 {offsets = [1, 3, 0], sizes = [1, 1, 4], strides = [1, 1, 1]} : vector<5x5x4xf32> to vector<1x1x4xf32>
    %96 = vector.shape_cast %95 : vector<1x1x4xf32> to vector<4xf32>
    %97 = vector.shape_cast %96 : vector<4xf32> to vector<1x1x4xf32>
    %98 = vector.broadcast %97 : vector<1x1x4xf32> to vector<16x16x4xf32>
    %99 = arith.mulf %94, %98 : vector<16x16x4xf32>
    %100 = arith.addf %93, %99 : vector<16x16x4xf32>
    %c1_54 = arith.constant 1 : index
    %c4_55 = arith.constant 4 : index
    %c0_56 = arith.constant 0 : index
    %101 = vector.load %arg10[%c1_54, %c4_55, %c0_56] : memref<20x20x4xf32, #tpu.memory_space<vmem>>, vector<16x16x4xf32>
    %102 = vector.extract_strided_slice %33 {offsets = [1, 4, 0], sizes = [1, 1, 4], strides = [1, 1, 1]} : vector<5x5x4xf32> to vector<1x1x4xf32>
    %103 = vector.shape_cast %102 : vector<1x1x4xf32> to vector<4xf32>
    %104 = vector.shape_cast %103 : vector<4xf32> to vector<1x1x4xf32>
    %105 = vector.broadcast %104 : vector<1x1x4xf32> to vector<16x16x4xf32>
    %106 = arith.mulf %101, %105 : vector<16x16x4xf32>
    %107 = arith.addf %100, %106 : vector<16x16x4xf32>
    %c2_57 = arith.constant 2 : index
    %c0_58 = arith.constant 0 : index
    %c0_59 = arith.constant 0 : index
    %108 = vector.load %arg10[%c2_57, %c0_58, %c0_59] : memref<20x20x4xf32, #tpu.memory_space<vmem>>, vector<16x16x4xf32>
    %109 = vector.extract_strided_slice %33 {offsets = [2, 0, 0], sizes = [1, 1, 4], strides = [1, 1, 1]} : vector<5x5x4xf32> to vector<1x1x4xf32>
    %110 = vector.shape_cast %109 : vector<1x1x4xf32> to vector<4xf32>
    %111 = vector.shape_cast %110 : vector<4xf32> to vector<1x1x4xf32>
    %112 = vector.broadcast %111 : vector<1x1x4xf32> to vector<16x16x4xf32>
    %113 = arith.mulf %108, %112 : vector<16x16x4xf32>
    %114 = arith.addf %107, %113 : vector<16x16x4xf32>
    %c2_60 = arith.constant 2 : index
    %c1_61 = arith.constant 1 : index
    %c0_62 = arith.constant 0 : index
    %115 = vector.load %arg10[%c2_60, %c1_61, %c0_62] : memref<20x20x4xf32, #tpu.memory_space<vmem>>, vector<16x16x4xf32>
    %116 = vector.extract_strided_slice %33 {offsets = [2, 1, 0], sizes = [1, 1, 4], strides = [1, 1, 1]} : vector<5x5x4xf32> to vector<1x1x4xf32>
    %117 = vector.shape_cast %116 : vector<1x1x4xf32> to vector<4xf32>
    %118 = vector.shape_cast %117 : vector<4xf32> to vector<1x1x4xf32>
    %119 = vector.broadcast %118 : vector<1x1x4xf32> to vector<16x16x4xf32>
    %120 = arith.mulf %115, %119 : vector<16x16x4xf32>
    %121 = arith.addf %114, %120 : vector<16x16x4xf32>
    %c2_63 = arith.constant 2 : index
    %c2_64 = arith.constant 2 : index
    %c0_65 = arith.constant 0 : index
    %122 = vector.load %arg10[%c2_63, %c2_64, %c0_65] : memref<20x20x4xf32, #tpu.memory_space<vmem>>, vector<16x16x4xf32>
    %123 = vector.extract_strided_slice %33 {offsets = [2, 2, 0], sizes = [1, 1, 4], strides = [1, 1, 1]} : vector<5x5x4xf32> to vector<1x1x4xf32>
    %124 = vector.shape_cast %123 : vector<1x1x4xf32> to vector<4xf32>
    %125 = vector.shape_cast %124 : vector<4xf32> to vector<1x1x4xf32>
    %126 = vector.broadcast %125 : vector<1x1x4xf32> to vector<16x16x4xf32>
    %127 = arith.mulf %122, %126 : vector<16x16x4xf32>
    %128 = arith.addf %121, %127 : vector<16x16x4xf32>
    %c2_66 = arith.constant 2 : index
    %c3_67 = arith.constant 3 : index
    %c0_68 = arith.constant 0 : index
    %129 = vector.load %arg10[%c2_66, %c3_67, %c0_68] : memref<20x20x4xf32, #tpu.memory_space<vmem>>, vector<16x16x4xf32>
    %130 = vector.extract_strided_slice %33 {offsets = [2, 3, 0], sizes = [1, 1, 4], strides = [1, 1, 1]} : vector<5x5x4xf32> to vector<1x1x4xf32>
    %131 = vector.shape_cast %130 : vector<1x1x4xf32> to vector<4xf32>
    %132 = vector.shape_cast %131 : vector<4xf32> to vector<1x1x4xf32>
    %133 = vector.broadcast %132 : vector<1x1x4xf32> to vector<16x16x4xf32>
    %134 = arith.mulf %129, %133 : vector<16x16x4xf32>
    %135 = arith.addf %128, %134 : vector<16x16x4xf32>
    %c2_69 = arith.constant 2 : index
    %c4_70 = arith.constant 4 : index
    %c0_71 = arith.constant 0 : index
    %136 = vector.load %arg10[%c2_69, %c4_70, %c0_71] : memref<20x20x4xf32, #tpu.memory_space<vmem>>, vector<16x16x4xf32>
    %137 = vector.extract_strided_slice %33 {offsets = [2, 4, 0], sizes = [1, 1, 4], strides = [1, 1, 1]} : vector<5x5x4xf32> to vector<1x1x4xf32>
    %138 = vector.shape_cast %137 : vector<1x1x4xf32> to vector<4xf32>
    %139 = vector.shape_cast %138 : vector<4xf32> to vector<1x1x4xf32>
    %140 = vector.broadcast %139 : vector<1x1x4xf32> to vector<16x16x4xf32>
    %141 = arith.mulf %136, %140 : vector<16x16x4xf32>
    %142 = arith.addf %135, %141 : vector<16x16x4xf32>
    %c3_72 = arith.constant 3 : index
    %c0_73 = arith.constant 0 : index
    %c0_74 = arith.constant 0 : index
    %143 = vector.load %arg10[%c3_72, %c0_73, %c0_74] : memref<20x20x4xf32, #tpu.memory_space<vmem>>, vector<16x16x4xf32>
    %144 = vector.extract_strided_slice %33 {offsets = [3, 0, 0], sizes = [1, 1, 4], strides = [1, 1, 1]} : vector<5x5x4xf32> to vector<1x1x4xf32>
    %145 = vector.shape_cast %144 : vector<1x1x4xf32> to vector<4xf32>
    %146 = vector.shape_cast %145 : vector<4xf32> to vector<1x1x4xf32>
    %147 = vector.broadcast %146 : vector<1x1x4xf32> to vector<16x16x4xf32>
    %148 = arith.mulf %143, %147 : vector<16x16x4xf32>
    %149 = arith.addf %142, %148 : vector<16x16x4xf32>
    %c3_75 = arith.constant 3 : index
    %c1_76 = arith.constant 1 : index
    %c0_77 = arith.constant 0 : index
    %150 = vector.load %arg10[%c3_75, %c1_76, %c0_77] : memref<20x20x4xf32, #tpu.memory_space<vmem>>, vector<16x16x4xf32>
    %151 = vector.extract_strided_slice %33 {offsets = [3, 1, 0], sizes = [1, 1, 4], strides = [1, 1, 1]} : vector<5x5x4xf32> to vector<1x1x4xf32>
    %152 = vector.shape_cast %151 : vector<1x1x4xf32> to vector<4xf32>
    %153 = vector.shape_cast %152 : vector<4xf32> to vector<1x1x4xf32>
    %154 = vector.broadcast %153 : vector<1x1x4xf32> to vector<16x16x4xf32>
    %155 = arith.mulf %150, %154 : vector<16x16x4xf32>
    %156 = arith.addf %149, %155 : vector<16x16x4xf32>
    %c3_78 = arith.constant 3 : index
    %c2_79 = arith.constant 2 : index
    %c0_80 = arith.constant 0 : index
    %157 = vector.load %arg10[%c3_78, %c2_79, %c0_80] : memref<20x20x4xf32, #tpu.memory_space<vmem>>, vector<16x16x4xf32>
    %158 = vector.extract_strided_slice %33 {offsets = [3, 2, 0], sizes = [1, 1, 4], strides = [1, 1, 1]} : vector<5x5x4xf32> to vector<1x1x4xf32>
    %159 = vector.shape_cast %158 : vector<1x1x4xf32> to vector<4xf32>
    %160 = vector.shape_cast %159 : vector<4xf32> to vector<1x1x4xf32>
    %161 = vector.broadcast %160 : vector<1x1x4xf32> to vector<16x16x4xf32>
    %162 = arith.mulf %157, %161 : vector<16x16x4xf32>
    %163 = arith.addf %156, %162 : vector<16x16x4xf32>
    %c3_81 = arith.constant 3 : index
    %c3_82 = arith.constant 3 : index
    %c0_83 = arith.constant 0 : index
    %164 = vector.load %arg10[%c3_81, %c3_82, %c0_83] : memref<20x20x4xf32, #tpu.memory_space<vmem>>, vector<16x16x4xf32>
    %165 = vector.extract_strided_slice %33 {offsets = [3, 3, 0], sizes = [1, 1, 4], strides = [1, 1, 1]} : vector<5x5x4xf32> to vector<1x1x4xf32>
    %166 = vector.shape_cast %165 : vector<1x1x4xf32> to vector<4xf32>
    %167 = vector.shape_cast %166 : vector<4xf32> to vector<1x1x4xf32>
    %168 = vector.broadcast %167 : vector<1x1x4xf32> to vector<16x16x4xf32>
    %169 = arith.mulf %164, %168 : vector<16x16x4xf32>
    %170 = arith.addf %163, %169 : vector<16x16x4xf32>
    %c3_84 = arith.constant 3 : index
    %c4_85 = arith.constant 4 : index
    %c0_86 = arith.constant 0 : index
    %171 = vector.load %arg10[%c3_84, %c4_85, %c0_86] : memref<20x20x4xf32, #tpu.memory_space<vmem>>, vector<16x16x4xf32>
    %172 = vector.extract_strided_slice %33 {offsets = [3, 4, 0], sizes = [1, 1, 4], strides = [1, 1, 1]} : vector<5x5x4xf32> to vector<1x1x4xf32>
    %173 = vector.shape_cast %172 : vector<1x1x4xf32> to vector<4xf32>
    %174 = vector.shape_cast %173 : vector<4xf32> to vector<1x1x4xf32>
    %175 = vector.broadcast %174 : vector<1x1x4xf32> to vector<16x16x4xf32>
    %176 = arith.mulf %171, %175 : vector<16x16x4xf32>
    %177 = arith.addf %170, %176 : vector<16x16x4xf32>
    %c4_87 = arith.constant 4 : index
    %c0_88 = arith.constant 0 : index
    %c0_89 = arith.constant 0 : index
    %178 = vector.load %arg10[%c4_87, %c0_88, %c0_89] : memref<20x20x4xf32, #tpu.memory_space<vmem>>, vector<16x16x4xf32>
    %179 = vector.extract_strided_slice %33 {offsets = [4, 0, 0], sizes = [1, 1, 4], strides = [1, 1, 1]} : vector<5x5x4xf32> to vector<1x1x4xf32>
    %180 = vector.shape_cast %179 : vector<1x1x4xf32> to vector<4xf32>
    %181 = vector.shape_cast %180 : vector<4xf32> to vector<1x1x4xf32>
    %182 = vector.broadcast %181 : vector<1x1x4xf32> to vector<16x16x4xf32>
    %183 = arith.mulf %178, %182 : vector<16x16x4xf32>
    %184 = arith.addf %177, %183 : vector<16x16x4xf32>
    %c4_90 = arith.constant 4 : index
    %c1_91 = arith.constant 1 : index
    %c0_92 = arith.constant 0 : index
    %185 = vector.load %arg10[%c4_90, %c1_91, %c0_92] : memref<20x20x4xf32, #tpu.memory_space<vmem>>, vector<16x16x4xf32>
    %186 = vector.extract_strided_slice %33 {offsets = [4, 1, 0], sizes = [1, 1, 4], strides = [1, 1, 1]} : vector<5x5x4xf32> to vector<1x1x4xf32>
    %187 = vector.shape_cast %186 : vector<1x1x4xf32> to vector<4xf32>
    %188 = vector.shape_cast %187 : vector<4xf32> to vector<1x1x4xf32>
    %189 = vector.broadcast %188 : vector<1x1x4xf32> to vector<16x16x4xf32>
    %190 = arith.mulf %185, %189 : vector<16x16x4xf32>
    %191 = arith.addf %184, %190 : vector<16x16x4xf32>
    %c4_93 = arith.constant 4 : index
    %c2_94 = arith.constant 2 : index
    %c0_95 = arith.constant 0 : index
    %192 = vector.load %arg10[%c4_93, %c2_94, %c0_95] : memref<20x20x4xf32, #tpu.memory_space<vmem>>, vector<16x16x4xf32>
    %193 = vector.extract_strided_slice %33 {offsets = [4, 2, 0], sizes = [1, 1, 4], strides = [1, 1, 1]} : vector<5x5x4xf32> to vector<1x1x4xf32>
    %194 = vector.shape_cast %193 : vector<1x1x4xf32> to vector<4xf32>
    %195 = vector.shape_cast %194 : vector<4xf32> to vector<1x1x4xf32>
    %196 = vector.broadcast %195 : vector<1x1x4xf32> to vector<16x16x4xf32>
    %197 = arith.mulf %192, %196 : vector<16x16x4xf32>
    %198 = arith.addf %191, %197 : vector<16x16x4xf32>
    %c4_96 = arith.constant 4 : index
    %c3_97 = arith.constant 3 : index
    %c0_98 = arith.constant 0 : index
    %199 = vector.load %arg10[%c4_96, %c3_97, %c0_98] : memref<20x20x4xf32, #tpu.memory_space<vmem>>, vector<16x16x4xf32>
    %200 = vector.extract_strided_slice %33 {offsets = [4, 3, 0], sizes = [1, 1, 4], strides = [1, 1, 1]} : vector<5x5x4xf32> to vector<1x1x4xf32>
    %201 = vector.shape_cast %200 : vector<1x1x4xf32> to vector<4xf32>
    %202 = vector.shape_cast %201 : vector<4xf32> to vector<1x1x4xf32>
    %203 = vector.broadcast %202 : vector<1x1x4xf32> to vector<16x16x4xf32>
    %204 = arith.mulf %199, %203 : vector<16x16x4xf32>
    %205 = arith.addf %198, %204 : vector<16x16x4xf32>
    %c4_99 = arith.constant 4 : index
    %c4_100 = arith.constant 4 : index
    %c0_101 = arith.constant 0 : index
    %206 = vector.load %arg10[%c4_99, %c4_100, %c0_101] : memref<20x20x4xf32, #tpu.memory_space<vmem>>, vector<16x16x4xf32>
    %207 = vector.extract_strided_slice %33 {offsets = [4, 4, 0], sizes = [1, 1, 4], strides = [1, 1, 1]} : vector<5x5x4xf32> to vector<1x1x4xf32>
    %208 = vector.shape_cast %207 : vector<1x1x4xf32> to vector<4xf32>
    %209 = vector.shape_cast %208 : vector<4xf32> to vector<1x1x4xf32>
    %210 = vector.broadcast %209 : vector<1x1x4xf32> to vector<16x16x4xf32>
    %211 = arith.mulf %206, %210 : vector<16x16x4xf32>
    %212 = arith.addf %205, %211 : vector<16x16x4xf32>
    %cst_102 = arith.constant 0.000000e+00 : f32
    %213 = vector.broadcast %cst_102 : f32 to vector<16x16x4xf32>
    %214 = arith.cmpf ogt, %212, %213 : vector<16x16x4xf32>
    %cst_103 = arith.constant 0.00999999977 : f32
    %215 = vector.broadcast %cst_103 : f32 to vector<16x16x4xf32>
    %216 = arith.mulf %215, %212 : vector<16x16x4xf32>
    %217 = arith.select %214, %212, %216 : vector<16x16x4xi1>, vector<16x16x4xf32>
    %218 = vector.extract_strided_slice %25 {offsets = [0, 0, 0], sizes = [16, 16, 2], strides = [1, 1, 1]} : vector<16x16x4xf32> to vector<16x16x2xf32>
    %c0_104 = arith.constant 0 : index
    %c0_105 = arith.constant 0 : index
    %c0_106 = arith.constant 0 : index
    %c0_107 = arith.constant 0 : index
    %219 = vector.load %arg9[%c0_104, %c0_105, %c0_106, %c0_107] : memref<1x16x16x8xf32, #tpu.memory_space<vmem>>, vector<1x16x16x2xf32>
    %220 = vector.shape_cast %219 : vector<1x16x16x2xf32> to vector<16x16x2xf32>
    %221 = vector.shape_cast %218 : vector<16x16x2xf32> to vector<1x16x16x2xf32>
    tpu.vector_store %arg9[%c0_104, %c0_105, %c0_106, %c0_107], %221 {strides = array<i32>} : memref<1x16x16x8xf32, #tpu.memory_space<vmem>>, vector<1x16x16x2xf32>,
    %222 = vector.extract_strided_slice %217 {offsets = [0, 0, 0], sizes = [16, 16, 2], strides = [1, 1, 1]} : vector<16x16x4xf32> to vector<16x16x2xf32>
    %c0_108 = arith.constant 0 : index
    %c0_109 = arith.constant 0 : index
    %c0_110 = arith.constant 0 : index
    %c2_111 = arith.constant 2 : index
    %223 = vector.load %arg9[%c0_108, %c0_109, %c0_110, %c2_111] : memref<1x16x16x8xf32, #tpu.memory_space<vmem>>, vector<1x16x16x2xf32>
    %224 = vector.shape_cast %223 : vector<1x16x16x2xf32> to vector<16x16x2xf32>
    %225 = vector.shape_cast %222 : vector<16x16x2xf32> to vector<1x16x16x2xf32>
    tpu.vector_store %arg9[%c0_108, %c0_109, %c0_110, %c2_111], %225 {strides = array<i32>} : memref<1x16x16x8xf32, #tpu.memory_space<vmem>>, vector<1x16x16x2xf32>,
    %226 = vector.extract_strided_slice %25 {offsets = [0, 0, 2], sizes = [16, 16, 2], strides = [1, 1, 1]} : vector<16x16x4xf32> to vector<16x16x2xf32>
    %c0_112 = arith.constant 0 : index
    %c0_113 = arith.constant 0 : index
    %c0_114 = arith.constant 0 : index
    %c4_115 = arith.constant 4 : index
    %227 = vector.load %arg9[%c0_112, %c0_113, %c0_114, %c4_115] : memref<1x16x16x8xf32, #tpu.memory_space<vmem>>, vector<1x16x16x2xf32>
    %228 = vector.shape_cast %227 : vector<1x16x16x2xf32> to vector<16x16x2xf32>
    %229 = vector.shape_cast %226 : vector<16x16x2xf32> to vector<1x16x16x2xf32>
    tpu.vector_store %arg9[%c0_112, %c0_113, %c0_114, %c4_115], %229 {strides = array<i32>} : memref<1x16x16x8xf32, #tpu.memory_space<vmem>>, vector<1x16x16x2xf32>,
    %230 = vector.extract_strided_slice %217 {offsets = [0, 0, 2], sizes = [16, 16, 2], strides = [1, 1, 1]} : vector<16x16x4xf32> to vector<16x16x2xf32>
    %c0_116 = arith.constant 0 : index
    %c0_117 = arith.constant 0 : index
    %c0_118 = arith.constant 0 : index
    %c6 = arith.constant 6 : index
    %231 = vector.load %arg9[%c0_116, %c0_117, %c0_118, %c6] : memref<1x16x16x8xf32, #tpu.memory_space<vmem>>, vector<1x16x16x2xf32>
    %232 = vector.shape_cast %231 : vector<1x16x16x2xf32> to vector<16x16x2xf32>
    %233 = vector.shape_cast %230 : vector<16x16x2xf32> to vector<1x16x16x2xf32>
    tpu.vector_store %arg9[%c0_116, %c0_117, %c0_118, %c6], %233 {strides = array<i32>} : memref<1x16x16x8xf32, #tpu.memory_space<vmem>>, vector<1x16x16x2xf32>,
    return
  }
  func.func @transform_0(%arg0: i32, %arg1: i32) -> (i32, i32, i32, i32) {
    %c8_i32 = arith.constant 8 : i32
    %0 = arith.muli %arg1, %c8_i32 : i32
    %c1_i32 = arith.constant 1 : i32
    %1 = arith.subi %0, %c1_i32 : i32
    %c0_i32 = arith.constant 0 : i32
    %2 = arith.maxsi %1, %c0_i32 : i32
    %c0_i32_0 = arith.constant 0 : i32
    %c0_i32_1 = arith.constant 0 : i32
    %c0_i32_2 = arith.constant 0 : i32
    return %arg0, %2, %c0_i32_0, %c0_i32_1 : i32, i32, i32, i32
  }
  func.func @transform_1(%arg0: i32, %arg1: i32) -> (i32, i32, i32, i32) {
    %c0_i32 = arith.constant 0 : i32
    %c0_i32_0 = arith.constant 0 : i32
    %c0_i32_1 = arith.constant 0 : i32
    return %arg0, %arg1, %c0_i32, %c0_i32_0 : i32, i32, i32, i32
  }
  func.func @transform_2(%arg0: i32, %arg1: i32) -> (i32, i32, i32, i32) {
    %c1_i32 = arith.constant 1 : i32
    %0 = arith.addi %arg1, %c1_i32 : i32
    %c8_i32 = arith.constant 8 : i32
    %1 = arith.muli %0, %c8_i32 : i32
    %c7_i32 = arith.constant 7 : i32
    %2 = arith.minsi %1, %c7_i32 : i32
    %c0_i32 = arith.constant 0 : i32
    %c0_i32_0 = arith.constant 0 : i32
    %c0_i32_1 = arith.constant 0 : i32
    return %arg0, %2, %c0_i32, %c0_i32_0 : i32, i32, i32, i32
  }
  func.func @transform_3(%arg0: i32, %arg1: i32) -> (i32, i32) {
    %c0_i32 = arith.constant 0 : i32
    %c0_i32_0 = arith.constant 0 : i32
    %c0_i32_1 = arith.constant 0 : i32
    return %c0_i32, %c0_i32_0 : i32, i32
  }
  func.func @transform_4(%arg0: i32, %arg1: i32) -> (i32, i32) {
    %c0_i32 = arith.constant 0 : i32
    %c0_i32_0 = arith.constant 0 : i32
    %c0_i32_1 = arith.constant 0 : i32
    return %c0_i32, %c0_i32_0 : i32, i32
  }
  func.func @transform_5(%arg0: i32, %arg1: i32) -> (i32, i32, i32) {
    %c0_i32 = arith.constant 0 : i32
    %c0_i32_0 = arith.constant 0 : i32
    %c0_i32_1 = arith.constant 0 : i32
    %c0_i32_2 = arith.constant 0 : i32
    return %c0_i32, %c0_i32_0, %c0_i32_1 : i32, i32, i32
  }
  func.func @transform_6(%arg0: i32, %arg1: i32) -> (i32, i32) {
    %c0_i32 = arith.constant 0 : i32
    %c0_i32_0 = arith.constant 0 : i32
    %c0_i32_1 = arith.constant 0 : i32
    return %c0_i32, %c0_i32_0 : i32, i32
  }
  func.func @transform_7(%arg0: i32, %arg1: i32) -> (i32, i32, i32, i32) {
    %c0_i32 = arith.constant 0 : i32
    %c0_i32_0 = arith.constant 0 : i32
    %c0_i32_1 = arith.constant 0 : i32
    return %arg0, %arg1, %c0_i32, %c0_i32_0 : i32, i32, i32, i32
  }
}

</mosaic_0001>

<llo_original>
// kernel: tpu_custom_call.1
$region0: #{tpu_custom_call.1}
  #allocation0 [shape = 'u32[]', space=smem, size = 0x4, offset = 0x4, fixed_abs, tag = 'smem constant byte address 0x4 - core index']
  #allocation1 [shape = 'u32[144,128]{1,0:T(1,128)}', space=vmem, size = 0x12000, scoped, tag = 'internal scratch']
  #allocation2 [shape = 'f32[20,20,4]{2,1,0:T(8,128)}', space=vmem, size = 0x3c000, scoped, tag = 'scratch operand']
  %s0 = inlined_call_operand.vmem [shape: f32[2,16,16,4], index: 0, kind: input, shape index: {}]
  %s1 = inlined_call_operand.vmem [shape: f32[2,16,16,4], index: 1, kind: input, shape index: {}]
  %s2 = inlined_call_operand.vmem [shape: f32[2,16,16,4], index: 2, kind: input, shape index: {}]
  %s3 = inlined_call_operand.vmem [shape: f32[4,4], index: 3, kind: input, shape index: {}]
  %s4 = inlined_call_operand.vmem [shape: f32[1,4], index: 4, kind: input, shape index: {}]
  %s5 = inlined_call_operand.vmem [shape: f32[5,5,4], index: 5, kind: input, shape index: {}]
  %s6 = inlined_call_operand.vmem [shape: f32[1,4], index: 6, kind: input, shape index: {}]
  %s7 = inlined_call_operand.vmem [shape: f32[2,16,16,8], index: 7, kind: output, shape index: {}]
  %s8 = sld [smem:[#allocation0]]
  $region73: #{tpu_custom_call.1} parent=0
    _
  %s10 = ssub.s32 1, %s8
  %s11 = scalar_select 0, %s10, %s8
  loop: start=0, step=1, limit=4
  $region2: #{tpu_custom_call.1} parent=0 // loop_pre_header
    _
  $region3: #{tpu_custom_call.1} parent=0 // loop_header
    %s13 = sphi 0, %s17
    %p14 = scmp.ge.s32.totalorder %s13, 4
    %s20 = sphi 0, %s32
    %s21 = sphi 0, %s28
    %s22 = sphi 0, %s20
    %s23 = sphi 0, %s21
    %s24 = sphi 0, %s22
    %s25 = sphi 0, %s23
    %s45 = sphi 0, %s47
    %s48 = sphi 0, %s45
    %s49 = sphi 0, %s48
    %s65 = sphi 0, %s49
    %s73 = sphi 0, %s75
    %s76 = sphi 0, %s73
    %s77 = sphi 0, %s76
    %s93 = sphi 0, %s77
    %s109 = sphi 0, %s111
    %s112 = sphi 0, %s109
    %s113 = sphi 0, %s112
    %s129 = sphi 0, %s113
    %s133 = sphi 0, %s133
    %s135 = sphi 0, %s133
    %s136 = sphi 0, %s135
    %s150 = sphi 0, %s136
    %s154 = sphi 0, %s154
    %s156 = sphi 0, %s154
    %s157 = sphi 0, %s156
    %s171 = sphi 0, %s157
    %s175 = sphi 0, %s175
    %s177 = sphi 0, %s175
    %s178 = sphi 0, %s177
    %s192 = sphi 0, %s178
    %s196 = sphi 0, %s196
    %s198 = sphi 0, %s196
    %s199 = sphi 0, %s198
    %s213 = sphi 0, %s199
    %s221 = sphi 0, %s223
    %s224 = sphi 0, %s221
    %s225 = sphi 0, %s224
    %s241 = sphi 0, %s225
  $region4: #{tpu_custom_call.1} parent=0 // loop_header_branch
    %16 = sbr.rel (%p14) target = $region8
  $region5: #{tpu_custom_call.1} parent=0 // loop_body
    %s18 = ssub.s32 %s13, 1
    %s19 = ssub.s32 %s13, 2
    %s26 = sadd.s32 1, %s21
    %p27 = scmp.ge.s32.totalorder %s26, 1
    %s28 = scalar_select %p27, 0, %s26
    %s29 = sadd.s32 1, %s20
    %s30 = scalar_select %p27, %s29, %s20
    %p31 = scmp.ge.s32.totalorder %s30, 2
    %s32 = scalar_select %p31, 0, %s30
    %s33 = smul.u32 %s21, 8
    %s34 = ssub.s32 %s33, 1
    %p35 = scmp.gt.s32.totalorder %s34, 0
    %s36 = scalar_select %p35, %s34, 0
    %s37 = smul.u32 %s28, 8
    %s38 = ssub.s32 %s37, 1
    %p39 = scmp.gt.s32.totalorder %s38, 0
    %s40 = scalar_select %p39, %s38, 0
    %s41 = ssub.s32 %s20, %s32
    %s42 = ssub.s32 %s36, %s40
    %s43 = sor.u32 %s41, %s42
    %p44 = scmp.eq.s32.totalorder %s43, 0
    %s46 = sadd.s32 %s45, 1
    %s47 = scalar_select %p44, %s45, %s46
    %p50 = pneg %p44
    %p51 = scmp.eq.s32.totalorder %s13, 1
    %p52 = por %p50, %p51
    %p53 = scmp.ne.s32.totalorder %s45, %s48
    %p54 = scmp.eq.s32.totalorder %s13, 0
    %p55 = por %p53, %p54
    %p56 = scmp.ne.s32.totalorder %s45, %s48
    %p57 = scmp.eq.s32.totalorder %s18, 1
    %p58 = por %p56, %p57
    %p59 = scmp.ne.s32.totalorder %s48, %s49
    %p60 = scmp.eq.s32.totalorder %s18, 0
    %p61 = por %p59, %p60
    %p62 = scmp.ne.s32.totalorder %s48, %s49
    %p63 = scmp.eq.s32.totalorder %s19, 1
    %p64 = por %p62, %p63
    %p66 = scmp.ne.s32.totalorder %s49, %s65
    %p67 = scmp.eq.s32.totalorder %s19, 0
    %p68 = por %p66, %p67
    %s69 = ssub.s32 %s20, %s32
    %s70 = ssub.s32 %s21, %s28
    %s71 = sor.u32 %s69, %s70
    %p72 = scmp.eq.s32.totalorder %s71, 0
    %s74 = sadd.s32 %s73, 1
    %s75 = scalar_select %p72, %s73, %s74
    %p78 = pneg %p72
    %p79 = scmp.eq.s32.totalorder %s13, 1
    %p80 = por %p78, %p79
    %p81 = scmp.ne.s32.totalorder %s73, %s76
    %p82 = scmp.eq.s32.totalorder %s13, 0
    %p83 = por %p81, %p82
    %p84 = scmp.ne.s32.totalorder %s73, %s76
    %p85 = scmp.eq.s32.totalorder %s18, 1
    %p86 = por %p84, %p85
    %p87 = scmp.ne.s32.totalorder %s76, %s77
    %p88 = scmp.eq.s32.totalorder %s18, 0
    %p89 = por %p87, %p88
    %p90 = scmp.ne.s32.totalorder %s76, %s77
    %p91 = scmp.eq.s32.totalorder %s19, 1
    %p92 = por %p90, %p91
    %p94 = scmp.ne.s32.totalorder %s77, %s93
    %p95 = scmp.eq.s32.totalorder %s19, 0
    %p96 = por %p94, %p95
    %s97 = sadd.s32 %s21, 1
    %s98 = smul.u32 %s97, 8
    %p99 = scmp.lt.s32.totalorder %s98, 7
    %s100 = scalar_select %p99, %s98, 7
    %s101 = sadd.s32 %s28, 1
    %s102 = smul.u32 %s101, 8
    %p103 = scmp.lt.s32.totalorder %s102, 7
    %s104 = scalar_select %p103, %s102, 7
    %s105 = ssub.s32 %s20, %s32
    %s106 = ssub.s32 %s100, %s104
    %s107 = sor.u32 %s105, %s106
    %p108 = scmp.eq.s32.totalorder %s107, 0
    %s110 = sadd.s32 %s109, 1
    %s111 = scalar_select %p108, %s109, %s110
    %p114 = pneg %p108
    %p115 = scmp.eq.s32.totalorder %s13, 1
    %p116 = por %p114, %p115
    %p117 = scmp.ne.s32.totalorder %s109, %s112
    %p118 = scmp.eq.s32.totalorder %s13, 0
    %p119 = por %p117, %p118
    %p120 = scmp.ne.s32.totalorder %s109, %s112
    %p121 = scmp.eq.s32.totalorder %s18, 1
    %p122 = por %p120, %p121
    %p123 = scmp.ne.s32.totalorder %s112, %s113
    %p124 = scmp.eq.s32.totalorder %s18, 0
    %p125 = por %p123, %p124
    %p126 = scmp.ne.s32.totalorder %s112, %s113
    %p127 = scmp.eq.s32.totalorder %s19, 1
    %p128 = por %p126, %p127
    %p130 = scmp.ne.s32.totalorder %s113, %s129
    %p131 = scmp.eq.s32.totalorder %s19, 0
    %p132 = por %p130, %p131
    %s134 = sadd.s32 %s133, 1
    %p137 = scmp.eq.s32.totalorder %s13, 1
    %p138 = scmp.ne.s32.totalorder %s133, %s135
    %p139 = scmp.eq.s32.totalorder %s13, 0
    %p140 = por %p138, %p139
    %p141 = scmp.ne.s32.totalorder %s133, %s135
    %p142 = scmp.eq.s32.totalorder %s18, 1
    %p143 = por %p141, %p142
    %p144 = scmp.ne.s32.totalorder %s135, %s136
    %p145 = scmp.eq.s32.totalorder %s18, 0
    %p146 = por %p144, %p145
    %p147 = scmp.ne.s32.totalorder %s135, %s136
    %p148 = scmp.eq.s32.totalorder %s19, 1
    %p149 = por %p147, %p148
    %p151 = scmp.ne.s32.totalorder %s136, %s150
    %p152 = scmp.eq.s32.totalorder %s19, 0
    %p153 = por %p151, %p152
    %s155 = sadd.s32 %s154, 1
    %p158 = scmp.eq.s32.totalorder %s13, 1
    %p159 = scmp.ne.s32.totalorder %s154, %s156
    %p160 = scmp.eq.s32.totalorder %s13, 0
    %p161 = por %p159, %p160
    %p162 = scmp.ne.s32.totalorder %s154, %s156
    %p163 = scmp.eq.s32.totalorder %s18, 1
    %p164 = por %p162, %p163
    %p165 = scmp.ne.s32.totalorder %s156, %s157
    %p166 = scmp.eq.s32.totalorder %s18, 0
    %p167 = por %p165, %p166
    %p168 = scmp.ne.s32.totalorder %s156, %s157
    %p169 = scmp.eq.s32.totalorder %s19, 1
    %p170 = por %p168, %p169
    %p172 = scmp.ne.s32.totalorder %s157, %s171
    %p173 = scmp.eq.s32.totalorder %s19, 0
    %p174 = por %p172, %p173
    %s176 = sadd.s32 %s175, 1
    %p179 = scmp.eq.s32.totalorder %s13, 1
    %p180 = scmp.ne.s32.totalorder %s175, %s177
    %p181 = scmp.eq.s32.totalorder %s13, 0
    %p182 = por %p180, %p181
    %p183 = scmp.ne.s32.totalorder %s175, %s177
    %p184 = scmp.eq.s32.totalorder %s18, 1
    %p185 = por %p183, %p184
    %p186 = scmp.ne.s32.totalorder %s177, %s178
    %p187 = scmp.eq.s32.totalorder %s18, 0
    %p188 = por %p186, %p187
    %p189 = scmp.ne.s32.totalorder %s177, %s178
    %p190 = scmp.eq.s32.totalorder %s19, 1
    %p191 = por %p189, %p190
    %p193 = scmp.ne.s32.totalorder %s178, %s192
    %p194 = scmp.eq.s32.totalorder %s19, 0
    %p195 = por %p193, %p194
    %s197 = sadd.s32 %s196, 1
    %p200 = scmp.eq.s32.totalorder %s13, 1
    %p201 = scmp.ne.s32.totalorder %s196, %s198
    %p202 = scmp.eq.s32.totalorder %s13, 0
    %p203 = por %p201, %p202
    %p204 = scmp.ne.s32.totalorder %s196, %s198
    %p205 = scmp.eq.s32.totalorder %s18, 1
    %p206 = por %p204, %p205
    %p207 = scmp.ne.s32.totalorder %s198, %s199
    %p208 = scmp.eq.s32.totalorder %s18, 0
    %p209 = por %p207, %p208
    %p210 = scmp.ne.s32.totalorder %s198, %s199
    %p211 = scmp.eq.s32.totalorder %s19, 1
    %p212 = por %p210, %p211
    %p214 = scmp.ne.s32.totalorder %s199, %s213
    %p215 = scmp.eq.s32.totalorder %s19, 0
    %p216 = por %p214, %p215
    %s217 = ssub.s32 %s20, %s32
    %s218 = ssub.s32 %s21, %s28
    %s219 = sor.u32 %s217, %s218
    %p220 = scmp.eq.s32.totalorder %s219, 0
    %s222 = sadd.s32 %s221, 1
    %s223 = scalar_select %p220, %s221, %s222
    %p226 = pneg %p220
    %p227 = scmp.eq.s32.totalorder %s13, 1
    %p228 = por %p226, %p227
    %p229 = scmp.ne.s32.totalorder %s221, %s224
    %p230 = scmp.eq.s32.totalorder %s13, 0
    %p231 = por %p229, %p230
    %p232 = scmp.ne.s32.totalorder %s221, %s224
    %p233 = scmp.eq.s32.totalorder %s18, 1
    %p234 = por %p232, %p233
    %p235 = scmp.ne.s32.totalorder %s224, %s225
    %p236 = scmp.eq.s32.totalorder %s18, 0
    %p237 = por %p235, %p236
    %p238 = scmp.ne.s32.totalorder %s224, %s225
    %p239 = scmp.eq.s32.totalorder %s19, 1
    %p240 = por %p238, %p239
    %p242 = scmp.ne.s32.totalorder %s225, %s241
    %p243 = scmp.eq.s32.totalorder %s19, 0
    %p244 = por %p242, %p243
    %p245 = scmp.le.s32.totalorder 1, %s13
    %p246 = scmp.lt.s32.totalorder %s13, 3
    %p247 = pnand %p245, %p246
    %p248 = pneg %p247
    // Predicated region
    $region9: #{tpu_custom_call.1} parent=5 // pred_check
      _
    $region10: #{tpu_custom_call.1} parent=5 // pred_check_branch
      %250 = sbr.rel (%p247) target = $region12
    $region11: #{tpu_custom_call.1} parent=5 // pred_region
      %s251 = ssub.s32 %s13, 1
      // Predicated region
      $region13: #{tpu_custom_call.1} parent=11 // pred_check
        %p252 = pneg %p146
      $region14: #{tpu_custom_call.1} parent=11 // pred_check_branch
        %254 = sbr.rel (%p252) target = $region16
      $region15: #{tpu_custom_call.1} parent=11 // pred_region
        _
      $region16: #{tpu_custom_call.1} parent=11 // pred_fallthru
        _
      // Predicated region
      $region17: #{tpu_custom_call.1} parent=11 // pred_check
        %p255 = pneg %p167
      $region18: #{tpu_custom_call.1} parent=11 // pred_check_branch
        %257 = sbr.rel (%p255) target = $region20
      $region19: #{tpu_custom_call.1} parent=11 // pred_region
        _
      $region20: #{tpu_custom_call.1} parent=11 // pred_fallthru
        _
      // Predicated region
      $region21: #{tpu_custom_call.1} parent=11 // pred_check
        %p258 = pneg %p188
      $region22: #{tpu_custom_call.1} parent=11 // pred_check_branch
        %260 = sbr.rel (%p258) target = $region24
      $region23: #{tpu_custom_call.1} parent=11 // pred_region
        _
      $region24: #{tpu_custom_call.1} parent=11 // pred_fallthru
        _
      // Predicated region
      $region25: #{tpu_custom_call.1} parent=11 // pred_check
        %p261 = pneg %p209
      $region26: #{tpu_custom_call.1} parent=11 // pred_check_branch
        %263 = sbr.rel (%p261) target = $region28
      $region27: #{tpu_custom_call.1} parent=11 // pred_region
        _
      $region28: #{tpu_custom_call.1} parent=11 // pred_fallthru
        _
    $region12: #{tpu_custom_call.1} parent=5 // pred_fallthru
      _
    %p264 = scmp.lt.s32.totalorder %s13, 2
    // Predicated region
    $region29: #{tpu_custom_call.1} parent=5 // pred_check
      %p265 = pneg %p264
    $region30: #{tpu_custom_call.1} parent=5 // pred_check_branch
      %267 = sbr.rel (%p265) target = $region32
    $region31: #{tpu_custom_call.1} parent=5 // pred_region
      // Predicated region
      $region33: #{tpu_custom_call.1} parent=31 // pred_check
        %p268 = pneg %p55
      $region34: #{tpu_custom_call.1} parent=31 // pred_check_branch
        %270 = sbr.rel (%p268) target = $region36
      $region35: #{tpu_custom_call.1} parent=31 // pred_region
        %s271 = smul.u32 %s21, 8
        %s272 = ssub.s32 %s271, 1
        %p273 = scmp.gt.s32.totalorder %s272, 0
        %s274 = scalar_select %p273, %s272, 0
        %s275 = smul.u32 2, %s274
        %p276 = scmp.lt.s32.totalorder %s20, 1
        %s277 = scalar_select %p276, %s20, 1
        %p278 = scmp.lt.s32.totalorder %s275, 15
        %s279 = scalar_select %p278, %s275, 15
        %s280 = smul.addr %s279, 2
        %s281 = smul.addr %s277, 32
        %s282 = sadd.s32 %s280, %s281
        %s283 = smul.addr %s282, 8
        %s284 = scalar_lea.vmem %s0, %s283
        %s285 = smul.u32 %s21, 8
        %s286 = ssub.s32 %s285, 1
        %p287 = scmp.gt.s32.totalorder %s286, 0
        %s288 = scalar_select %p287, %s286, 0
        %s289 = smul.u32 2, %s288
      $region36: #{tpu_custom_call.1} parent=31 // pred_fallthru
        _
      // Predicated region
      $region37: #{tpu_custom_call.1} parent=31 // pred_check
        %p290 = pneg %p83
      $region38: #{tpu_custom_call.1} parent=31 // pred_check_branch
        %292 = sbr.rel (%p290) target = $region40
      $region39: #{tpu_custom_call.1} parent=31 // pred_region
        %s293 = smul.u32 16, %s21
        %p294 = scmp.lt.s32.totalorder %s20, 1
        %s295 = scalar_select %p294, %s20, 1
        %p296 = scmp.lt.s32.totalorder %s293, 15
        %s297 = scalar_select %p296, %s293, 15
        %s298 = smul.addr %s297, 2
        %s299 = smul.addr %s295, 32
        %s300 = sadd.s32 %s298, %s299
        %s301 = smul.addr %s300, 8
        %s302 = scalar_lea.vmem %s1, %s301
        %s303 = smul.u32 16, %s21
      $region40: #{tpu_custom_call.1} parent=31 // pred_fallthru
        _
      // Predicated region
      $region41: #{tpu_custom_call.1} parent=31 // pred_check
        %p304 = pneg %p119
      $region42: #{tpu_custom_call.1} parent=31 // pred_check_branch
        %306 = sbr.rel (%p304) target = $region44
      $region43: #{tpu_custom_call.1} parent=31 // pred_region
        %s307 = sadd.s32 %s21, 1
        %s308 = smul.u32 %s307, 8
        %p309 = scmp.lt.s32.totalorder %s308, 7
        %s310 = scalar_select %p309, %s308, 7
        %s311 = smul.u32 2, %s310
        %p312 = scmp.lt.s32.totalorder %s20, 1
        %s313 = scalar_select %p312, %s20, 1
        %p314 = scmp.lt.s32.totalorder %s311, 15
        %s315 = scalar_select %p314, %s311, 15
        %s316 = smul.addr %s315, 2
        %s317 = smul.addr %s313, 32
        %s318 = sadd.s32 %s316, %s317
        %s319 = smul.addr %s318, 8
        %s320 = scalar_lea.vmem %s2, %s319
        %s321 = sadd.s32 %s21, 1
        %s322 = smul.u32 %s321, 8
        %p323 = scmp.lt.s32.totalorder %s322, 7
        %s324 = scalar_select %p323, %s322, 7
        %s325 = smul.u32 2, %s324
      $region44: #{tpu_custom_call.1} parent=31 // pred_fallthru
        _
    $region32: #{tpu_custom_call.1} parent=5 // pred_fallthru
      _
    %p326 = scmp.le.s32.totalorder 1, %s13
    %p327 = scmp.lt.s32.totalorder %s13, 3
    %p328 = pnand %p326, %p327
    %p329 = pneg %p328
    // Predicated region
    $region45: #{tpu_custom_call.1} parent=5 // pred_check
      _
    $region46: #{tpu_custom_call.1} parent=5 // pred_check_branch
      %331 = sbr.rel (%p328) target = $region48
    $region47: #{tpu_custom_call.1} parent=5 // pred_region
      %s332 = ssub.s32 %s13, 1
      %s333 = smul.u32 %s23, 8
      %s334 = ssub.s32 %s333, 1
      %p335 = scmp.gt.s32.totalorder %s334, 0
      %s336 = scalar_select %p335, %s334, 0
      %s337 = smul.u32 2, %s336
      %p338 = scmp.lt.s32.totalorder %s22, 1
      %s339 = scalar_select %p338, %s22, 1
      %p340 = scmp.lt.s32.totalorder %s337, 15
      %s341 = scalar_select %p340, %s337, 15
      %s342 = smul.addr %s341, 2
      %s343 = smul.addr %s339, 32
      %s344 = sadd.s32 %s342, %s343
      %s345 = smul.addr %s344, 8
      %s346 = scalar_lea.vmem %s0, %s345
      %p347 = pneg %p61
      %p348 = pneg %p58
      %s349 = smul.u32 16, %s23
      %p350 = scmp.lt.s32.totalorder %s22, 1
      %s351 = scalar_select %p350, %s22, 1
      %p352 = scmp.lt.s32.totalorder %s349, 15
      %s353 = scalar_select %p352, %s349, 15
      %s354 = smul.addr %s353, 2
      %s355 = smul.addr %s351, 32
      %s356 = sadd.s32 %s354, %s355
      %s357 = smul.addr %s356, 8
      %s358 = scalar_lea.vmem %s1, %s357
      %p359 = pneg %p89
      %p360 = pneg %p86
      %s361 = sadd.s32 %s23, 1
      %s362 = smul.u32 %s361, 8
      %p363 = scmp.lt.s32.totalorder %s362, 7
      %s364 = scalar_select %p363, %s362, 7
      %s365 = smul.u32 2, %s364
      %p366 = scmp.lt.s32.totalorder %s22, 1
      %s367 = scalar_select %p366, %s22, 1
      %p368 = scmp.lt.s32.totalorder %s365, 15
      %s369 = scalar_select %p368, %s365, 15
      %s370 = smul.addr %s369, 2
      %s371 = smul.addr %s367, 32
      %s372 = sadd.s32 %s370, %s371
      %s373 = smul.addr %s372, 8
      %s374 = scalar_lea.vmem %s2, %s373
      %p375 = pneg %p125
      %p376 = pneg %p122
      %p377 = pneg %p146
      %p378 = pneg %p143
      %p379 = pneg %p167
      %p380 = pneg %p164
      %p381 = pneg %p188
      %p382 = pneg %p185
      %p383 = pneg %p209
      %p384 = pneg %p206
      %p385 = pneg %p237
      %p386 = pneg %p234
      %s387 = smul.u32 16, %s23
      %p388 = scmp.lt.s32.totalorder %s22, 1
      %s389 = scalar_select %p388, %s22, 1
      %p390 = scmp.lt.s32.totalorder %s387, 15
      %s391 = scalar_select %p390, %s387, 15
      %s392 = smul.addr %s391, 2
      %s393 = smul.addr %s389, 32
      %s394 = sadd.s32 %s392, %s393
      %s395 = smul.addr %s394, 8
      %s396 = scalar_lea.vmem %s7, %s395
      %s397 = smul.u32 %s23, 8
      %s398 = ssub.s32 %s397, 1
      %p399 = scmp.gt.s32.totalorder %s398, 0
      %s400 = scalar_select %p399, %s398, 0
      %s401 = smul.u32 2, %s400
      %p402 = scmp.lt.s32.totalorder %s22, 1
      %s403 = scalar_select %p402, %s22, 1
      %p404 = scmp.lt.s32.totalorder %s401, 15
      %s405 = scalar_select %p404, %s401, 15
      %s406 = smul.addr %s405, 2
      %s407 = smul.addr %s403, 32
      %s408 = sadd.s32 %s406, %s407
      %s409 = smul.addr %s408, 8
      %s410 = scalar_lea.vmem %s0, %s409
      %s411 = smul.u32 %s23, 8
      %s412 = ssub.s32 %s411, 1
      %p413 = scmp.gt.s32.totalorder %s412, 0
      %s414 = scalar_select %p413, %s412, 0
      %s415 = smul.u32 2, %s414
      %s416 = smul.u32 16, %s23
      %p417 = scmp.lt.s32.totalorder %s22, 1
      %s418 = scalar_select %p417, %s22, 1
      %p419 = scmp.lt.s32.totalorder %s416, 15
      %s420 = scalar_select %p419, %s416, 15
      %s421 = smul.addr %s420, 2
      %s422 = smul.addr %s418, 32
      %s423 = sadd.s32 %s421, %s422
      %s424 = smul.addr %s423, 8
      %s425 = scalar_lea.vmem %s1, %s424
      %s426 = smul.u32 16, %s23
      %s427 = sadd.s32 %s23, 1
      %s428 = smul.u32 %s427, 8
      %p429 = scmp.lt.s32.totalorder %s428, 7
      %s430 = scalar_select %p429, %s428, 7
      %s431 = smul.u32 2, %s430
      %p432 = scmp.lt.s32.totalorder %s22, 1
      %s433 = scalar_select %p432, %s22, 1
      %p434 = scmp.lt.s32.totalorder %s431, 15
      %s435 = scalar_select %p434, %s431, 15
      %s436 = smul.addr %s435, 2
      %s437 = smul.addr %s433, 32
      %s438 = sadd.s32 %s436, %s437
      %s439 = smul.addr %s438, 8
      %s440 = scalar_lea.vmem %s2, %s439
      %s441 = sadd.s32 %s23, 1
      %s442 = smul.u32 %s441, 8
      %p443 = scmp.lt.s32.totalorder %s442, 7
      %s444 = scalar_select %p443, %s442, 7
      %s445 = smul.u32 2, %s444
      %s446 = smul.u32 16, %s23
      %p447 = scmp.lt.s32.totalorder %s22, 1
      %s448 = scalar_select %p447, %s22, 1
      %p449 = scmp.lt.s32.totalorder %s446, 15
      %s450 = scalar_select %p449, %s446, 15
      %s451 = smul.addr %s450, 2
      %s452 = smul.addr %s448, 32
      %s453 = sadd.s32 %s451, %s452
      %s454 = smul.addr %s453, 8
      %s455 = scalar_lea.vmem %s7, %s454
      %s456 = smul.u32 16, %s23
      %vm457 = vcmask 25600
      %458 = vst.msk [vmem:[#allocation2] sm:$0x3] %vm457, 0.0
      %459 = vst.msk [vmem:[#allocation2 + $0x18] sm:$0x3] %vm457, 0.0
      %460 = vst.msk [vmem:[#allocation2 + $0x30] sm:$0x3] %vm457, 0.0
      %461 = vst.msk [vmem:[#allocation2 + $0x48] sm:$0x3] %vm457, 0.0
      %462 = vst.msk [vmem:[#allocation2 + $0x60] sm:$0x3] %vm457, 0.0
      %463 = vst.msk [vmem:[#allocation2 + $0x78] sm:$0x3] %vm457, 0.0
      %464 = vst.msk [vmem:[#allocation2 + $0x90] sm:$0x3] %vm457, 0.0
      %465 = vst.msk [vmem:[#allocation2 + $0xa8] sm:$0x3] %vm457, 0.0
      %466 = vst.msk [vmem:[#allocation2 + $0xc0] sm:$0x3] %vm457, 0.0
      %467 = vst.msk [vmem:[#allocation2 + $0xd8] sm:$0x3] %vm457, 0.0
      %468 = vst.msk [vmem:[#allocation2 + $0xf0] sm:$0x3] %vm457, 0.0
      %469 = vst.msk [vmem:[#allocation2 + $0x108] sm:$0x3] %vm457, 0.0
      %470 = vst.msk [vmem:[#allocation2 + $0x120] sm:$0x3] %vm457, 0.0
      %471 = vst.msk [vmem:[#allocation2 + $0x138] sm:$0x3] %vm457, 0.0
      %472 = vst.msk [vmem:[#allocation2 + $0x150] sm:$0x3] %vm457, 0.0
      %473 = vst.msk [vmem:[#allocation2 + $0x168] sm:$0x3] %vm457, 0.0
      %474 = vst.msk [vmem:[#allocation2 + $0x180] sm:$0x3] %vm457, 0.0
      %475 = vst.msk [vmem:[#allocation2 + $0x198] sm:$0x3] %vm457, 0.0
      %476 = vst.msk [vmem:[#allocation2 + $0x1b0] sm:$0x3] %vm457, 0.0
      %477 = vst.msk [vmem:[#allocation2 + $0x1c8] sm:$0x3] %vm457, 0.0
      %478 = vst.msk [vmem:[#allocation2 + $0x12] sm:$0x3] %vm457, 0.0
      %479 = vst.msk [vmem:[#allocation2 + $0x2a] sm:$0x3] %vm457, 0.0
      %480 = vst.msk [vmem:[#allocation2 + $0x42] sm:$0x3] %vm457, 0.0
      %481 = vst.msk [vmem:[#allocation2 + $0x5a] sm:$0x3] %vm457, 0.0
      %482 = vst.msk [vmem:[#allocation2 + $0x72] sm:$0x3] %vm457, 0.0
      %483 = vst.msk [vmem:[#allocation2 + $0x8a] sm:$0x3] %vm457, 0.0
      %484 = vst.msk [vmem:[#allocation2 + $0xa2] sm:$0x3] %vm457, 0.0
      %485 = vst.msk [vmem:[#allocation2 + $0xba] sm:$0x3] %vm457, 0.0
      %486 = vst.msk [vmem:[#allocation2 + $0xd2] sm:$0x3] %vm457, 0.0
      %487 = vst.msk [vmem:[#allocation2 + $0xea] sm:$0x3] %vm457, 0.0
      %488 = vst.msk [vmem:[#allocation2 + $0x102] sm:$0x3] %vm457, 0.0
      %489 = vst.msk [vmem:[#allocation2 + $0x11a] sm:$0x3] %vm457, 0.0
      %490 = vst.msk [vmem:[#allocation2 + $0x132] sm:$0x3] %vm457, 0.0
      %491 = vst.msk [vmem:[#allocation2 + $0x14a] sm:$0x3] %vm457, 0.0
      %492 = vst.msk [vmem:[#allocation2 + $0x162] sm:$0x3] %vm457, 0.0
      %493 = vst.msk [vmem:[#allocation2 + $0x17a] sm:$0x3] %vm457, 0.0
      %494 = vst.msk [vmem:[#allocation2 + $0x192] sm:$0x3] %vm457, 0.0
      %495 = vst.msk [vmem:[#allocation2 + $0x1aa] sm:$0x3] %vm457, 0.0
      %496 = vst.msk [vmem:[#allocation2 + $0x1c2] sm:$0x3] %vm457, 0.0
      %497 = vst.msk [vmem:[#allocation2 + $0x1da] sm:$0x3] %vm457, 0.0
      %p498 = scmp.eq.s32.totalorder %s23, 0
      // Predicated region
      $region49: #{tpu_custom_call.1} parent=47 // pred_check
        %p499 = pneg %p498
      $region50: #{tpu_custom_call.1} parent=47 // pred_check_branch
        %501 = sbr.rel (%p499) target = $region52
      $region51: #{tpu_custom_call.1} parent=47 // pred_region
        %vm502 = vcmask 31744
        %503 = vst.msk [vmem:[#allocation2] sm:$0xff] %vm502, 0.0
        %504 = vst.msk [vmem:[#allocation2 + $0x8] sm:$0xff] %vm502, 0.0
        %vm505 = vcmask 27648
        %506 = vst.msk [vmem:[#allocation2 + $0x10] sm:$0xf] %vm505, 0.0
        %507 = vst.msk [vmem:[#allocation2 + $0x18] sm:$0xff] %vm502, 0.0
        %508 = vst.msk [vmem:[#allocation2 + $0x20] sm:$0xff] %vm502, 0.0
        %509 = vst.msk [vmem:[#allocation2 + $0x28] sm:$0xf] %vm505, 0.0
        %s510 = scalar_lea.vmem [#allocation2], 432
        %511 = vst.msk [vmem:[%s510] sm:$0xff] %vm502, 0.0
        %512 = vst.msk [vmem:[%s510 + $0x8] sm:$0xff] %vm502, 0.0
        %513 = vst.msk [vmem:[%s510 + $0x10] sm:$0xf] %vm505, 0.0
        %514 = vst.msk [vmem:[%s510 + $0x18] sm:$0xff] %vm502, 0.0
        %515 = vst.msk [vmem:[%s510 + $0x20] sm:$0xff] %vm502, 0.0
        %516 = vst.msk [vmem:[%s510 + $0x28] sm:$0xf] %vm505, 0.0
      $region52: #{tpu_custom_call.1} parent=47 // pred_fallthru
        _
      %v517 = vld [vmem:[%s3] sm:$0xf]
      %v518 = vld [vmem:[%s4] sm:$0x1]
      %v519 = vld [vmem:[%s425] sm:$0xff]
      %v520 = vld [vmem:[%s425 + $0x8] sm:$0xff]
      %v521 = vld [vmem:[%s425 + $0x10] sm:$0xff]
      %v522 = vld [vmem:[%s425 + $0x18] sm:$0xff]
      %v523 = vld [vmem:[%s425 + $0x20] sm:$0xff]
      %v524 = vld [vmem:[%s425 + $0x28] sm:$0xff]
      %v525 = vld [vmem:[%s425 + $0x30] sm:$0xff]
      %v526 = vld [vmem:[%s425 + $0x38] sm:$0xff]
      %v527 = vld [vmem:[%s425 + $0x40] sm:$0xff]
      %v528 = vld [vmem:[%s425 + $0x48] sm:$0xff]
      %v529 = vld [vmem:[%s425 + $0x50] sm:$0xff]
      %v530 = vld [vmem:[%s425 + $0x58] sm:$0xff]
      %v531 = vld [vmem:[%s425 + $0x60] sm:$0xff]
      %v532 = vld [vmem:[%s425 + $0x68] sm:$0xff]
      %v533 = vld [vmem:[%s425 + $0x70] sm:$0xff]
      %v534 = vld [vmem:[%s425 + $0x78] sm:$0xff]
      %v535 = vld [vmem:[%s425 + $0x80] sm:$0xff]
      %v536 = vld [vmem:[%s425 + $0x88] sm:$0xff]
      %v537 = vld [vmem:[%s425 + $0x90] sm:$0xff]
      %v538 = vld [vmem:[%s425 + $0x98] sm:$0xff]
      %v539 = vld [vmem:[%s425 + $0xa0] sm:$0xff]
      %v540 = vld [vmem:[%s425 + $0xa8] sm:$0xff]
      %v541 = vld [vmem:[%s425 + $0xb0] sm:$0xff]
      %v542 = vld [vmem:[%s425 + $0xb8] sm:$0xff]
      %v543 = vld [vmem:[%s425 + $0xc0] sm:$0xff]
      %v544 = vld [vmem:[%s425 + $0xc8] sm:$0xff]
      %v545 = vld [vmem:[%s425 + $0xd0] sm:$0xff]
      %v546 = vld [vmem:[%s425 + $0xd8] sm:$0xff]
      %v547 = vld [vmem:[%s425 + $0xe0] sm:$0xff]
      %v548 = vld [vmem:[%s425 + $0xe8] sm:$0xff]
      %v549 = vld [vmem:[%s425 + $0xf0] sm:$0xff]
      %v550 = vld [vmem:[%s425 + $0xf8] sm:$0xff]
      %v552 = vlaneseq
      %v553 = vshrl.u32 %v552, 7
      %v554 = vsub.s32 0, %v553
      %v555 = vrot.slane %v518, %v554
      %vm557 = vcmask 31744
      %v559 = vsel %vm557, %v519, 0
      %v562 = vsel %vm557, %v520, 0
      %v565 = vsel %vm557, %v521, 0
      %v568 = vsel %vm557, %v522, 0
      %v571 = vsel %vm557, %v523, 0
      %v574 = vsel %vm557, %v524, 0
      %v577 = vsel %vm557, %v525, 0
      %v580 = vsel %vm557, %v526, 0
      %v583 = vsel %vm557, %v527, 0
      %v586 = vsel %vm557, %v528, 0
      %v589 = vsel %vm557, %v529, 0
      %v592 = vsel %vm557, %v530, 0
      %v595 = vsel %vm557, %v531, 0
      %v598 = vsel %vm557, %v532, 0
      %v601 = vsel %vm557, %v533, 0
      %v604 = vsel %vm557, %v534, 0
      %v607 = vsel %vm557, %v535, 0
      %v610 = vsel %vm557, %v536, 0
      %v613 = vsel %vm557, %v537, 0
      %v616 = vsel %vm557, %v538, 0
      %v619 = vsel %vm557, %v539, 0
      %v622 = vsel %vm557, %v540, 0
      %v625 = vsel %vm557, %v541, 0
      %v628 = vsel %vm557, %v542, 0
      %v631 = vsel %vm557, %v543, 0
      %v634 = vsel %vm557, %v544, 0
      %v637 = vsel %vm557, %v545, 0
      %v640 = vsel %vm557, %v546, 0
      %v643 = vsel %vm557, %v547, 0
      %v646 = vsel %vm557, %v548, 0
      %v649 = vsel %vm557, %v549, 0
      %v652 = vsel %vm557, %v550, 0
      %vm654 = vcmask 1043456
      %v656 = vsel %vm654, %v517, 0
      %658 = vmatprep.subr.mxu0 0.0
      %659 = vmatpush1.msra.mxu0 0.0
      %660 = vmatprep.subr.mxu0 0.0
      %661 = vmatpush1.msra.mxu0 0.0
      %662 = vmatprep.subr.mxu0 0.0
      %663 = vmatpush1.msra.mxu0 0.0
      %664 = vmatprep.subr.mxu0 0.0
      %665 = vmatpush1.msra.mxu0 0.0
      %666 = vmatprep.subr.mxu0 0.0
      %667 = vmatpush1.msra.mxu0 0.0
      %668 = vmatprep.subr.mxu0 0.0
      %669 = vmatpush1.msra.mxu0 0.0
      %670 = vmatprep.subr.mxu0 0.0
      %671 = vmatpush1.msra.mxu0 0.0
      %672 = vmatprep.subr.mxu0 0.0
      %673 = vmatpush1.msra.mxu0 0.0
      %674 = vmatprep.subr.mxu0 0.0
      %675 = vmatpush1.msra.mxu0 0.0
      %676 = vmatprep.subr.mxu0 0.0
      %677 = vmatpush1.msra.mxu0 0.0
      %678 = vmatprep.subr.mxu0 0.0
      %679 = vmatpush1.msra.mxu0 0.0
      %680 = vmatprep.subr.mxu0 0.0
      %681 = vmatpush1.msra.mxu0 0.0
      %682 = vmatprep.subr.mxu0 0.0
      %683 = vmatpush1.msra.mxu0 0.0
      %684 = vmatprep.subr.mxu0 0.0
      %685 = vmatpush1.msra.mxu0 0.0
      %686 = vmatprep.subr.mxu0 0.0
      %687 = vmatpush1.msra.mxu0 0.0
      %688 = vmatprep.subr.mxu0 0.0
      %689 = vmatpush1.msra.mxu0 %v656
      %690 = vmatprep.subr.mxu0 0.0
      %691 = vmatpush2.msra.mxu0 0.0
      %692 = vmatprep.subr.mxu0 0.0
      %693 = vmatpush2.msra.mxu0 0.0
      %694 = vmatprep.subr.mxu0 0.0
      %695 = vmatpush2.msra.mxu0 0.0
      %696 = vmatprep.subr.mxu0 0.0
      %697 = vmatpush2.msra.mxu0 0.0
      %698 = vmatprep.subr.mxu0 0.0
      %699 = vmatpush2.msra.mxu0 0.0
      %700 = vmatprep.subr.mxu0 0.0
      %701 = vmatpush2.msra.mxu0 0.0
      %702 = vmatprep.subr.mxu0 0.0
      %703 = vmatpush2.msra.mxu0 0.0
      %704 = vmatprep.subr.mxu0 0.0
      %705 = vmatpush2.msra.mxu0 0.0
      %706 = vmatprep.subr.mxu0 0.0
      %707 = vmatpush2.msra.mxu0 0.0
      %708 = vmatprep.subr.mxu0 0.0
      %709 = vmatpush2.msra.mxu0 0.0
      %710 = vmatprep.subr.mxu0 0.0
      %711 = vmatpush2.msra.mxu0 0.0
      %712 = vmatprep.subr.mxu0 0.0
      %713 = vmatpush2.msra.mxu0 0.0
      %714 = vmatprep.subr.mxu0 0.0
      %715 = vmatpush2.msra.mxu0 0.0
      %716 = vmatprep.subr.mxu0 0.0
      %717 = vmatpush2.msra.mxu0 0.0
      %718 = vmatprep.subr.mxu0 0.0
      %719 = vmatpush2.msra.mxu0 0.0
      %720 = vmatprep.subr.mxu0 0.0
      %721 = vmatpush2.msra.mxu0 0.0
      %722 = vmatprep.mubr.f32.mxu0 0.0
      %723 = vmatmul.mubr.f32.gmra.mxu0 %v559
      %v724 = vpop.f32.mrf.mxu0
      %v725 = vadd.f32 %v555, %v724
      %v726 = vpop.f32.mrf.mxu0
      %727 = vmatprep.mubr.f32.mxu0 0.0
      %728 = vmatmul.mubr.f32.gmra.mxu0 %v562
      %v729 = vpop.f32.mrf.mxu0
      %v730 = vadd.f32 %v555, %v729
      %v731 = vpop.f32.mrf.mxu0
      %732 = vmatprep.mubr.f32.mxu0 0.0
      %733 = vmatmul.mubr.f32.gmra.mxu0 %v565
      %v734 = vpop.f32.mrf.mxu0
      %v735 = vadd.f32 %v555, %v734
      %v736 = vpop.f32.mrf.mxu0
      %737 = vmatprep.mubr.f32.mxu0 0.0
      %738 = vmatmul.mubr.f32.gmra.mxu0 %v568
      %v739 = vpop.f32.mrf.mxu0
      %v740 = vadd.f32 %v555, %v739
      %v741 = vpop.f32.mrf.mxu0
      %742 = vmatprep.mubr.f32.mxu0 0.0
      %743 = vmatmul.mubr.f32.gmra.mxu0 %v571
      %v744 = vpop.f32.mrf.mxu0
      %v745 = vadd.f32 %v555, %v744
      %v746 = vpop.f32.mrf.mxu0
      %747 = vmatprep.mubr.f32.mxu0 0.0
      %748 = vmatmul.mubr.f32.gmra.mxu0 %v574
      %v749 = vpop.f32.mrf.mxu0
      %v750 = vadd.f32 %v555, %v749
      %v751 = vpop.f32.mrf.mxu0
      %752 = vmatprep.mubr.f32.mxu0 0.0
      %753 = vmatmul.mubr.f32.gmra.mxu0 %v577
      %v754 = vpop.f32.mrf.mxu0
      %v755 = vadd.f32 %v555, %v754
      %v756 = vpop.f32.mrf.mxu0
      %757 = vmatprep.mubr.f32.mxu0 0.0
      %758 = vmatmul.mubr.f32.gmra.mxu0 %v580
      %v759 = vpop.f32.mrf.mxu0
      %v760 = vadd.f32 %v555, %v759
      %v761 = vpop.f32.mrf.mxu0
      %762 = vmatprep.mubr.f32.mxu0 0.0
      %763 = vmatmul.mubr.f32.gmra.mxu0 %v583
      %v764 = vpop.f32.mrf.mxu0
      %v765 = vadd.f32 %v555, %v764
      %v766 = vpop.f32.mrf.mxu0
      %767 = vmatprep.mubr.f32.mxu0 0.0
      %768 = vmatmul.mubr.f32.gmra.mxu0 %v586
      %v769 = vpop.f32.mrf.mxu0
      %v770 = vadd.f32 %v555, %v769
      %v771 = vpop.f32.mrf.mxu0
      %772 = vmatprep.mubr.f32.mxu0 0.0
      %773 = vmatmul.mubr.f32.gmra.mxu0 %v589
      %v774 = vpop.f32.mrf.mxu0
      %v775 = vadd.f32 %v555, %v774
      %v776 = vpop.f32.mrf.mxu0
      %777 = vmatprep.mubr.f32.mxu0 0.0
      %778 = vmatmul.mubr.f32.gmra.mxu0 %v592
      %v779 = vpop.f32.mrf.mxu0
      %v780 = vadd.f32 %v555, %v779
      %v781 = vpop.f32.mrf.mxu0
      %782 = vmatprep.mubr.f32.mxu0 0.0
      %783 = vmatmul.mubr.f32.gmra.mxu0 %v595
      %v784 = vpop.f32.mrf.mxu0
      %v785 = vadd.f32 %v555, %v784
      %v786 = vpop.f32.mrf.mxu0
      %787 = vmatprep.mubr.f32.mxu0 0.0
      %788 = vmatmul.mubr.f32.gmra.mxu0 %v598
      %v789 = vpop.f32.mrf.mxu0
      %v790 = vadd.f32 %v555, %v789
      %v791 = vpop.f32.mrf.mxu0
      %792 = vmatprep.mubr.f32.mxu0 0.0
      %793 = vmatmul.mubr.f32.gmra.mxu0 %v601
      %v794 = vpop.f32.mrf.mxu0
      %v795 = vadd.f32 %v555, %v794
      %v796 = vpop.f32.mrf.mxu0
      %797 = vmatprep.mubr.f32.mxu0 0.0
      %798 = vmatmul.mubr.f32.gmra.mxu0 %v604
      %v799 = vpop.f32.mrf.mxu0
      %v800 = vadd.f32 %v555, %v799
      %v801 = vpop.f32.mrf.mxu0
      %802 = vmatprep.mubr.f32.mxu0 0.0
      %803 = vmatmul.mubr.f32.gmra.mxu0 %v607
      %v804 = vpop.f32.mrf.mxu0
      %v805 = vadd.f32 %v555, %v804
      %v806 = vpop.f32.mrf.mxu0
      %807 = vmatprep.mubr.f32.mxu0 0.0
      %808 = vmatmul.mubr.f32.gmra.mxu0 %v610
      %v809 = vpop.f32.mrf.mxu0
      %v810 = vadd.f32 %v555, %v809
      %v811 = vpop.f32.mrf.mxu0
      %812 = vmatprep.mubr.f32.mxu0 0.0
      %813 = vmatmul.mubr.f32.gmra.mxu0 %v613
      %v814 = vpop.f32.mrf.mxu0
      %v815 = vadd.f32 %v555, %v814
      %v816 = vpop.f32.mrf.mxu0
      %817 = vmatprep.mubr.f32.mxu0 0.0
      %818 = vmatmul.mubr.f32.gmra.mxu0 %v616
      %v819 = vpop.f32.mrf.mxu0
      %v820 = vadd.f32 %v555, %v819
      %v821 = vpop.f32.mrf.mxu0
      %822 = vmatprep.mubr.f32.mxu0 0.0
      %823 = vmatmul.mubr.f32.gmra.mxu0 %v619
      %v824 = vpop.f32.mrf.mxu0
      %v825 = vadd.f32 %v555, %v824
      %v826 = vpop.f32.mrf.mxu0
      %827 = vmatprep.mubr.f32.mxu0 0.0
      %828 = vmatmul.mubr.f32.gmra.mxu0 %v622
      %v829 = vpop.f32.mrf.mxu0
      %v830 = vadd.f32 %v555, %v829
      %v831 = vpop.f32.mrf.mxu0
      %832 = vmatprep.mubr.f32.mxu0 0.0
      %833 = vmatmul.mubr.f32.gmra.mxu0 %v625
      %v834 = vpop.f32.mrf.mxu0
      %v835 = vadd.f32 %v555, %v834
      %v836 = vpop.f32.mrf.mxu0
      %837 = vmatprep.mubr.f32.mxu0 0.0
      %838 = vmatmul.mubr.f32.gmra.mxu0 %v628
      %v839 = vpop.f32.mrf.mxu0
      %v840 = vadd.f32 %v555, %v839
      %v841 = vpop.f32.mrf.mxu0
      %842 = vmatprep.mubr.f32.mxu0 0.0
      %843 = vmatmul.mubr.f32.gmra.mxu0 %v631
      %v844 = vpop.f32.mrf.mxu0
      %v845 = vadd.f32 %v555, %v844
      %v846 = vpop.f32.mrf.mxu0
      %847 = vmatprep.mubr.f32.mxu0 0.0
      %848 = vmatmul.mubr.f32.gmra.mxu0 %v634
      %v849 = vpop.f32.mrf.mxu0
      %v850 = vadd.f32 %v555, %v849
      %v851 = vpop.f32.mrf.mxu0
      %852 = vmatprep.mubr.f32.mxu0 0.0
      %853 = vmatmul.mubr.f32.gmra.mxu0 %v637
      %v854 = vpop.f32.mrf.mxu0
      %v855 = vadd.f32 %v555, %v854
      %v856 = vpop.f32.mrf.mxu0
      %857 = vmatprep.mubr.f32.mxu0 0.0
      %858 = vmatmul.mubr.f32.gmra.mxu0 %v640
      %v859 = vpop.f32.mrf.mxu0
      %v860 = vadd.f32 %v555, %v859
      %v861 = vpop.f32.mrf.mxu0
      %862 = vmatprep.mubr.f32.mxu0 0.0
      %863 = vmatmul.mubr.f32.gmra.mxu0 %v643
      %v864 = vpop.f32.mrf.mxu0
      %v865 = vadd.f32 %v555, %v864
      %v866 = vpop.f32.mrf.mxu0
      %867 = vmatprep.mubr.f32.mxu0 0.0
      %868 = vmatmul.mubr.f32.gmra.mxu0 %v646
      %v869 = vpop.f32.mrf.mxu0
      %v870 = vadd.f32 %v555, %v869
      %v871 = vpop.f32.mrf.mxu0
      %872 = vmatprep.mubr.f32.mxu0 0.0
      %873 = vmatmul.mubr.f32.gmra.mxu0 %v649
      %v874 = vpop.f32.mrf.mxu0
      %v875 = vadd.f32 %v555, %v874
      %v876 = vpop.f32.mrf.mxu0
      %877 = vmatprep.mubr.f32.mxu0 0.0
      %878 = vmatmul.mubr.f32.gmra.mxu0 %v652
      %v879 = vpop.f32.mrf.mxu0
      %v880 = vadd.f32 %v555, %v879
      %v881 = vpop.f32.mrf.mxu0
      %882 = vdwg.mxu0
      %vm883 = vcmp.gt.f32.partialorder %v725, 0.0
      %vm884 = vcmp.gt.f32.partialorder %v730, 0.0
      %vm885 = vcmp.gt.f32.partialorder %v735, 0.0
      %vm886 = vcmp.gt.f32.partialorder %v740, 0.0
      %vm887 = vcmp.gt.f32.partialorder %v745, 0.0
      %vm888 = vcmp.gt.f32.partialorder %v750, 0.0
      %vm889 = vcmp.gt.f32.partialorder %v755, 0.0
      %vm890 = vcmp.gt.f32.partialorder %v760, 0.0
      %vm891 = vcmp.gt.f32.partialorder %v765, 0.0
      %vm892 = vcmp.gt.f32.partialorder %v770, 0.0
      %vm893 = vcmp.gt.f32.partialorder %v775, 0.0
      %vm894 = vcmp.gt.f32.partialorder %v780, 0.0
      %vm895 = vcmp.gt.f32.partialorder %v785, 0.0
      %vm896 = vcmp.gt.f32.partialorder %v790, 0.0
      %vm897 = vcmp.gt.f32.partialorder %v795, 0.0
      %vm898 = vcmp.gt.f32.partialorder %v800, 0.0
      %vm899 = vcmp.gt.f32.partialorder %v805, 0.0
      %vm900 = vcmp.gt.f32.partialorder %v810, 0.0
      %vm901 = vcmp.gt.f32.partialorder %v815, 0.0
      %vm902 = vcmp.gt.f32.partialorder %v820, 0.0
      %vm903 = vcmp.gt.f32.partialorder %v825, 0.0
      %vm904 = vcmp.gt.f32.partialorder %v830, 0.0
      %vm905 = vcmp.gt.f32.partialorder %v835, 0.0
      %vm906 = vcmp.gt.f32.partialorder %v840, 0.0
      %vm907 = vcmp.gt.f32.partialorder %v845, 0.0
      %vm908 = vcmp.gt.f32.partialorder %v850, 0.0
      %vm909 = vcmp.gt.f32.partialorder %v855, 0.0
      %vm910 = vcmp.gt.f32.partialorder %v860, 0.0
      %vm911 = vcmp.gt.f32.partialorder %v865, 0.0
      %vm912 = vcmp.gt.f32.partialorder %v870, 0.0
      %vm913 = vcmp.gt.f32.partialorder %v875, 0.0
      %vm914 = vcmp.gt.f32.partialorder %v880, 0.0
      %v915 = vmul.f32 %v725, 0.01
      %v916 = vmul.f32 %v730, 0.01
      %v917 = vmul.f32 %v735, 0.01
      %v918 = vmul.f32 %v740, 0.01
      %v919 = vmul.f32 %v745, 0.01
      %v920 = vmul.f32 %v750, 0.01
      %v921 = vmul.f32 %v755, 0.01
      %v922 = vmul.f32 %v760, 0.01
      %v923 = vmul.f32 %v765, 0.01
      %v924 = vmul.f32 %v770, 0.01
      %v925 = vmul.f32 %v775, 0.01
      %v926 = vmul.f32 %v780, 0.01
      %v927 = vmul.f32 %v785, 0.01
      %v928 = vmul.f32 %v790, 0.01
      %v929 = vmul.f32 %v795, 0.01
      %v930 = vmul.f32 %v800, 0.01
      %v931 = vmul.f32 %v805, 0.01
      %v932 = vmul.f32 %v810, 0.01
      %v933 = vmul.f32 %v815, 0.01
      %v934 = vmul.f32 %v820, 0.01
      %v935 = vmul.f32 %v825, 0.01
      %v936 = vmul.f32 %v830, 0.01
      %v937 = vmul.f32 %v835, 0.01
      %v938 = vmul.f32 %v840, 0.01
      %v939 = vmul.f32 %v845, 0.01
      %v940 = vmul.f32 %v850, 0.01
      %v941 = vmul.f32 %v855, 0.01
      %v942 = vmul.f32 %v860, 0.01
      %v943 = vmul.f32 %v865, 0.01
      %v944 = vmul.f32 %v870, 0.01
      %v945 = vmul.f32 %v875, 0.01
      %v946 = vmul.f32 %v880, 0.01
      %v947 = vsel %vm883, %v725, %v915
      %v948 = vsel %vm884, %v730, %v916
      %v949 = vsel %vm885, %v735, %v917
      %v950 = vsel %vm886, %v740, %v918
      %v951 = vsel %vm887, %v745, %v919
      %v952 = vsel %vm888, %v750, %v920
      %v953 = vsel %vm889, %v755, %v921
      %v954 = vsel %vm890, %v760, %v922
      %v955 = vsel %vm891, %v765, %v923
      %v956 = vsel %vm892, %v770, %v924
      %v957 = vsel %vm893, %v775, %v925
      %v958 = vsel %vm894, %v780, %v926
      %v959 = vsel %vm895, %v785, %v927
      %v960 = vsel %vm896, %v790, %v928
      %v961 = vsel %vm897, %v795, %v929
      %v962 = vsel %vm898, %v800, %v930
      %v963 = vsel %vm899, %v805, %v931
      %v964 = vsel %vm900, %v810, %v932
      %v965 = vsel %vm901, %v815, %v933
      %v966 = vsel %vm902, %v820, %v934
      %v967 = vsel %vm903, %v825, %v935
      %v968 = vsel %vm904, %v830, %v936
      %v969 = vsel %vm905, %v835, %v937
      %v970 = vsel %vm906, %v840, %v938
      %v971 = vsel %vm907, %v845, %v939
      %v972 = vsel %vm908, %v850, %v940
      %v973 = vsel %vm909, %v855, %v941
      %v974 = vsel %vm910, %v860, %v942
      %v975 = vsel %vm911, %v865, %v943
      %v976 = vsel %vm912, %v870, %v944
      %v977 = vsel %vm913, %v875, %v945
      %v978 = vsel %vm914, %v880, %v946
      %s979 = scalar_lea.vmem [#allocation2], 48
      %980 = vst.msk [vmem:[%s979 + $0x2] sm:$0xff] %vm557, %v947
      %981 = vst.msk [vmem:[%s979 + $0xa] sm:$0xff] %vm557, %v948
      %982 = vst.msk [vmem:[%s979 + $0x1a] sm:$0xff] %vm557, %v949
      %983 = vst.msk [vmem:[%s979 + $0x22] sm:$0xff] %vm557, %v950
      %984 = vst.msk [vmem:[%s979 + $0x32] sm:$0xff] %vm557, %v951
      %985 = vst.msk [vmem:[%s979 + $0x3a] sm:$0xff] %vm557, %v952
      %986 = vst.msk [vmem:[%s979 + $0x4a] sm:$0xff] %vm557, %v953
      %987 = vst.msk [vmem:[%s979 + $0x52] sm:$0xff] %vm557, %v954
      %988 = vst.msk [vmem:[%s979 + $0x62] sm:$0xff] %vm557, %v955
      %989 = vst.msk [vmem:[%s979 + $0x6a] sm:$0xff] %vm557, %v956
      %990 = vst.msk [vmem:[%s979 + $0x7a] sm:$0xff] %vm557, %v957
      %991 = vst.msk [vmem:[%s979 + $0x82] sm:$0xff] %vm557, %v958
      %992 = vst.msk [vmem:[%s979 + $0x92] sm:$0xff] %vm557, %v959
      %993 = vst.msk [vmem:[%s979 + $0x9a] sm:$0xff] %vm557, %v960
      %994 = vst.msk [vmem:[%s979 + $0xaa] sm:$0xff] %vm557, %v961
      %995 = vst.msk [vmem:[%s979 + $0xb2] sm:$0xff] %vm557, %v962
      %996 = vst.msk [vmem:[%s979 + $0xc2] sm:$0xff] %vm557, %v963
      %997 = vst.msk [vmem:[%s979 + $0xca] sm:$0xff] %vm557, %v964
      %998 = vst.msk [vmem:[%s979 + $0xda] sm:$0xff] %vm557, %v965
      %999 = vst.msk [vmem:[%s979 + $0xe2] sm:$0xff] %vm557, %v966
      %1000 = vst.msk [vmem:[%s979 + $0xf2] sm:$0xff] %vm557, %v967
      %1001 = vst.msk [vmem:[%s979 + $0xfa] sm:$0xff] %vm557, %v968
      %1002 = vst.msk [vmem:[%s979 + $0x10a] sm:$0xff] %vm557, %v969
      %1003 = vst.msk [vmem:[%s979 + $0x112] sm:$0xff] %vm557, %v970
      %1004 = vst.msk [vmem:[%s979 + $0x122] sm:$0xff] %vm557, %v971
      %1005 = vst.msk [vmem:[%s979 + $0x12a] sm:$0xff] %vm557, %v972
      %1006 = vst.msk [vmem:[%s979 + $0x13a] sm:$0xff] %vm557, %v973
      %1007 = vst.msk [vmem:[%s979 + $0x142] sm:$0xff] %vm557, %v974
      %1008 = vst.msk [vmem:[%s979 + $0x152] sm:$0xff] %vm557, %v975
      %1009 = vst.msk [vmem:[%s979 + $0x15a] sm:$0xff] %vm557, %v976
      %1010 = vst.msk [vmem:[%s979 + $0x16a] sm:$0xff] %vm557, %v977
      %1011 = vst.msk [vmem:[%s979 + $0x172] sm:$0xff] %vm557, %v978
      %p1012 = scmp.gt.s32.totalorder %s23, 0
      // Predicated region
      $region53: #{tpu_custom_call.1} parent=47 // pred_check
        %p1013 = pneg %p1012
      $region54: #{tpu_custom_call.1} parent=47 // pred_check_branch
        %1015 = sbr.rel (%p1013) target = $region56
      $region55: #{tpu_custom_call.1} parent=47 // pred_region
        %v1016 = vld [vmem:[%s410] sm:$0xff]
        %v1017 = vld [vmem:[%s410 + $0x8] sm:$0xff]
        %v1018 = vld [vmem:[%s410 + $0x10] sm:$0xff]
        %v1019 = vld [vmem:[%s410 + $0x18] sm:$0xff]
        %v1021 = vsel %vm557, %v1016, 0
        %v1024 = vsel %vm557, %v1017, 0
        %v1027 = vsel %vm557, %v1018, 0
        %v1030 = vsel %vm557, %v1019, 0
        %1032 = vmatprep.subr.mxu0 0.0
        %1033 = vmatpush1.msra.mxu0 0.0
        %1034 = vmatprep.subr.mxu0 0.0
        %1035 = vmatpush1.msra.mxu0 0.0
        %1036 = vmatprep.subr.mxu0 0.0
        %1037 = vmatpush1.msra.mxu0 0.0
        %1038 = vmatprep.subr.mxu0 0.0
        %1039 = vmatpush1.msra.mxu0 0.0
        %1040 = vmatprep.subr.mxu0 0.0
        %1041 = vmatpush1.msra.mxu0 0.0
        %1042 = vmatprep.subr.mxu0 0.0
        %1043 = vmatpush1.msra.mxu0 0.0
        %1044 = vmatprep.subr.mxu0 0.0
        %1045 = vmatpush1.msra.mxu0 0.0
        %1046 = vmatprep.subr.mxu0 0.0
        %1047 = vmatpush1.msra.mxu0 0.0
        %1048 = vmatprep.subr.mxu0 0.0
        %1049 = vmatpush1.msra.mxu0 0.0
        %1050 = vmatprep.subr.mxu0 0.0
        %1051 = vmatpush1.msra.mxu0 0.0
        %1052 = vmatprep.subr.mxu0 0.0
        %1053 = vmatpush1.msra.mxu0 0.0
        %1054 = vmatprep.subr.mxu0 0.0
        %1055 = vmatpush1.msra.mxu0 0.0
        %1056 = vmatprep.subr.mxu0 0.0
        %1057 = vmatpush1.msra.mxu0 0.0
        %1058 = vmatprep.subr.mxu0 0.0
        %1059 = vmatpush1.msra.mxu0 0.0
        %1060 = vmatprep.subr.mxu0 0.0
        %1061 = vmatpush1.msra.mxu0 0.0
        %1062 = vmatprep.subr.mxu0 0.0
        %1063 = vmatpush1.msra.mxu0 %v656
        %1064 = vmatprep.subr.mxu0 0.0
        %1065 = vmatpush2.msra.mxu0 0.0
        %1066 = vmatprep.subr.mxu0 0.0
        %1067 = vmatpush2.msra.mxu0 0.0
        %1068 = vmatprep.subr.mxu0 0.0
        %1069 = vmatpush2.msra.mxu0 0.0
        %1070 = vmatprep.subr.mxu0 0.0
        %1071 = vmatpush2.msra.mxu0 0.0
        %1072 = vmatprep.subr.mxu0 0.0
        %1073 = vmatpush2.msra.mxu0 0.0
        %1074 = vmatprep.subr.mxu0 0.0
        %1075 = vmatpush2.msra.mxu0 0.0
        %1076 = vmatprep.subr.mxu0 0.0
        %1077 = vmatpush2.msra.mxu0 0.0
        %1078 = vmatprep.subr.mxu0 0.0
        %1079 = vmatpush2.msra.mxu0 0.0
        %1080 = vmatprep.subr.mxu0 0.0
        %1081 = vmatpush2.msra.mxu0 0.0
        %1082 = vmatprep.subr.mxu0 0.0
        %1083 = vmatpush2.msra.mxu0 0.0
        %1084 = vmatprep.subr.mxu0 0.0
        %1085 = vmatpush2.msra.mxu0 0.0
        %1086 = vmatprep.subr.mxu0 0.0
        %1087 = vmatpush2.msra.mxu0 0.0
        %1088 = vmatprep.subr.mxu0 0.0
        %1089 = vmatpush2.msra.mxu0 0.0
        %1090 = vmatprep.subr.mxu0 0.0
        %1091 = vmatpush2.msra.mxu0 0.0
        %1092 = vmatprep.subr.mxu0 0.0
        %1093 = vmatpush2.msra.mxu0 0.0
        %1094 = vmatprep.subr.mxu0 0.0
        %1095 = vmatpush2.msra.mxu0 0.0
        %1096 = vmatprep.mubr.f32.mxu0 0.0
        %1097 = vmatmul.mubr.f32.gmra.mxu0 %v1021
        %v1098 = vpop.f32.mrf.mxu0
        %v1099 = vadd.f32 %v555, %v1098
        %v1100 = vpop.f32.mrf.mxu0
        %1101 = vmatprep.mubr.f32.mxu0 0.0
        %1102 = vmatmul.mubr.f32.gmra.mxu0 %v1024
        %v1103 = vpop.f32.mrf.mxu0
        %v1104 = vadd.f32 %v555, %v1103
        %v1105 = vpop.f32.mrf.mxu0
        %1106 = vmatprep.mubr.f32.mxu0 0.0
        %1107 = vmatmul.mubr.f32.gmra.mxu0 %v1027
        %v1108 = vpop.f32.mrf.mxu0
        %v1109 = vadd.f32 %v555, %v1108
        %v1110 = vpop.f32.mrf.mxu0
        %1111 = vmatprep.mubr.f32.mxu0 0.0
        %1112 = vmatmul.mubr.f32.gmra.mxu0 %v1030
        %v1113 = vpop.f32.mrf.mxu0
        %v1114 = vadd.f32 %v555, %v1113
        %v1115 = vpop.f32.mrf.mxu0
        %1116 = vdwg.mxu0
        %vm1117 = vcmp.gt.f32.partialorder %v1099, 0.0
        %vm1118 = vcmp.gt.f32.partialorder %v1104, 0.0
        %vm1119 = vcmp.gt.f32.partialorder %v1109, 0.0
        %vm1120 = vcmp.gt.f32.partialorder %v1114, 0.0
        %v1121 = vmul.f32 %v1099, 0.01
        %v1122 = vmul.f32 %v1104, 0.01
        %v1123 = vmul.f32 %v1109, 0.01
        %v1124 = vmul.f32 %v1114, 0.01
        %v1125 = vsel %vm1117, %v1099, %v1121
        %v1126 = vsel %vm1118, %v1104, %v1122
        %v1127 = vsel %vm1119, %v1109, %v1123
        %v1128 = vsel %vm1120, %v1114, %v1124
        %1129 = vst.msk [vmem:[#allocation2 + $0x2] sm:$0xff] %vm557, %v1125
        %1130 = vst.msk [vmem:[#allocation2 + $0xa] sm:$0xff] %vm557, %v1126
        %1131 = vst.msk [vmem:[#allocation2 + $0x1a] sm:$0xff] %vm557, %v1127
        %1132 = vst.msk [vmem:[#allocation2 + $0x22] sm:$0xff] %vm557, %v1128
      $region56: #{tpu_custom_call.1} parent=47 // pred_fallthru
        _
      %p1133 = scmp.lt.s32.totalorder %s23, 0
      // Predicated region
      $region57: #{tpu_custom_call.1} parent=47 // pred_check
        %p1134 = pneg %p1133
      $region58: #{tpu_custom_call.1} parent=47 // pred_check_branch
        %1136 = sbr.rel (%p1134) target = $region60
      $region59: #{tpu_custom_call.1} parent=47 // pred_region
        %v1137 = vld [vmem:[%s440] sm:$0xff]
        %v1138 = vld [vmem:[%s440 + $0x8] sm:$0xff]
        %v1139 = vld [vmem:[%s440 + $0x10] sm:$0xff]
        %v1140 = vld [vmem:[%s440 + $0x18] sm:$0xff]
        %v1142 = vsel %vm557, %v1137, 0
        %v1145 = vsel %vm557, %v1138, 0
        %v1148 = vsel %vm557, %v1139, 0
        %v1151 = vsel %vm557, %v1140, 0
        %1153 = vmatprep.subr.mxu0 0.0
        %1154 = vmatpush1.msra.mxu0 0.0
        %1155 = vmatprep.subr.mxu0 0.0
        %1156 = vmatpush1.msra.mxu0 0.0
        %1157 = vmatprep.subr.mxu0 0.0
        %1158 = vmatpush1.msra.mxu0 0.0
        %1159 = vmatprep.subr.mxu0 0.0
        %1160 = vmatpush1.msra.mxu0 0.0
        %1161 = vmatprep.subr.mxu0 0.0
        %1162 = vmatpush1.msra.mxu0 0.0
        %1163 = vmatprep.subr.mxu0 0.0
        %1164 = vmatpush1.msra.mxu0 0.0
        %1165 = vmatprep.subr.mxu0 0.0
        %1166 = vmatpush1.msra.mxu0 0.0
        %1167 = vmatprep.subr.mxu0 0.0
        %1168 = vmatpush1.msra.mxu0 0.0
        %1169 = vmatprep.subr.mxu0 0.0
        %1170 = vmatpush1.msra.mxu0 0.0
        %1171 = vmatprep.subr.mxu0 0.0
        %1172 = vmatpush1.msra.mxu0 0.0
        %1173 = vmatprep.subr.mxu0 0.0
        %1174 = vmatpush1.msra.mxu0 0.0
        %1175 = vmatprep.subr.mxu0 0.0
        %1176 = vmatpush1.msra.mxu0 0.0
        %1177 = vmatprep.subr.mxu0 0.0
        %1178 = vmatpush1.msra.mxu0 0.0
        %1179 = vmatprep.subr.mxu0 0.0
        %1180 = vmatpush1.msra.mxu0 0.0
        %1181 = vmatprep.subr.mxu0 0.0
        %1182 = vmatpush1.msra.mxu0 0.0
        %1183 = vmatprep.subr.mxu0 0.0
        %1184 = vmatpush1.msra.mxu0 %v656
        %1185 = vmatprep.subr.mxu0 0.0
        %1186 = vmatpush2.msra.mxu0 0.0
        %1187 = vmatprep.subr.mxu0 0.0
        %1188 = vmatpush2.msra.mxu0 0.0
        %1189 = vmatprep.subr.mxu0 0.0
        %1190 = vmatpush2.msra.mxu0 0.0
        %1191 = vmatprep.subr.mxu0 0.0
        %1192 = vmatpush2.msra.mxu0 0.0
        %1193 = vmatprep.subr.mxu0 0.0
        %1194 = vmatpush2.msra.mxu0 0.0
        %1195 = vmatprep.subr.mxu0 0.0
        %1196 = vmatpush2.msra.mxu0 0.0
        %1197 = vmatprep.subr.mxu0 0.0
        %1198 = vmatpush2.msra.mxu0 0.0
        %1199 = vmatprep.subr.mxu0 0.0
        %1200 = vmatpush2.msra.mxu0 0.0
        %1201 = vmatprep.subr.mxu0 0.0
        %1202 = vmatpush2.msra.mxu0 0.0
        %1203 = vmatprep.subr.mxu0 0.0
        %1204 = vmatpush2.msra.mxu0 0.0
        %1205 = vmatprep.subr.mxu0 0.0
        %1206 = vmatpush2.msra.mxu0 0.0
        %1207 = vmatprep.subr.mxu0 0.0
        %1208 = vmatpush2.msra.mxu0 0.0
        %1209 = vmatprep.subr.mxu0 0.0
        %1210 = vmatpush2.msra.mxu0 0.0
        %1211 = vmatprep.subr.mxu0 0.0
        %1212 = vmatpush2.msra.mxu0 0.0
        %1213 = vmatprep.subr.mxu0 0.0
        %1214 = vmatpush2.msra.mxu0 0.0
        %1215 = vmatprep.subr.mxu0 0.0
        %1216 = vmatpush2.msra.mxu0 0.0
        %1217 = vmatprep.mubr.f32.mxu0 0.0
        %1218 = vmatmul.mubr.f32.gmra.mxu0 %v1142
        %v1219 = vpop.f32.mrf.mxu0
        %v1220 = vadd.f32 %v555, %v1219
        %v1221 = vpop.f32.mrf.mxu0
        %1222 = vmatprep.mubr.f32.mxu0 0.0
        %1223 = vmatmul.mubr.f32.gmra.mxu0 %v1145
        %v1224 = vpop.f32.mrf.mxu0
        %v1225 = vadd.f32 %v555, %v1224
        %v1226 = vpop.f32.mrf.mxu0
        %1227 = vmatprep.mubr.f32.mxu0 0.0
        %1228 = vmatmul.mubr.f32.gmra.mxu0 %v1148
        %v1229 = vpop.f32.mrf.mxu0
        %v1230 = vadd.f32 %v555, %v1229
        %v1231 = vpop.f32.mrf.mxu0
        %1232 = vmatprep.mubr.f32.mxu0 0.0
        %1233 = vmatmul.mubr.f32.gmra.mxu0 %v1151
        %v1234 = vpop.f32.mrf.mxu0
        %v1235 = vadd.f32 %v555, %v1234
        %v1236 = vpop.f32.mrf.mxu0
        %1237 = vdwg.mxu0
        %vm1238 = vcmp.gt.f32.partialorder %v1220, 0.0
        %vm1239 = vcmp.gt.f32.partialorder %v1225, 0.0
        %vm1240 = vcmp.gt.f32.partialorder %v1230, 0.0
        %vm1241 = vcmp.gt.f32.partialorder %v1235, 0.0
        %v1242 = vmul.f32 %v1220, 0.01
        %v1243 = vmul.f32 %v1225, 0.01
        %v1244 = vmul.f32 %v1230, 0.01
        %v1245 = vmul.f32 %v1235, 0.01
        %v1246 = vsel %vm1238, %v1220, %v1242
        %v1247 = vsel %vm1239, %v1225, %v1243
        %v1248 = vsel %vm1240, %v1230, %v1244
        %v1249 = vsel %vm1241, %v1235, %v1245
        %s1250 = scalar_lea.vmem [#allocation2], 432
        %1251 = vst.msk [vmem:[%s1250 + $0x2] sm:$0xff] %vm557, %v1246
        %1252 = vst.msk [vmem:[%s1250 + $0xa] sm:$0xff] %vm557, %v1247
        %1253 = vst.msk [vmem:[%s1250 + $0x1a] sm:$0xff] %vm557, %v1248
        %1254 = vst.msk [vmem:[%s1250 + $0x22] sm:$0xff] %vm557, %v1249
      $region60: #{tpu_custom_call.1} parent=47 // pred_fallthru
        _
      %v1255 = vld [vmem:[%s5] sm:$0x1f]
      %v1256 = vld [vmem:[%s5 + $0x8] sm:$0x1f]
      %v1257 = vld [vmem:[%s5 + $0x10] sm:$0x1f]
      %v1258 = vld [vmem:[%s5 + $0x18] sm:$0x1f]
      %v1259 = vld [vmem:[%s5 + $0x20] sm:$0x1f]
      %v1260 = vld [vmem:[%s6] sm:$0x1]
      %v1262 = vlaneseq
      %v1263 = vshrl.u32 %v1262, 7
      %v1264 = vsub.s32 0, %v1263
      %v1265 = vrot.slane %v1260, %v1264
      %v1267 = vld [vmem:[#allocation2] sm:$0xff]
      %v1268 = vld [vmem:[#allocation2 + $0x8] sm:$0xff]
      %v1269 = vld [vmem:[#allocation2 + $0x18] sm:$0xff]
      %v1270 = vld [vmem:[#allocation2 + $0x20] sm:$0xff]
      %v1271 = vld [vmem:[#allocation2 + $0x30] sm:$0xff]
      %v1272 = vld [vmem:[#allocation2 + $0x38] sm:$0xff]
      %v1273 = vld [vmem:[#allocation2 + $0x48] sm:$0xff]
      %v1274 = vld [vmem:[#allocation2 + $0x50] sm:$0xff]
      %v1275 = vld [vmem:[#allocation2 + $0x60] sm:$0xff]
      %v1276 = vld [vmem:[#allocation2 + $0x68] sm:$0xff]
      %v1277 = vld [vmem:[#allocation2 + $0x78] sm:$0xff]
      %v1278 = vld [vmem:[#allocation2 + $0x80] sm:$0xff]
      %v1279 = vld [vmem:[#allocation2 + $0x90] sm:$0xff]
      %v1280 = vld [vmem:[#allocation2 + $0x98] sm:$0xff]
      %v1281 = vld [vmem:[#allocation2 + $0xa8] sm:$0xff]
      %v1282 = vld [vmem:[#allocation2 + $0xb0] sm:$0xff]
      %v1283 = vld [vmem:[#allocation2 + $0xc0] sm:$0xff]
      %v1284 = vld [vmem:[#allocation2 + $0xc8] sm:$0xff]
      %v1285 = vld [vmem:[#allocation2 + $0xd8] sm:$0xff]
      %v1286 = vld [vmem:[#allocation2 + $0xe0] sm:$0xff]
      %v1287 = vld [vmem:[#allocation2 + $0xf0] sm:$0xff]
      %v1288 = vld [vmem:[#allocation2 + $0xf8] sm:$0xff]
      %v1289 = vld [vmem:[#allocation2 + $0x108] sm:$0xff]
      %v1290 = vld [vmem:[#allocation2 + $0x110] sm:$0xff]
      %v1291 = vld [vmem:[#allocation2 + $0x120] sm:$0xff]
      %v1292 = vld [vmem:[#allocation2 + $0x128] sm:$0xff]
      %v1293 = vld [vmem:[#allocation2 + $0x138] sm:$0xff]
      %v1294 = vld [vmem:[#allocation2 + $0x140] sm:$0xff]
      %v1295 = vld [vmem:[#allocation2 + $0x150] sm:$0xff]
      %v1296 = vld [vmem:[#allocation2 + $0x158] sm:$0xff]
      %v1297 = vld [vmem:[#allocation2 + $0x168] sm:$0xff]
      %v1298 = vld [vmem:[#allocation2 + $0x170] sm:$0xff]
      %v1299 = vlaneseq
      %v1300 = vshrl.u32 %v1299, 7
      %v1301 = vsub.s32 0, %v1300
      %v1302 = vrot.slane %v1255, %v1301
      %v1303 = vmul.f32 %v1267, %v1302
      %v1304 = vmul.f32 %v1268, %v1302
      %v1305 = vmul.f32 %v1269, %v1302
      %v1306 = vmul.f32 %v1270, %v1302
      %v1307 = vmul.f32 %v1271, %v1302
      %v1308 = vmul.f32 %v1272, %v1302
      %v1309 = vmul.f32 %v1273, %v1302
      %v1310 = vmul.f32 %v1274, %v1302
      %v1311 = vmul.f32 %v1275, %v1302
      %v1312 = vmul.f32 %v1276, %v1302
      %v1313 = vmul.f32 %v1277, %v1302
      %v1314 = vmul.f32 %v1278, %v1302
      %v1315 = vmul.f32 %v1279, %v1302
      %v1316 = vmul.f32 %v1280, %v1302
      %v1317 = vmul.f32 %v1281, %v1302
      %v1318 = vmul.f32 %v1282, %v1302
      %v1319 = vmul.f32 %v1283, %v1302
      %v1320 = vmul.f32 %v1284, %v1302
      %v1321 = vmul.f32 %v1285, %v1302
      %v1322 = vmul.f32 %v1286, %v1302
      %v1323 = vmul.f32 %v1287, %v1302
      %v1324 = vmul.f32 %v1288, %v1302
      %v1325 = vmul.f32 %v1289, %v1302
      %v1326 = vmul.f32 %v1290, %v1302
      %v1327 = vmul.f32 %v1291, %v1302
      %v1328 = vmul.f32 %v1292, %v1302
      %v1329 = vmul.f32 %v1293, %v1302
      %v1330 = vmul.f32 %v1294, %v1302
      %v1331 = vmul.f32 %v1295, %v1302
      %v1332 = vmul.f32 %v1296, %v1302
      %v1333 = vmul.f32 %v1297, %v1302
      %v1334 = vmul.f32 %v1298, %v1302
      %v1335 = vadd.f32 %v1265, %v1303
      %v1336 = vadd.f32 %v1265, %v1304
      %v1337 = vadd.f32 %v1265, %v1305
      %v1338 = vadd.f32 %v1265, %v1306
      %v1339 = vadd.f32 %v1265, %v1307
      %v1340 = vadd.f32 %v1265, %v1308
      %v1341 = vadd.f32 %v1265, %v1309
      %v1342 = vadd.f32 %v1265, %v1310
      %v1343 = vadd.f32 %v1265, %v1311
      %v1344 = vadd.f32 %v1265, %v1312
      %v1345 = vadd.f32 %v1265, %v1313
      %v1346 = vadd.f32 %v1265, %v1314
      %v1347 = vadd.f32 %v1265, %v1315
      %v1348 = vadd.f32 %v1265, %v1316
      %v1349 = vadd.f32 %v1265, %v1317
      %v1350 = vadd.f32 %v1265, %v1318
      %v1351 = vadd.f32 %v1265, %v1319
      %v1352 = vadd.f32 %v1265, %v1320
      %v1353 = vadd.f32 %v1265, %v1321
      %v1354 = vadd.f32 %v1265, %v1322
      %v1355 = vadd.f32 %v1265, %v1323
      %v1356 = vadd.f32 %v1265, %v1324
      %v1357 = vadd.f32 %v1265, %v1325
      %v1358 = vadd.f32 %v1265, %v1326
      %v1359 = vadd.f32 %v1265, %v1327
      %v1360 = vadd.f32 %v1265, %v1328
      %v1361 = vadd.f32 %v1265, %v1329
      %v1362 = vadd.f32 %v1265, %v1330
      %v1363 = vadd.f32 %v1265, %v1331
      %v1364 = vadd.f32 %v1265, %v1332
      %v1365 = vadd.f32 %v1265, %v1333
      %v1366 = vadd.f32 %v1265, %v1334
      %v1367 = vld [vmem:[#allocation2 + $0x1] sm:$0xff]
      %v1368 = vld [vmem:[#allocation2 + $0x9] sm:$0xff]
      %v1369 = vld [vmem:[#allocation2 + $0x19] sm:$0xff]
      %v1370 = vld [vmem:[#allocation2 + $0x21] sm:$0xff]
      %v1371 = vld [vmem:[#allocation2 + $0x31] sm:$0xff]
      %v1372 = vld [vmem:[#allocation2 + $0x39] sm:$0xff]
      %v1373 = vld [vmem:[#allocation2 + $0x49] sm:$0xff]
      %v1374 = vld [vmem:[#allocation2 + $0x51] sm:$0xff]
      %v1375 = vld [vmem:[#allocation2 + $0x61] sm:$0xff]
      %v1376 = vld [vmem:[#allocation2 + $0x69] sm:$0xff]
      %v1377 = vld [vmem:[#allocation2 + $0x79] sm:$0xff]
      %v1378 = vld [vmem:[#allocation2 + $0x81] sm:$0xff]
      %v1379 = vld [vmem:[#allocation2 + $0x91] sm:$0xff]
      %v1380 = vld [vmem:[#allocation2 + $0x99] sm:$0xff]
      %v1381 = vld [vmem:[#allocation2 + $0xa9] sm:$0xff]
      %v1382 = vld [vmem:[#allocation2 + $0xb1] sm:$0xff]
      %v1383 = vld [vmem:[#allocation2 + $0xc1] sm:$0xff]
      %v1384 = vld [vmem:[#allocation2 + $0xc9] sm:$0xff]
      %v1385 = vld [vmem:[#allocation2 + $0xd9] sm:$0xff]
      %v1386 = vld [vmem:[#allocation2 + $0xe1] sm:$0xff]
      %v1387 = vld [vmem:[#allocation2 + $0xf1] sm:$0xff]
      %v1388 = vld [vmem:[#allocation2 + $0xf9] sm:$0xff]
      %v1389 = vld [vmem:[#allocation2 + $0x109] sm:$0xff]
      %v1390 = vld [vmem:[#allocation2 + $0x111] sm:$0xff]
      %v1391 = vld [vmem:[#allocation2 + $0x121] sm:$0xff]
      %v1392 = vld [vmem:[#allocation2 + $0x129] sm:$0xff]
      %v1393 = vld [vmem:[#allocation2 + $0x139] sm:$0xff]
      %v1394 = vld [vmem:[#allocation2 + $0x141] sm:$0xff]
      %v1395 = vld [vmem:[#allocation2 + $0x151] sm:$0xff]
      %v1396 = vld [vmem:[#allocation2 + $0x159] sm:$0xff]
      %v1397 = vld [vmem:[#allocation2 + $0x169] sm:$0xff]
      %v1398 = vld [vmem:[#allocation2 + $0x171] sm:$0xff]
      %v1399 = vlaneseq
      %v1400 = vshrl.u32 %v1399, 7
      %v1401 = vsub.s32 1, %v1400
      %v1402 = vrot.slane %v1255, %v1401
      %v1403 = vmul.f32 %v1367, %v1402
      %v1404 = vmul.f32 %v1368, %v1402
      %v1405 = vmul.f32 %v1369, %v1402
      %v1406 = vmul.f32 %v1370, %v1402
      %v1407 = vmul.f32 %v1371, %v1402
      %v1408 = vmul.f32 %v1372, %v1402
      %v1409 = vmul.f32 %v1373, %v1402
      %v1410 = vmul.f32 %v1374, %v1402
      %v1411 = vmul.f32 %v1375, %v1402
      %v1412 = vmul.f32 %v1376, %v1402
      %v1413 = vmul.f32 %v1377, %v1402
      %v1414 = vmul.f32 %v1378, %v1402
      %v1415 = vmul.f32 %v1379, %v1402
      %v1416 = vmul.f32 %v1380, %v1402
      %v1417 = vmul.f32 %v1381, %v1402
      %v1418 = vmul.f32 %v1382, %v1402
      %v1419 = vmul.f32 %v1383, %v1402
      %v1420 = vmul.f32 %v1384, %v1402
      %v1421 = vmul.f32 %v1385, %v1402
      %v1422 = vmul.f32 %v1386, %v1402
      %v1423 = vmul.f32 %v1387, %v1402
      %v1424 = vmul.f32 %v1388, %v1402
      %v1425 = vmul.f32 %v1389, %v1402
      %v1426 = vmul.f32 %v1390, %v1402
      %v1427 = vmul.f32 %v1391, %v1402
      %v1428 = vmul.f32 %v1392, %v1402
      %v1429 = vmul.f32 %v1393, %v1402
      %v1430 = vmul.f32 %v1394, %v1402
      %v1431 = vmul.f32 %v1395, %v1402
      %v1432 = vmul.f32 %v1396, %v1402
      %v1433 = vmul.f32 %v1397, %v1402
      %v1434 = vmul.f32 %v1398, %v1402
      %v1435 = vadd.f32 %v1335, %v1403
      %v1436 = vadd.f32 %v1336, %v1404
      %v1437 = vadd.f32 %v1337, %v1405
      %v1438 = vadd.f32 %v1338, %v1406
      %v1439 = vadd.f32 %v1339, %v1407
      %v1440 = vadd.f32 %v1340, %v1408
      %v1441 = vadd.f32 %v1341, %v1409
      %v1442 = vadd.f32 %v1342, %v1410
      %v1443 = vadd.f32 %v1343, %v1411
      %v1444 = vadd.f32 %v1344, %v1412
      %v1445 = vadd.f32 %v1345, %v1413
      %v1446 = vadd.f32 %v1346, %v1414
      %v1447 = vadd.f32 %v1347, %v1415
      %v1448 = vadd.f32 %v1348, %v1416
      %v1449 = vadd.f32 %v1349, %v1417
      %v1450 = vadd.f32 %v1350, %v1418
      %v1451 = vadd.f32 %v1351, %v1419
      %v1452 = vadd.f32 %v1352, %v1420
      %v1453 = vadd.f32 %v1353, %v1421
      %v1454 = vadd.f32 %v1354, %v1422
      %v1455 = vadd.f32 %v1355, %v1423
      %v1456 = vadd.f32 %v1356, %v1424
      %v1457 = vadd.f32 %v1357, %v1425
      %v1458 = vadd.f32 %v1358, %v1426
      %v1459 = vadd.f32 %v1359, %v1427
      %v1460 = vadd.f32 %v1360, %v1428
      %v1461 = vadd.f32 %v1361, %v1429
      %v1462 = vadd.f32 %v1362, %v1430
      %v1463 = vadd.f32 %v1363, %v1431
      %v1464 = vadd.f32 %v1364, %v1432
      %v1465 = vadd.f32 %v1365, %v1433
      %v1466 = vadd.f32 %v1366, %v1434
      %v1467 = vld [vmem:[#allocation2 + $0x2] sm:$0xff]
      %v1468 = vld [vmem:[#allocation2 + $0xa] sm:$0xff]
      %v1469 = vld [vmem:[#allocation2 + $0x1a] sm:$0xff]
      %v1470 = vld [vmem:[#allocation2 + $0x22] sm:$0xff]
      %v1471 = vld [vmem:[#allocation2 + $0x32] sm:$0xff]
      %v1472 = vld [vmem:[#allocation2 + $0x3a] sm:$0xff]
      %v1473 = vld [vmem:[#allocation2 + $0x4a] sm:$0xff]
      %v1474 = vld [vmem:[#allocation2 + $0x52] sm:$0xff]
      %v1475 = vld [vmem:[#allocation2 + $0x62] sm:$0xff]
      %v1476 = vld [vmem:[#allocation2 + $0x6a] sm:$0xff]
      %v1477 = vld [vmem:[#allocation2 + $0x7a] sm:$0xff]
      %v1478 = vld [vmem:[#allocation2 + $0x82] sm:$0xff]
      %v1479 = vld [vmem:[#allocation2 + $0x92] sm:$0xff]
      %v1480 = vld [vmem:[#allocation2 + $0x9a] sm:$0xff]
      %v1481 = vld [vmem:[#allocation2 + $0xaa] sm:$0xff]
      %v1482 = vld [vmem:[#allocation2 + $0xb2] sm:$0xff]
      %v1483 = vld [vmem:[#allocation2 + $0xc2] sm:$0xff]
      %v1484 = vld [vmem:[#allocation2 + $0xca] sm:$0xff]
      %v1485 = vld [vmem:[#allocation2 + $0xda] sm:$0xff]
      %v1486 = vld [vmem:[#allocation2 + $0xe2] sm:$0xff]
      %v1487 = vld [vmem:[#allocation2 + $0xf2] sm:$0xff]
      %v1488 = vld [vmem:[#allocation2 + $0xfa] sm:$0xff]
      %v1489 = vld [vmem:[#allocation2 + $0x10a] sm:$0xff]
      %v1490 = vld [vmem:[#allocation2 + $0x112] sm:$0xff]
      %v1491 = vld [vmem:[#allocation2 + $0x122] sm:$0xff]
      %v1492 = vld [vmem:[#allocation2 + $0x12a] sm:$0xff]
      %v1493 = vld [vmem:[#allocation2 + $0x13a] sm:$0xff]
      %v1494 = vld [vmem:[#allocation2 + $0x142] sm:$0xff]
      %v1495 = vld [vmem:[#allocation2 + $0x152] sm:$0xff]
      %v1496 = vld [vmem:[#allocation2 + $0x15a] sm:$0xff]
      %v1497 = vld [vmem:[#allocation2 + $0x16a] sm:$0xff]
      %v1498 = vld [vmem:[#allocation2 + $0x172] sm:$0xff]
      %v1499 = vlaneseq
      %v1500 = vshrl.u32 %v1499, 7
      %v1501 = vsub.s32 2, %v1500
      %v1502 = vrot.slane %v1255, %v1501
      %v1503 = vmul.f32 %v1467, %v1502
      %v1504 = vmul.f32 %v1468, %v1502
      %v1505 = vmul.f32 %v1469, %v1502
      %v1506 = vmul.f32 %v1470, %v1502
      %v1507 = vmul.f32 %v1471, %v1502
      %v1508 = vmul.f32 %v1472, %v1502
      %v1509 = vmul.f32 %v1473, %v1502
      %v1510 = vmul.f32 %v1474, %v1502
      %v1511 = vmul.f32 %v1475, %v1502
      %v1512 = vmul.f32 %v1476, %v1502
      %v1513 = vmul.f32 %v1477, %v1502
      %v1514 = vmul.f32 %v1478, %v1502
      %v1515 = vmul.f32 %v1479, %v1502
      %v1516 = vmul.f32 %v1480, %v1502
      %v1517 = vmul.f32 %v1481, %v1502
      %v1518 = vmul.f32 %v1482, %v1502
      %v1519 = vmul.f32 %v1483, %v1502
      %v1520 = vmul.f32 %v1484, %v1502
      %v1521 = vmul.f32 %v1485, %v1502
      %v1522 = vmul.f32 %v1486, %v1502
      %v1523 = vmul.f32 %v1487, %v1502
      %v1524 = vmul.f32 %v1488, %v1502
      %v1525 = vmul.f32 %v1489, %v1502
      %v1526 = vmul.f32 %v1490, %v1502
      %v1527 = vmul.f32 %v1491, %v1502
      %v1528 = vmul.f32 %v1492, %v1502
      %v1529 = vmul.f32 %v1493, %v1502
      %v1530 = vmul.f32 %v1494, %v1502
      %v1531 = vmul.f32 %v1495, %v1502
      %v1532 = vmul.f32 %v1496, %v1502
      %v1533 = vmul.f32 %v1497, %v1502
      %v1534 = vmul.f32 %v1498, %v1502
      %v1535 = vadd.f32 %v1435, %v1503
      %v1536 = vadd.f32 %v1436, %v1504
      %v1537 = vadd.f32 %v1437, %v1505
      %v1538 = vadd.f32 %v1438, %v1506
      %v1539 = vadd.f32 %v1439, %v1507
      %v1540 = vadd.f32 %v1440, %v1508
      %v1541 = vadd.f32 %v1441, %v1509
      %v1542 = vadd.f32 %v1442, %v1510
      %v1543 = vadd.f32 %v1443, %v1511
      %v1544 = vadd.f32 %v1444, %v1512
      %v1545 = vadd.f32 %v1445, %v1513
      %v1546 = vadd.f32 %v1446, %v1514
      %v1547 = vadd.f32 %v1447, %v1515
      %v1548 = vadd.f32 %v1448, %v1516
      %v1549 = vadd.f32 %v1449, %v1517
      %v1550 = vadd.f32 %v1450, %v1518
      %v1551 = vadd.f32 %v1451, %v1519
      %v1552 = vadd.f32 %v1452, %v1520
      %v1553 = vadd.f32 %v1453, %v1521
      %v1554 = vadd.f32 %v1454, %v1522
      %v1555 = vadd.f32 %v1455, %v1523
      %v1556 = vadd.f32 %v1456, %v1524
      %v1557 = vadd.f32 %v1457, %v1525
      %v1558 = vadd.f32 %v1458, %v1526
      %v1559 = vadd.f32 %v1459, %v1527
      %v1560 = vadd.f32 %v1460, %v1528
      %v1561 = vadd.f32 %v1461, %v1529
      %v1562 = vadd.f32 %v1462, %v1530
      %v1563 = vadd.f32 %v1463, %v1531
      %v1564 = vadd.f32 %v1464, %v1532
      %v1565 = vadd.f32 %v1465, %v1533
      %v1566 = vadd.f32 %v1466, %v1534
      %v1567 = vld [vmem:[#allocation2 + $0x3] sm:$0xff]
      %v1568 = vld [vmem:[#allocation2 + $0xb] sm:$0xff]
      %v1569 = vld [vmem:[#allocation2 + $0x1b] sm:$0xff]
      %v1570 = vld [vmem:[#allocation2 + $0x23] sm:$0xff]
      %v1571 = vld [vmem:[#allocation2 + $0x33] sm:$0xff]
      %v1572 = vld [vmem:[#allocation2 + $0x3b] sm:$0xff]
      %v1573 = vld [vmem:[#allocation2 + $0x4b] sm:$0xff]
      %v1574 = vld [vmem:[#allocation2 + $0x53] sm:$0xff]
      %v1575 = vld [vmem:[#allocation2 + $0x63] sm:$0xff]
      %v1576 = vld [vmem:[#allocation2 + $0x6b] sm:$0xff]
      %v1577 = vld [vmem:[#allocation2 + $0x7b] sm:$0xff]
      %v1578 = vld [vmem:[#allocation2 + $0x83] sm:$0xff]
      %v1579 = vld [vmem:[#allocation2 + $0x93] sm:$0xff]
      %v1580 = vld [vmem:[#allocation2 + $0x9b] sm:$0xff]
      %v1581 = vld [vmem:[#allocation2 + $0xab] sm:$0xff]
      %v1582 = vld [vmem:[#allocation2 + $0xb3] sm:$0xff]
      %v1583 = vld [vmem:[#allocation2 + $0xc3] sm:$0xff]
      %v1584 = vld [vmem:[#allocation2 + $0xcb] sm:$0xff]
      %v1585 = vld [vmem:[#allocation2 + $0xdb] sm:$0xff]
      %v1586 = vld [vmem:[#allocation2 + $0xe3] sm:$0xff]
      %v1587 = vld [vmem:[#allocation2 + $0xf3] sm:$0xff]
      %v1588 = vld [vmem:[#allocation2 + $0xfb] sm:$0xff]
      %v1589 = vld [vmem:[#allocation2 + $0x10b] sm:$0xff]
      %v1590 = vld [vmem:[#allocation2 + $0x113] sm:$0xff]
      %v1591 = vld [vmem:[#allocation2 + $0x123] sm:$0xff]
      %v1592 = vld [vmem:[#allocation2 + $0x12b] sm:$0xff]
      %v1593 = vld [vmem:[#allocation2 + $0x13b] sm:$0xff]
      %v1594 = vld [vmem:[#allocation2 + $0x143] sm:$0xff]
      %v1595 = vld [vmem:[#allocation2 + $0x153] sm:$0xff]
      %v1596 = vld [vmem:[#allocation2 + $0x15b] sm:$0xff]
      %v1597 = vld [vmem:[#allocation2 + $0x16b] sm:$0xff]
      %v1598 = vld [vmem:[#allocation2 + $0x173] sm:$0xff]
      %v1599 = vlaneseq
      %v1600 = vshrl.u32 %v1599, 7
      %v1601 = vsub.s32 3, %v1600
      %v1602 = vrot.slane %v1255, %v1601
      %v1603 = vmul.f32 %v1567, %v1602
      %v1604 = vmul.f32 %v1568, %v1602
      %v1605 = vmul.f32 %v1569, %v1602
      %v1606 = vmul.f32 %v1570, %v1602
      %v1607 = vmul.f32 %v1571, %v1602
      %v1608 = vmul.f32 %v1572, %v1602
      %v1609 = vmul.f32 %v1573, %v1602
      %v1610 = vmul.f32 %v1574, %v1602
      %v1611 = vmul.f32 %v1575, %v1602
      %v1612 = vmul.f32 %v1576, %v1602
      %v1613 = vmul.f32 %v1577, %v1602
      %v1614 = vmul.f32 %v1578, %v1602
      %v1615 = vmul.f32 %v1579, %v1602
      %v1616 = vmul.f32 %v1580, %v1602
      %v1617 = vmul.f32 %v1581, %v1602
      %v1618 = vmul.f32 %v1582, %v1602
      %v1619 = vmul.f32 %v1583, %v1602
      %v1620 = vmul.f32 %v1584, %v1602
      %v1621 = vmul.f32 %v1585, %v1602
      %v1622 = vmul.f32 %v1586, %v1602
      %v1623 = vmul.f32 %v1587, %v1602
      %v1624 = vmul.f32 %v1588, %v1602
      %v1625 = vmul.f32 %v1589, %v1602
      %v1626 = vmul.f32 %v1590, %v1602
      %v1627 = vmul.f32 %v1591, %v1602
      %v1628 = vmul.f32 %v1592, %v1602
      %v1629 = vmul.f32 %v1593, %v1602
      %v1630 = vmul.f32 %v1594, %v1602
      %v1631 = vmul.f32 %v1595, %v1602
      %v1632 = vmul.f32 %v1596, %v1602
      %v1633 = vmul.f32 %v1597, %v1602
      %v1634 = vmul.f32 %v1598, %v1602
      %v1635 = vadd.f32 %v1535, %v1603
      %v1636 = vadd.f32 %v1536, %v1604
      %v1637 = vadd.f32 %v1537, %v1605
      %v1638 = vadd.f32 %v1538, %v1606
      %v1639 = vadd.f32 %v1539, %v1607
      %v1640 = vadd.f32 %v1540, %v1608
      %v1641 = vadd.f32 %v1541, %v1609
      %v1642 = vadd.f32 %v1542, %v1610
      %v1643 = vadd.f32 %v1543, %v1611
      %v1644 = vadd.f32 %v1544, %v1612
      %v1645 = vadd.f32 %v1545, %v1613
      %v1646 = vadd.f32 %v1546, %v1614
      %v1647 = vadd.f32 %v1547, %v1615
      %v1648 = vadd.f32 %v1548, %v1616
      %v1649 = vadd.f32 %v1549, %v1617
      %v1650 = vadd.f32 %v1550, %v1618
      %v1651 = vadd.f32 %v1551, %v1619
      %v1652 = vadd.f32 %v1552, %v1620
      %v1653 = vadd.f32 %v1553, %v1621
      %v1654 = vadd.f32 %v1554, %v1622
      %v1655 = vadd.f32 %v1555, %v1623
      %v1656 = vadd.f32 %v1556, %v1624
      %v1657 = vadd.f32 %v1557, %v1625
      %v1658 = vadd.f32 %v1558, %v1626
      %v1659 = vadd.f32 %v1559, %v1627
      %v1660 = vadd.f32 %v1560, %v1628
      %v1661 = vadd.f32 %v1561, %v1629
      %v1662 = vadd.f32 %v1562, %v1630
      %v1663 = vadd.f32 %v1563, %v1631
      %v1664 = vadd.f32 %v1564, %v1632
      %v1665 = vadd.f32 %v1565, %v1633
      %v1666 = vadd.f32 %v1566, %v1634
      %v1667 = vld [vmem:[#allocation2 + $0x4] sm:$0xff]
      %v1668 = vld [vmem:[#allocation2 + $0xc] sm:$0xff]
      %v1669 = vld [vmem:[#allocation2 + $0x1c] sm:$0xff]
      %v1670 = vld [vmem:[#allocation2 + $0x24] sm:$0xff]
      %v1671 = vld [vmem:[#allocation2 + $0x34] sm:$0xff]
      %v1672 = vld [vmem:[#allocation2 + $0x3c] sm:$0xff]
      %v1673 = vld [vmem:[#allocation2 + $0x4c] sm:$0xff]
      %v1674 = vld [vmem:[#allocation2 + $0x54] sm:$0xff]
      %v1675 = vld [vmem:[#allocation2 + $0x64] sm:$0xff]
      %v1676 = vld [vmem:[#allocation2 + $0x6c] sm:$0xff]
      %v1677 = vld [vmem:[#allocation2 + $0x7c] sm:$0xff]
      %v1678 = vld [vmem:[#allocation2 + $0x84] sm:$0xff]
      %v1679 = vld [vmem:[#allocation2 + $0x94] sm:$0xff]
      %v1680 = vld [vmem:[#allocation2 + $0x9c] sm:$0xff]
      %v1681 = vld [vmem:[#allocation2 + $0xac] sm:$0xff]
      %v1682 = vld [vmem:[#allocation2 + $0xb4] sm:$0xff]
      %v1683 = vld [vmem:[#allocation2 + $0xc4] sm:$0xff]
      %v1684 = vld [vmem:[#allocation2 + $0xcc] sm:$0xff]
      %v1685 = vld [vmem:[#allocation2 + $0xdc] sm:$0xff]
      %v1686 = vld [vmem:[#allocation2 + $0xe4] sm:$0xff]
      %v1687 = vld [vmem:[#allocation2 + $0xf4] sm:$0xff]
      %v1688 = vld [vmem:[#allocation2 + $0xfc] sm:$0xff]
      %v1689 = vld [vmem:[#allocation2 + $0x10c] sm:$0xff]
      %v1690 = vld [vmem:[#allocation2 + $0x114] sm:$0xff]
      %v1691 = vld [vmem:[#allocation2 + $0x124] sm:$0xff]
      %v1692 = vld [vmem:[#allocation2 + $0x12c] sm:$0xff]
      %v1693 = vld [vmem:[#allocation2 + $0x13c] sm:$0xff]
      %v1694 = vld [vmem:[#allocation2 + $0x144] sm:$0xff]
      %v1695 = vld [vmem:[#allocation2 + $0x154] sm:$0xff]
      %v1696 = vld [vmem:[#allocation2 + $0x15c] sm:$0xff]
      %v1697 = vld [vmem:[#allocation2 + $0x16c] sm:$0xff]
      %v1698 = vld [vmem:[#allocation2 + $0x174] sm:$0xff]
      %v1699 = vlaneseq
      %v1700 = vshrl.u32 %v1699, 7
      %v1701 = vsub.s32 4, %v1700
      %v1702 = vrot.slane %v1255, %v1701
      %v1703 = vmul.f32 %v1667, %v1702
      %v1704 = vmul.f32 %v1668, %v1702
      %v1705 = vmul.f32 %v1669, %v1702
      %v1706 = vmul.f32 %v1670, %v1702
      %v1707 = vmul.f32 %v1671, %v1702
      %v1708 = vmul.f32 %v1672, %v1702
      %v1709 = vmul.f32 %v1673, %v1702
      %v1710 = vmul.f32 %v1674, %v1702
      %v1711 = vmul.f32 %v1675, %v1702
      %v1712 = vmul.f32 %v1676, %v1702
      %v1713 = vmul.f32 %v1677, %v1702
      %v1714 = vmul.f32 %v1678, %v1702
      %v1715 = vmul.f32 %v1679, %v1702
      %v1716 = vmul.f32 %v1680, %v1702
      %v1717 = vmul.f32 %v1681, %v1702
      %v1718 = vmul.f32 %v1682, %v1702
      %v1719 = vmul.f32 %v1683, %v1702
      %v1720 = vmul.f32 %v1684, %v1702
      %v1721 = vmul.f32 %v1685, %v1702
      %v1722 = vmul.f32 %v1686, %v1702
      %v1723 = vmul.f32 %v1687, %v1702
      %v1724 = vmul.f32 %v1688, %v1702
      %v1725 = vmul.f32 %v1689, %v1702
      %v1726 = vmul.f32 %v1690, %v1702
      %v1727 = vmul.f32 %v1691, %v1702
      %v1728 = vmul.f32 %v1692, %v1702
      %v1729 = vmul.f32 %v1693, %v1702
      %v1730 = vmul.f32 %v1694, %v1702
      %v1731 = vmul.f32 %v1695, %v1702
      %v1732 = vmul.f32 %v1696, %v1702
      %v1733 = vmul.f32 %v1697, %v1702
      %v1734 = vmul.f32 %v1698, %v1702
      %v1735 = vadd.f32 %v1635, %v1703
      %v1736 = vadd.f32 %v1636, %v1704
      %v1737 = vadd.f32 %v1637, %v1705
      %v1738 = vadd.f32 %v1638, %v1706
      %v1739 = vadd.f32 %v1639, %v1707
      %v1740 = vadd.f32 %v1640, %v1708
      %v1741 = vadd.f32 %v1641, %v1709
      %v1742 = vadd.f32 %v1642, %v1710
      %v1743 = vadd.f32 %v1643, %v1711
      %v1744 = vadd.f32 %v1644, %v1712
      %v1745 = vadd.f32 %v1645, %v1713
      %v1746 = vadd.f32 %v1646, %v1714
      %v1747 = vadd.f32 %v1647, %v1715
      %v1748 = vadd.f32 %v1648, %v1716
      %v1749 = vadd.f32 %v1649, %v1717
      %v1750 = vadd.f32 %v1650, %v1718
      %v1751 = vadd.f32 %v1651, %v1719
      %v1752 = vadd.f32 %v1652, %v1720
      %v1753 = vadd.f32 %v1653, %v1721
      %v1754 = vadd.f32 %v1654, %v1722
      %v1755 = vadd.f32 %v1655, %v1723
      %v1756 = vadd.f32 %v1656, %v1724
      %v1757 = vadd.f32 %v1657, %v1725
      %v1758 = vadd.f32 %v1658, %v1726
      %v1759 = vadd.f32 %v1659, %v1727
      %v1760 = vadd.f32 %v1660, %v1728
      %v1761 = vadd.f32 %v1661, %v1729
      %v1762 = vadd.f32 %v1662, %v1730
      %v1763 = vadd.f32 %v1663, %v1731
      %v1764 = vadd.f32 %v1664, %v1732
      %v1765 = vadd.f32 %v1665, %v1733
      %v1766 = vadd.f32 %v1666, %v1734
      %s1767 = scalar_lea.vmem [#allocation2], 24
      %v1768 = vld [vmem:[%s1767] sm:$0xff]
      %v1769 = vld [vmem:[%s1767 + $0x8] sm:$0xff]
      %v1770 = vld [vmem:[%s1767 + $0x18] sm:$0xff]
      %v1771 = vld [vmem:[%s1767 + $0x20] sm:$0xff]
      %v1772 = vld [vmem:[%s1767 + $0x30] sm:$0xff]
      %v1773 = vld [vmem:[%s1767 + $0x38] sm:$0xff]
      %v1774 = vld [vmem:[%s1767 + $0x48] sm:$0xff]
      %v1775 = vld [vmem:[%s1767 + $0x50] sm:$0xff]
      %v1776 = vld [vmem:[%s1767 + $0x60] sm:$0xff]
      %v1777 = vld [vmem:[%s1767 + $0x68] sm:$0xff]
      %v1778 = vld [vmem:[%s1767 + $0x78] sm:$0xff]
      %v1779 = vld [vmem:[%s1767 + $0x80] sm:$0xff]
      %v1780 = vld [vmem:[%s1767 + $0x90] sm:$0xff]
      %v1781 = vld [vmem:[%s1767 + $0x98] sm:$0xff]
      %v1782 = vld [vmem:[%s1767 + $0xa8] sm:$0xff]
      %v1783 = vld [vmem:[%s1767 + $0xb0] sm:$0xff]
      %v1784 = vld [vmem:[%s1767 + $0xc0] sm:$0xff]
      %v1785 = vld [vmem:[%s1767 + $0xc8] sm:$0xff]
      %v1786 = vld [vmem:[%s1767 + $0xd8] sm:$0xff]
      %v1787 = vld [vmem:[%s1767 + $0xe0] sm:$0xff]
      %v1788 = vld [vmem:[%s1767 + $0xf0] sm:$0xff]
      %v1789 = vld [vmem:[%s1767 + $0xf8] sm:$0xff]
      %v1790 = vld [vmem:[%s1767 + $0x108] sm:$0xff]
      %v1791 = vld [vmem:[%s1767 + $0x110] sm:$0xff]
      %v1792 = vld [vmem:[%s1767 + $0x120] sm:$0xff]
      %v1793 = vld [vmem:[%s1767 + $0x128] sm:$0xff]
      %v1794 = vld [vmem:[%s1767 + $0x138] sm:$0xff]
      %v1795 = vld [vmem:[%s1767 + $0x140] sm:$0xff]
      %v1796 = vld [vmem:[%s1767 + $0x150] sm:$0xff]
      %v1797 = vld [vmem:[%s1767 + $0x158] sm:$0xff]
      %v1798 = vld [vmem:[%s1767 + $0x168] sm:$0xff]
      %v1799 = vld [vmem:[%s1767 + $0x170] sm:$0xff]
      %v1800 = vlaneseq
      %v1801 = vshrl.u32 %v1800, 7
      %v1802 = vsub.s32 0, %v1801
      %v1803 = vrot.slane %v1256, %v1802
      %v1804 = vmul.f32 %v1768, %v1803
      %v1805 = vmul.f32 %v1769, %v1803
      %v1806 = vmul.f32 %v1770, %v1803
      %v1807 = vmul.f32 %v1771, %v1803
      %v1808 = vmul.f32 %v1772, %v1803
      %v1809 = vmul.f32 %v1773, %v1803
      %v1810 = vmul.f32 %v1774, %v1803
      %v1811 = vmul.f32 %v1775, %v1803
      %v1812 = vmul.f32 %v1776, %v1803
      %v1813 = vmul.f32 %v1777, %v1803
      %v1814 = vmul.f32 %v1778, %v1803
      %v1815 = vmul.f32 %v1779, %v1803
      %v1816 = vmul.f32 %v1780, %v1803
      %v1817 = vmul.f32 %v1781, %v1803
      %v1818 = vmul.f32 %v1782, %v1803
      %v1819 = vmul.f32 %v1783, %v1803
      %v1820 = vmul.f32 %v1784, %v1803
      %v1821 = vmul.f32 %v1785, %v1803
      %v1822 = vmul.f32 %v1786, %v1803
      %v1823 = vmul.f32 %v1787, %v1803
      %v1824 = vmul.f32 %v1788, %v1803
      %v1825 = vmul.f32 %v1789, %v1803
      %v1826 = vmul.f32 %v1790, %v1803
      %v1827 = vmul.f32 %v1791, %v1803
      %v1828 = vmul.f32 %v1792, %v1803
      %v1829 = vmul.f32 %v1793, %v1803
      %v1830 = vmul.f32 %v1794, %v1803
      %v1831 = vmul.f32 %v1795, %v1803
      %v1832 = vmul.f32 %v1796, %v1803
      %v1833 = vmul.f32 %v1797, %v1803
      %v1834 = vmul.f32 %v1798, %v1803
      %v1835 = vmul.f32 %v1799, %v1803
      %v1836 = vadd.f32 %v1735, %v1804
      %v1837 = vadd.f32 %v1736, %v1805
      %v1838 = vadd.f32 %v1737, %v1806
      %v1839 = vadd.f32 %v1738, %v1807
      %v1840 = vadd.f32 %v1739, %v1808
      %v1841 = vadd.f32 %v1740, %v1809
      %v1842 = vadd.f32 %v1741, %v1810
      %v1843 = vadd.f32 %v1742, %v1811
      %v1844 = vadd.f32 %v1743, %v1812
      %v1845 = vadd.f32 %v1744, %v1813
      %v1846 = vadd.f32 %v1745, %v1814
      %v1847 = vadd.f32 %v1746, %v1815
      %v1848 = vadd.f32 %v1747, %v1816
      %v1849 = vadd.f32 %v1748, %v1817
      %v1850 = vadd.f32 %v1749, %v1818
      %v1851 = vadd.f32 %v1750, %v1819
      %v1852 = vadd.f32 %v1751, %v1820
      %v1853 = vadd.f32 %v1752, %v1821
      %v1854 = vadd.f32 %v1753, %v1822
      %v1855 = vadd.f32 %v1754, %v1823
      %v1856 = vadd.f32 %v1755, %v1824
      %v1857 = vadd.f32 %v1756, %v1825
      %v1858 = vadd.f32 %v1757, %v1826
      %v1859 = vadd.f32 %v1758, %v1827
      %v1860 = vadd.f32 %v1759, %v1828
      %v1861 = vadd.f32 %v1760, %v1829
      %v1862 = vadd.f32 %v1761, %v1830
      %v1863 = vadd.f32 %v1762, %v1831
      %v1864 = vadd.f32 %v1763, %v1832
      %v1865 = vadd.f32 %v1764, %v1833
      %v1866 = vadd.f32 %v1765, %v1834
      %v1867 = vadd.f32 %v1766, %v1835
      %v1868 = vld [vmem:[%s1767 + $0x1] sm:$0xff]
      %v1869 = vld [vmem:[%s1767 + $0x9] sm:$0xff]
      %v1870 = vld [vmem:[%s1767 + $0x19] sm:$0xff]
      %v1871 = vld [vmem:[%s1767 + $0x21] sm:$0xff]
      %v1872 = vld [vmem:[%s1767 + $0x31] sm:$0xff]
      %v1873 = vld [vmem:[%s1767 + $0x39] sm:$0xff]
      %v1874 = vld [vmem:[%s1767 + $0x49] sm:$0xff]
      %v1875 = vld [vmem:[%s1767 + $0x51] sm:$0xff]
      %v1876 = vld [vmem:[%s1767 + $0x61] sm:$0xff]
      %v1877 = vld [vmem:[%s1767 + $0x69] sm:$0xff]
      %v1878 = vld [vmem:[%s1767 + $0x79] sm:$0xff]
      %v1879 = vld [vmem:[%s1767 + $0x81] sm:$0xff]
      %v1880 = vld [vmem:[%s1767 + $0x91] sm:$0xff]
      %v1881 = vld [vmem:[%s1767 + $0x99] sm:$0xff]
      %v1882 = vld [vmem:[%s1767 + $0xa9] sm:$0xff]
      %v1883 = vld [vmem:[%s1767 + $0xb1] sm:$0xff]
      %v1884 = vld [vmem:[%s1767 + $0xc1] sm:$0xff]
      %v1885 = vld [vmem:[%s1767 + $0xc9] sm:$0xff]
      %v1886 = vld [vmem:[%s1767 + $0xd9] sm:$0xff]
      %v1887 = vld [vmem:[%s1767 + $0xe1] sm:$0xff]
      %v1888 = vld [vmem:[%s1767 + $0xf1] sm:$0xff]
      %v1889 = vld [vmem:[%s1767 + $0xf9] sm:$0xff]
      %v1890 = vld [vmem:[%s1767 + $0x109] sm:$0xff]
      %v1891 = vld [vmem:[%s1767 + $0x111] sm:$0xff]
      %v1892 = vld [vmem:[%s1767 + $0x121] sm:$0xff]
      %v1893 = vld [vmem:[%s1767 + $0x129] sm:$0xff]
      %v1894 = vld [vmem:[%s1767 + $0x139] sm:$0xff]
      %v1895 = vld [vmem:[%s1767 + $0x141] sm:$0xff]
      %v1896 = vld [vmem:[%s1767 + $0x151] sm:$0xff]
      %v1897 = vld [vmem:[%s1767 + $0x159] sm:$0xff]
      %v1898 = vld [vmem:[%s1767 + $0x169] sm:$0xff]
      %v1899 = vld [vmem:[%s1767 + $0x171] sm:$0xff]
      %v1900 = vlaneseq
      %v1901 = vshrl.u32 %v1900, 7
      %v1902 = vsub.s32 1, %v1901
      %v1903 = vrot.slane %v1256, %v1902
      %v1904 = vmul.f32 %v1868, %v1903
      %v1905 = vmul.f32 %v1869, %v1903
      %v1906 = vmul.f32 %v1870, %v1903
      %v1907 = vmul.f32 %v1871, %v1903
      %v1908 = vmul.f32 %v1872, %v1903
      %v1909 = vmul.f32 %v1873, %v1903
      %v1910 = vmul.f32 %v1874, %v1903
      %v1911 = vmul.f32 %v1875, %v1903
      %v1912 = vmul.f32 %v1876, %v1903
      %v1913 = vmul.f32 %v1877, %v1903
      %v1914 = vmul.f32 %v1878, %v1903
      %v1915 = vmul.f32 %v1879, %v1903
      %v1916 = vmul.f32 %v1880, %v1903
      %v1917 = vmul.f32 %v1881, %v1903
      %v1918 = vmul.f32 %v1882, %v1903
      %v1919 = vmul.f32 %v1883, %v1903
      %v1920 = vmul.f32 %v1884, %v1903
      %v1921 = vmul.f32 %v1885, %v1903
      %v1922 = vmul.f32 %v1886, %v1903
      %v1923 = vmul.f32 %v1887, %v1903
      %v1924 = vmul.f32 %v1888, %v1903
      %v1925 = vmul.f32 %v1889, %v1903
      %v1926 = vmul.f32 %v1890, %v1903
      %v1927 = vmul.f32 %v1891, %v1903
      %v1928 = vmul.f32 %v1892, %v1903
      %v1929 = vmul.f32 %v1893, %v1903
      %v1930 = vmul.f32 %v1894, %v1903
      %v1931 = vmul.f32 %v1895, %v1903
      %v1932 = vmul.f32 %v1896, %v1903
      %v1933 = vmul.f32 %v1897, %v1903
      %v1934 = vmul.f32 %v1898, %v1903
      %v1935 = vmul.f32 %v1899, %v1903
      %v1936 = vadd.f32 %v1836, %v1904
      %v1937 = vadd.f32 %v1837, %v1905
      %v1938 = vadd.f32 %v1838, %v1906
      %v1939 = vadd.f32 %v1839, %v1907
      %v1940 = vadd.f32 %v1840, %v1908
      %v1941 = vadd.f32 %v1841, %v1909
      %v1942 = vadd.f32 %v1842, %v1910
      %v1943 = vadd.f32 %v1843, %v1911
      %v1944 = vadd.f32 %v1844, %v1912
      %v1945 = vadd.f32 %v1845, %v1913
      %v1946 = vadd.f32 %v1846, %v1914
      %v1947 = vadd.f32 %v1847, %v1915
      %v1948 = vadd.f32 %v1848, %v1916
      %v1949 = vadd.f32 %v1849, %v1917
      %v1950 = vadd.f32 %v1850, %v1918
      %v1951 = vadd.f32 %v1851, %v1919
      %v1952 = vadd.f32 %v1852, %v1920
      %v1953 = vadd.f32 %v1853, %v1921
      %v1954 = vadd.f32 %v1854, %v1922
      %v1955 = vadd.f32 %v1855, %v1923
      %v1956 = vadd.f32 %v1856, %v1924
      %v1957 = vadd.f32 %v1857, %v1925
      %v1958 = vadd.f32 %v1858, %v1926
      %v1959 = vadd.f32 %v1859, %v1927
      %v1960 = vadd.f32 %v1860, %v1928
      %v1961 = vadd.f32 %v1861, %v1929
      %v1962 = vadd.f32 %v1862, %v1930
      %v1963 = vadd.f32 %v1863, %v1931
      %v1964 = vadd.f32 %v1864, %v1932
      %v1965 = vadd.f32 %v1865, %v1933
      %v1966 = vadd.f32 %v1866, %v1934
      %v1967 = vadd.f32 %v1867, %v1935
      %v1968 = vld [vmem:[%s1767 + $0x2] sm:$0xff]
      %v1969 = vld [vmem:[%s1767 + $0xa] sm:$0xff]
      %v1970 = vld [vmem:[%s1767 + $0x1a] sm:$0xff]
      %v1971 = vld [vmem:[%s1767 + $0x22] sm:$0xff]
      %v1972 = vld [vmem:[%s1767 + $0x32] sm:$0xff]
      %v1973 = vld [vmem:[%s1767 + $0x3a] sm:$0xff]
      %v1974 = vld [vmem:[%s1767 + $0x4a] sm:$0xff]
      %v1975 = vld [vmem:[%s1767 + $0x52] sm:$0xff]
      %v1976 = vld [vmem:[%s1767 + $0x62] sm:$0xff]
      %v1977 = vld [vmem:[%s1767 + $0x6a] sm:$0xff]
      %v1978 = vld [vmem:[%s1767 + $0x7a] sm:$0xff]
      %v1979 = vld [vmem:[%s1767 + $0x82] sm:$0xff]
      %v1980 = vld [vmem:[%s1767 + $0x92] sm:$0xff]
      %v1981 = vld [vmem:[%s1767 + $0x9a] sm:$0xff]
      %v1982 = vld [vmem:[%s1767 + $0xaa] sm:$0xff]
      %v1983 = vld [vmem:[%s1767 + $0xb2] sm:$0xff]
      %v1984 = vld [vmem:[%s1767 + $0xc2] sm:$0xff]
      %v1985 = vld [vmem:[%s1767 + $0xca] sm:$0xff]
      %v1986 = vld [vmem:[%s1767 + $0xda] sm:$0xff]
      %v1987 = vld [vmem:[%s1767 + $0xe2] sm:$0xff]
      %v1988 = vld [vmem:[%s1767 + $0xf2] sm:$0xff]
      %v1989 = vld [vmem:[%s1767 + $0xfa] sm:$0xff]
      %v1990 = vld [vmem:[%s1767 + $0x10a] sm:$0xff]
      %v1991 = vld [vmem:[%s1767 + $0x112] sm:$0xff]
      %v1992 = vld [vmem:[%s1767 + $0x122] sm:$0xff]
      %v1993 = vld [vmem:[%s1767 + $0x12a] sm:$0xff]
      %v1994 = vld [vmem:[%s1767 + $0x13a] sm:$0xff]
      %v1995 = vld [vmem:[%s1767 + $0x142] sm:$0xff]
      %v1996 = vld [vmem:[%s1767 + $0x152] sm:$0xff]
      %v1997 = vld [vmem:[%s1767 + $0x15a] sm:$0xff]
      %v1998 = vld [vmem:[%s1767 + $0x16a] sm:$0xff]
      %v1999 = vld [vmem:[%s1767 + $0x172] sm:$0xff]
      %v2000 = vlaneseq
      %v2001 = vshrl.u32 %v2000, 7
      %v2002 = vsub.s32 2, %v2001
      %v2003 = vrot.slane %v1256, %v2002
      %v2004 = vmul.f32 %v1968, %v2003
      %v2005 = vmul.f32 %v1969, %v2003
      %v2006 = vmul.f32 %v1970, %v2003
      %v2007 = vmul.f32 %v1971, %v2003
      %v2008 = vmul.f32 %v1972, %v2003
      %v2009 = vmul.f32 %v1973, %v2003
      %v2010 = vmul.f32 %v1974, %v2003
      %v2011 = vmul.f32 %v1975, %v2003
      %v2012 = vmul.f32 %v1976, %v2003
      %v2013 = vmul.f32 %v1977, %v2003
      %v2014 = vmul.f32 %v1978, %v2003
      %v2015 = vmul.f32 %v1979, %v2003
      %v2016 = vmul.f32 %v1980, %v2003
      %v2017 = vmul.f32 %v1981, %v2003
      %v2018 = vmul.f32 %v1982, %v2003
      %v2019 = vmul.f32 %v1983, %v2003
      %v2020 = vmul.f32 %v1984, %v2003
      %v2021 = vmul.f32 %v1985, %v2003
      %v2022 = vmul.f32 %v1986, %v2003
      %v2023 = vmul.f32 %v1987, %v2003
      %v2024 = vmul.f32 %v1988, %v2003
      %v2025 = vmul.f32 %v1989, %v2003
      %v2026 = vmul.f32 %v1990, %v2003
      %v2027 = vmul.f32 %v1991, %v2003
      %v2028 = vmul.f32 %v1992, %v2003
      %v2029 = vmul.f32 %v1993, %v2003
      %v2030 = vmul.f32 %v1994, %v2003
      %v2031 = vmul.f32 %v1995, %v2003
      %v2032 = vmul.f32 %v1996, %v2003
      %v2033 = vmul.f32 %v1997, %v2003
      %v2034 = vmul.f32 %v1998, %v2003
      %v2035 = vmul.f32 %v1999, %v2003
      %v2036 = vadd.f32 %v1936, %v2004
      %v2037 = vadd.f32 %v1937, %v2005
      %v2038 = vadd.f32 %v1938, %v2006
      %v2039 = vadd.f32 %v1939, %v2007
      %v2040 = vadd.f32 %v1940, %v2008
      %v2041 = vadd.f32 %v1941, %v2009
      %v2042 = vadd.f32 %v1942, %v2010
      %v2043 = vadd.f32 %v1943, %v2011
      %v2044 = vadd.f32 %v1944, %v2012
      %v2045 = vadd.f32 %v1945, %v2013
      %v2046 = vadd.f32 %v1946, %v2014
      %v2047 = vadd.f32 %v1947, %v2015
      %v2048 = vadd.f32 %v1948, %v2016
      %v2049 = vadd.f32 %v1949, %v2017
      %v2050 = vadd.f32 %v1950, %v2018
      %v2051 = vadd.f32 %v1951, %v2019
      %v2052 = vadd.f32 %v1952, %v2020
      %v2053 = vadd.f32 %v1953, %v2021
      %v2054 = vadd.f32 %v1954, %v2022
      %v2055 = vadd.f32 %v1955, %v2023
      %v2056 = vadd.f32 %v1956, %v2024
      %v2057 = vadd.f32 %v1957, %v2025
      %v2058 = vadd.f32 %v1958, %v2026
      %v2059 = vadd.f32 %v1959, %v2027
      %v2060 = vadd.f32 %v1960, %v2028
      %v2061 = vadd.f32 %v1961, %v2029
      %v2062 = vadd.f32 %v1962, %v2030
      %v2063 = vadd.f32 %v1963, %v2031
      %v2064 = vadd.f32 %v1964, %v2032
      %v2065 = vadd.f32 %v1965, %v2033
      %v2066 = vadd.f32 %v1966, %v2034
      %v2067 = vadd.f32 %v1967, %v2035
      %v2068 = vld [vmem:[%s1767 + $0x3] sm:$0xff]
      %v2069 = vld [vmem:[%s1767 + $0xb] sm:$0xff]
      %v2070 = vld [vmem:[%s1767 + $0x1b] sm:$0xff]
      %v2071 = vld [vmem:[%s1767 + $0x23] sm:$0xff]
      %v2072 = vld [vmem:[%s1767 + $0x33] sm:$0xff]
      %v2073 = vld [vmem:[%s1767 + $0x3b] sm:$0xff]
      %v2074 = vld [vmem:[%s1767 + $0x4b] sm:$0xff]
      %v2075 = vld [vmem:[%s1767 + $0x53] sm:$0xff]
      %v2076 = vld [vmem:[%s1767 + $0x63] sm:$0xff]
      %v2077 = vld [vmem:[%s1767 + $0x6b] sm:$0xff]
      %v2078 = vld [vmem:[%s1767 + $0x7b] sm:$0xff]
      %v2079 = vld [vmem:[%s1767 + $0x83] sm:$0xff]
      %v2080 = vld [vmem:[%s1767 + $0x93] sm:$0xff]
      %v2081 = vld [vmem:[%s1767 + $0x9b] sm:$0xff]
      %v2082 = vld [vmem:[%s1767 + $0xab] sm:$0xff]
      %v2083 = vld [vmem:[%s1767 + $0xb3] sm:$0xff]
      %v2084 = vld [vmem:[%s1767 + $0xc3] sm:$0xff]
      %v2085 = vld [vmem:[%s1767 + $0xcb] sm:$0xff]
      %v2086 = vld [vmem:[%s1767 + $0xdb] sm:$0xff]
      %v2087 = vld [vmem:[%s1767 + $0xe3] sm:$0xff]
      %v2088 = vld [vmem:[%s1767 + $0xf3] sm:$0xff]
      %v2089 = vld [vmem:[%s1767 + $0xfb] sm:$0xff]
      %v2090 = vld [vmem:[%s1767 + $0x10b] sm:$0xff]
      %v2091 = vld [vmem:[%s1767 + $0x113] sm:$0xff]
      %v2092 = vld [vmem:[%s1767 + $0x123] sm:$0xff]
      %v2093 = vld [vmem:[%s1767 + $0x12b] sm:$0xff]
      %v2094 = vld [vmem:[%s1767 + $0x13b] sm:$0xff]
      %v2095 = vld [vmem:[%s1767 + $0x143] sm:$0xff]
      %v2096 = vld [vmem:[%s1767 + $0x153] sm:$0xff]
      %v2097 = vld [vmem:[%s1767 + $0x15b] sm:$0xff]
      %v2098 = vld [vmem:[%s1767 + $0x16b] sm:$0xff]
      %v2099 = vld [vmem:[%s1767 + $0x173] sm:$0xff]
      %v2100 = vlaneseq
      %v2101 = vshrl.u32 %v2100, 7
      %v2102 = vsub.s32 3, %v2101
      %v2103 = vrot.slane %v1256, %v2102
      %v2104 = vmul.f32 %v2068, %v2103
      %v2105 = vmul.f32 %v2069, %v2103
      %v2106 = vmul.f32 %v2070, %v2103
      %v2107 = vmul.f32 %v2071, %v2103
      %v2108 = vmul.f32 %v2072, %v2103
      %v2109 = vmul.f32 %v2073, %v2103
      %v2110 = vmul.f32 %v2074, %v2103
      %v2111 = vmul.f32 %v2075, %v2103
      %v2112 = vmul.f32 %v2076, %v2103
      %v2113 = vmul.f32 %v2077, %v2103
      %v2114 = vmul.f32 %v2078, %v2103
      %v2115 = vmul.f32 %v2079, %v2103
      %v2116 = vmul.f32 %v2080, %v2103
      %v2117 = vmul.f32 %v2081, %v2103
      %v2118 = vmul.f32 %v2082, %v2103
      %v2119 = vmul.f32 %v2083, %v2103
      %v2120 = vmul.f32 %v2084, %v2103
      %v2121 = vmul.f32 %v2085, %v2103
      %v2122 = vmul.f32 %v2086, %v2103
      %v2123 = vmul.f32 %v2087, %v2103
      %v2124 = vmul.f32 %v2088, %v2103
      %v2125 = vmul.f32 %v2089, %v2103
      %v2126 = vmul.f32 %v2090, %v2103
      %v2127 = vmul.f32 %v2091, %v2103
      %v2128 = vmul.f32 %v2092, %v2103
      %v2129 = vmul.f32 %v2093, %v2103
      %v2130 = vmul.f32 %v2094, %v2103
      %v2131 = vmul.f32 %v2095, %v2103
      %v2132 = vmul.f32 %v2096, %v2103
      %v2133 = vmul.f32 %v2097, %v2103
      %v2134 = vmul.f32 %v2098, %v2103
      %v2135 = vmul.f32 %v2099, %v2103
      %v2136 = vadd.f32 %v2036, %v2104
      %v2137 = vadd.f32 %v2037, %v2105
      %v2138 = vadd.f32 %v2038, %v2106
      %v2139 = vadd.f32 %v2039, %v2107
      %v2140 = vadd.f32 %v2040, %v2108
      %v2141 = vadd.f32 %v2041, %v2109
      %v2142 = vadd.f32 %v2042, %v2110
      %v2143 = vadd.f32 %v2043, %v2111
      %v2144 = vadd.f32 %v2044, %v2112
      %v2145 = vadd.f32 %v2045, %v2113
      %v2146 = vadd.f32 %v2046, %v2114
      %v2147 = vadd.f32 %v2047, %v2115
      %v2148 = vadd.f32 %v2048, %v2116
      %v2149 = vadd.f32 %v2049, %v2117
      %v2150 = vadd.f32 %v2050, %v2118
      %v2151 = vadd.f32 %v2051, %v2119
      %v2152 = vadd.f32 %v2052, %v2120
      %v2153 = vadd.f32 %v2053, %v2121
      %v2154 = vadd.f32 %v2054, %v2122
      %v2155 = vadd.f32 %v2055, %v2123
      %v2156 = vadd.f32 %v2056, %v2124
      %v2157 = vadd.f32 %v2057, %v2125
      %v2158 = vadd.f32 %v2058, %v2126
      %v2159 = vadd.f32 %v2059, %v2127
      %v2160 = vadd.f32 %v2060, %v2128
      %v2161 = vadd.f32 %v2061, %v2129
      %v2162 = vadd.f32 %v2062, %v2130
      %v2163 = vadd.f32 %v2063, %v2131
      %v2164 = vadd.f32 %v2064, %v2132
      %v2165 = vadd.f32 %v2065, %v2133
      %v2166 = vadd.f32 %v2066, %v2134
      %v2167 = vadd.f32 %v2067, %v2135
      %v2168 = vld [vmem:[%s1767 + $0x4] sm:$0xff]
      %v2169 = vld [vmem:[%s1767 + $0xc] sm:$0xff]
      %v2170 = vld [vmem:[%s1767 + $0x1c] sm:$0xff]
      %v2171 = vld [vmem:[%s1767 + $0x24] sm:$0xff]
      %v2172 = vld [vmem:[%s1767 + $0x34] sm:$0xff]
      %v2173 = vld [vmem:[%s1767 + $0x3c] sm:$0xff]
      %v2174 = vld [vmem:[%s1767 + $0x4c] sm:$0xff]
      %v2175 = vld [vmem:[%s1767 + $0x54] sm:$0xff]
      %v2176 = vld [vmem:[%s1767 + $0x64] sm:$0xff]
      %v2177 = vld [vmem:[%s1767 + $0x6c] sm:$0xff]
      %v2178 = vld [vmem:[%s1767 + $0x7c] sm:$0xff]
      %v2179 = vld [vmem:[%s1767 + $0x84] sm:$0xff]
      %v2180 = vld [vmem:[%s1767 + $0x94] sm:$0xff]
      %v2181 = vld [vmem:[%s1767 + $0x9c] sm:$0xff]
      %v2182 = vld [vmem:[%s1767 + $0xac] sm:$0xff]
      %v2183 = vld [vmem:[%s1767 + $0xb4] sm:$0xff]
      %v2184 = vld [vmem:[%s1767 + $0xc4] sm:$0xff]
      %v2185 = vld [vmem:[%s1767 + $0xcc] sm:$0xff]
      %v2186 = vld [vmem:[%s1767 + $0xdc] sm:$0xff]
      %v2187 = vld [vmem:[%s1767 + $0xe4] sm:$0xff]
      %v2188 = vld [vmem:[%s1767 + $0xf4] sm:$0xff]
      %v2189 = vld [vmem:[%s1767 + $0xfc] sm:$0xff]
      %v2190 = vld [vmem:[%s1767 + $0x10c] sm:$0xff]
      %v2191 = vld [vmem:[%s1767 + $0x114] sm:$0xff]
      %v2192 = vld [vmem:[%s1767 + $0x124] sm:$0xff]
      %v2193 = vld [vmem:[%s1767 + $0x12c] sm:$0xff]
      %v2194 = vld [vmem:[%s1767 + $0x13c] sm:$0xff]
      %v2195 = vld [vmem:[%s1767 + $0x144] sm:$0xff]
      %v2196 = vld [vmem:[%s1767 + $0x154] sm:$0xff]
      %v2197 = vld [vmem:[%s1767 + $0x15c] sm:$0xff]
      %v2198 = vld [vmem:[%s1767 + $0x16c] sm:$0xff]
      %v2199 = vld [vmem:[%s1767 + $0x174] sm:$0xff]
      %v2200 = vlaneseq
      %v2201 = vshrl.u32 %v2200, 7
      %v2202 = vsub.s32 4, %v2201
      %v2203 = vrot.slane %v1256, %v2202
      %v2204 = vmul.f32 %v2168, %v2203
      %v2205 = vmul.f32 %v2169, %v2203
      %v2206 = vmul.f32 %v2170, %v2203
      %v2207 = vmul.f32 %v2171, %v2203
      %v2208 = vmul.f32 %v2172, %v2203
      %v2209 = vmul.f32 %v2173, %v2203
      %v2210 = vmul.f32 %v2174, %v2203
      %v2211 = vmul.f32 %v2175, %v2203
      %v2212 = vmul.f32 %v2176, %v2203
      %v2213 = vmul.f32 %v2177, %v2203
      %v2214 = vmul.f32 %v2178, %v2203
      %v2215 = vmul.f32 %v2179, %v2203
      %v2216 = vmul.f32 %v2180, %v2203
      %v2217 = vmul.f32 %v2181, %v2203
      %v2218 = vmul.f32 %v2182, %v2203
      %v2219 = vmul.f32 %v2183, %v2203
      %v2220 = vmul.f32 %v2184, %v2203
      %v2221 = vmul.f32 %v2185, %v2203
      %v2222 = vmul.f32 %v2186, %v2203
      %v2223 = vmul.f32 %v2187, %v2203
      %v2224 = vmul.f32 %v2188, %v2203
      %v2225 = vmul.f32 %v2189, %v2203
      %v2226 = vmul.f32 %v2190, %v2203
      %v2227 = vmul.f32 %v2191, %v2203
      %v2228 = vmul.f32 %v2192, %v2203
      %v2229 = vmul.f32 %v2193, %v2203
      %v2230 = vmul.f32 %v2194, %v2203
      %v2231 = vmul.f32 %v2195, %v2203
      %v2232 = vmul.f32 %v2196, %v2203
      %v2233 = vmul.f32 %v2197, %v2203
      %v2234 = vmul.f32 %v2198, %v2203
      %v2235 = vmul.f32 %v2199, %v2203
      %v2236 = vadd.f32 %v2136, %v2204
      %v2237 = vadd.f32 %v2137, %v2205
      %v2238 = vadd.f32 %v2138, %v2206
      %v2239 = vadd.f32 %v2139, %v2207
      %v2240 = vadd.f32 %v2140, %v2208
      %v2241 = vadd.f32 %v2141, %v2209
      %v2242 = vadd.f32 %v2142, %v2210
      %v2243 = vadd.f32 %v2143, %v2211
      %v2244 = vadd.f32 %v2144, %v2212
      %v2245 = vadd.f32 %v2145, %v2213
      %v2246 = vadd.f32 %v2146, %v2214
      %v2247 = vadd.f32 %v2147, %v2215
      %v2248 = vadd.f32 %v2148, %v2216
      %v2249 = vadd.f32 %v2149, %v2217
      %v2250 = vadd.f32 %v2150, %v2218
      %v2251 = vadd.f32 %v2151, %v2219
      %v2252 = vadd.f32 %v2152, %v2220
      %v2253 = vadd.f32 %v2153, %v2221
      %v2254 = vadd.f32 %v2154, %v2222
      %v2255 = vadd.f32 %v2155, %v2223
      %v2256 = vadd.f32 %v2156, %v2224
      %v2257 = vadd.f32 %v2157, %v2225
      %v2258 = vadd.f32 %v2158, %v2226
      %v2259 = vadd.f32 %v2159, %v2227
      %v2260 = vadd.f32 %v2160, %v2228
      %v2261 = vadd.f32 %v2161, %v2229
      %v2262 = vadd.f32 %v2162, %v2230
      %v2263 = vadd.f32 %v2163, %v2231
      %v2264 = vadd.f32 %v2164, %v2232
      %v2265 = vadd.f32 %v2165, %v2233
      %v2266 = vadd.f32 %v2166, %v2234
      %v2267 = vadd.f32 %v2167, %v2235
      %v2268 = vld [vmem:[%s979] sm:$0xff]
      %v2269 = vld [vmem:[%s979 + $0x8] sm:$0xff]
      %v2270 = vld [vmem:[%s979 + $0x18] sm:$0xff]
      %v2271 = vld [vmem:[%s979 + $0x20] sm:$0xff]
      %v2272 = vld [vmem:[%s979 + $0x30] sm:$0xff]
      %v2273 = vld [vmem:[%s979 + $0x38] sm:$0xff]
      %v2274 = vld [vmem:[%s979 + $0x48] sm:$0xff]
      %v2275 = vld [vmem:[%s979 + $0x50] sm:$0xff]
      %v2276 = vld [vmem:[%s979 + $0x60] sm:$0xff]
      %v2277 = vld [vmem:[%s979 + $0x68] sm:$0xff]
      %v2278 = vld [vmem:[%s979 + $0x78] sm:$0xff]
      %v2279 = vld [vmem:[%s979 + $0x80] sm:$0xff]
      %v2280 = vld [vmem:[%s979 + $0x90] sm:$0xff]
      %v2281 = vld [vmem:[%s979 + $0x98] sm:$0xff]
      %v2282 = vld [vmem:[%s979 + $0xa8] sm:$0xff]
      %v2283 = vld [vmem:[%s979 + $0xb0] sm:$0xff]
      %v2284 = vld [vmem:[%s979 + $0xc0] sm:$0xff]
      %v2285 = vld [vmem:[%s979 + $0xc8] sm:$0xff]
      %v2286 = vld [vmem:[%s979 + $0xd8] sm:$0xff]
      %v2287 = vld [vmem:[%s979 + $0xe0] sm:$0xff]
      %v2288 = vld [vmem:[%s979 + $0xf0] sm:$0xff]
      %v2289 = vld [vmem:[%s979 + $0xf8] sm:$0xff]
      %v2290 = vld [vmem:[%s979 + $0x108] sm:$0xff]
      %v2291 = vld [vmem:[%s979 + $0x110] sm:$0xff]
      %v2292 = vld [vmem:[%s979 + $0x120] sm:$0xff]
      %v2293 = vld [vmem:[%s979 + $0x128] sm:$0xff]
      %v2294 = vld [vmem:[%s979 + $0x138] sm:$0xff]
      %v2295 = vld [vmem:[%s979 + $0x140] sm:$0xff]
      %v2296 = vld [vmem:[%s979 + $0x150] sm:$0xff]
      %v2297 = vld [vmem:[%s979 + $0x158] sm:$0xff]
      %v2298 = vld [vmem:[%s979 + $0x168] sm:$0xff]
      %v2299 = vld [vmem:[%s979 + $0x170] sm:$0xff]
      %v2300 = vlaneseq
      %v2301 = vshrl.u32 %v2300, 7
      %v2302 = vsub.s32 0, %v2301
      %v2303 = vrot.slane %v1257, %v2302
      %v2304 = vmul.f32 %v2268, %v2303
      %v2305 = vmul.f32 %v2269, %v2303
      %v2306 = vmul.f32 %v2270, %v2303
      %v2307 = vmul.f32 %v2271, %v2303
      %v2308 = vmul.f32 %v2272, %v2303
      %v2309 = vmul.f32 %v2273, %v2303
      %v2310 = vmul.f32 %v2274, %v2303
      %v2311 = vmul.f32 %v2275, %v2303
      %v2312 = vmul.f32 %v2276, %v2303
      %v2313 = vmul.f32 %v2277, %v2303
      %v2314 = vmul.f32 %v2278, %v2303
      %v2315 = vmul.f32 %v2279, %v2303
      %v2316 = vmul.f32 %v2280, %v2303
      %v2317 = vmul.f32 %v2281, %v2303
      %v2318 = vmul.f32 %v2282, %v2303
      %v2319 = vmul.f32 %v2283, %v2303
      %v2320 = vmul.f32 %v2284, %v2303
      %v2321 = vmul.f32 %v2285, %v2303
      %v2322 = vmul.f32 %v2286, %v2303
      %v2323 = vmul.f32 %v2287, %v2303
      %v2324 = vmul.f32 %v2288, %v2303
      %v2325 = vmul.f32 %v2289, %v2303
      %v2326 = vmul.f32 %v2290, %v2303
      %v2327 = vmul.f32 %v2291, %v2303
      %v2328 = vmul.f32 %v2292, %v2303
      %v2329 = vmul.f32 %v2293, %v2303
      %v2330 = vmul.f32 %v2294, %v2303
      %v2331 = vmul.f32 %v2295, %v2303
      %v2332 = vmul.f32 %v2296, %v2303
      %v2333 = vmul.f32 %v2297, %v2303
      %v2334 = vmul.f32 %v2298, %v2303
      %v2335 = vmul.f32 %v2299, %v2303
      %v2336 = vadd.f32 %v2236, %v2304
      %v2337 = vadd.f32 %v2237, %v2305
      %v2338 = vadd.f32 %v2238, %v2306
      %v2339 = vadd.f32 %v2239, %v2307
      %v2340 = vadd.f32 %v2240, %v2308
      %v2341 = vadd.f32 %v2241, %v2309
      %v2342 = vadd.f32 %v2242, %v2310
      %v2343 = vadd.f32 %v2243, %v2311
      %v2344 = vadd.f32 %v2244, %v2312
      %v2345 = vadd.f32 %v2245, %v2313
      %v2346 = vadd.f32 %v2246, %v2314
      %v2347 = vadd.f32 %v2247, %v2315
      %v2348 = vadd.f32 %v2248, %v2316
      %v2349 = vadd.f32 %v2249, %v2317
      %v2350 = vadd.f32 %v2250, %v2318
      %v2351 = vadd.f32 %v2251, %v2319
      %v2352 = vadd.f32 %v2252, %v2320
      %v2353 = vadd.f32 %v2253, %v2321
      %v2354 = vadd.f32 %v2254, %v2322
      %v2355 = vadd.f32 %v2255, %v2323
      %v2356 = vadd.f32 %v2256, %v2324
      %v2357 = vadd.f32 %v2257, %v2325
      %v2358 = vadd.f32 %v2258, %v2326
      %v2359 = vadd.f32 %v2259, %v2327
      %v2360 = vadd.f32 %v2260, %v2328
      %v2361 = vadd.f32 %v2261, %v2329
      %v2362 = vadd.f32 %v2262, %v2330
      %v2363 = vadd.f32 %v2263, %v2331
      %v2364 = vadd.f32 %v2264, %v2332
      %v2365 = vadd.f32 %v2265, %v2333
      %v2366 = vadd.f32 %v2266, %v2334
      %v2367 = vadd.f32 %v2267, %v2335
      %v2368 = vld [vmem:[%s979 + $0x1] sm:$0xff]
      %v2369 = vld [vmem:[%s979 + $0x9] sm:$0xff]
      %v2370 = vld [vmem:[%s979 + $0x19] sm:$0xff]
      %v2371 = vld [vmem:[%s979 + $0x21] sm:$0xff]
      %v2372 = vld [vmem:[%s979 + $0x31] sm:$0xff]
      %v2373 = vld [vmem:[%s979 + $0x39] sm:$0xff]
      %v2374 = vld [vmem:[%s979 + $0x49] sm:$0xff]
      %v2375 = vld [vmem:[%s979 + $0x51] sm:$0xff]
      %v2376 = vld [vmem:[%s979 + $0x61] sm:$0xff]
      %v2377 = vld [vmem:[%s979 + $0x69] sm:$0xff]
      %v2378 = vld [vmem:[%s979 + $0x79] sm:$0xff]
      %v2379 = vld [vmem:[%s979 + $0x81] sm:$0xff]
      %v2380 = vld [vmem:[%s979 + $0x91] sm:$0xff]
      %v2381 = vld [vmem:[%s979 + $0x99] sm:$0xff]
      %v2382 = vld [vmem:[%s979 + $0xa9] sm:$0xff]
      %v2383 = vld [vmem:[%s979 + $0xb1] sm:$0xff]
      %v2384 = vld [vmem:[%s979 + $0xc1] sm:$0xff]
      %v2385 = vld [vmem:[%s979 + $0xc9] sm:$0xff]
      %v2386 = vld [vmem:[%s979 + $0xd9] sm:$0xff]
      %v2387 = vld [vmem:[%s979 + $0xe1] sm:$0xff]
      %v2388 = vld [vmem:[%s979 + $0xf1] sm:$0xff]
      %v2389 = vld [vmem:[%s979 + $0xf9] sm:$0xff]
      %v2390 = vld [vmem:[%s979 + $0x109] sm:$0xff]
      %v2391 = vld [vmem:[%s979 + $0x111] sm:$0xff]
      %v2392 = vld [vmem:[%s979 + $0x121] sm:$0xff]
      %v2393 = vld [vmem:[%s979 + $0x129] sm:$0xff]
      %v2394 = vld [vmem:[%s979 + $0x139] sm:$0xff]
      %v2395 = vld [vmem:[%s979 + $0x141] sm:$0xff]
      %v2396 = vld [vmem:[%s979 + $0x151] sm:$0xff]
      %v2397 = vld [vmem:[%s979 + $0x159] sm:$0xff]
      %v2398 = vld [vmem:[%s979 + $0x169] sm:$0xff]
      %v2399 = vld [vmem:[%s979 + $0x171] sm:$0xff]
      %v2400 = vlaneseq
      %v2401 = vshrl.u32 %v2400, 7
      %v2402 = vsub.s32 1, %v2401
      %v2403 = vrot.slane %v1257, %v2402
      %v2404 = vmul.f32 %v2368, %v2403
      %v2405 = vmul.f32 %v2369, %v2403
      %v2406 = vmul.f32 %v2370, %v2403
      %v2407 = vmul.f32 %v2371, %v2403
      %v2408 = vmul.f32 %v2372, %v2403
      %v2409 = vmul.f32 %v2373, %v2403
      %v2410 = vmul.f32 %v2374, %v2403
      %v2411 = vmul.f32 %v2375, %v2403
      %v2412 = vmul.f32 %v2376, %v2403
      %v2413 = vmul.f32 %v2377, %v2403
      %v2414 = vmul.f32 %v2378, %v2403
      %v2415 = vmul.f32 %v2379, %v2403
      %v2416 = vmul.f32 %v2380, %v2403
      %v2417 = vmul.f32 %v2381, %v2403
      %v2418 = vmul.f32 %v2382, %v2403
      %v2419 = vmul.f32 %v2383, %v2403
      %v2420 = vmul.f32 %v2384, %v2403
      %v2421 = vmul.f32 %v2385, %v2403
      %v2422 = vmul.f32 %v2386, %v2403
      %v2423 = vmul.f32 %v2387, %v2403
      %v2424 = vmul.f32 %v2388, %v2403
      %v2425 = vmul.f32 %v2389, %v2403
      %v2426 = vmul.f32 %v2390, %v2403
      %v2427 = vmul.f32 %v2391, %v2403
      %v2428 = vmul.f32 %v2392, %v2403
      %v2429 = vmul.f32 %v2393, %v2403
      %v2430 = vmul.f32 %v2394, %v2403
      %v2431 = vmul.f32 %v2395, %v2403
      %v2432 = vmul.f32 %v2396, %v2403
      %v2433 = vmul.f32 %v2397, %v2403
      %v2434 = vmul.f32 %v2398, %v2403
      %v2435 = vmul.f32 %v2399, %v2403
      %v2436 = vadd.f32 %v2336, %v2404
      %v2437 = vadd.f32 %v2337, %v2405
      %v2438 = vadd.f32 %v2338, %v2406
      %v2439 = vadd.f32 %v2339, %v2407
      %v2440 = vadd.f32 %v2340, %v2408
      %v2441 = vadd.f32 %v2341, %v2409
      %v2442 = vadd.f32 %v2342, %v2410
      %v2443 = vadd.f32 %v2343, %v2411
      %v2444 = vadd.f32 %v2344, %v2412
      %v2445 = vadd.f32 %v2345, %v2413
      %v2446 = vadd.f32 %v2346, %v2414
      %v2447 = vadd.f32 %v2347, %v2415
      %v2448 = vadd.f32 %v2348, %v2416
      %v2449 = vadd.f32 %v2349, %v2417
      %v2450 = vadd.f32 %v2350, %v2418
      %v2451 = vadd.f32 %v2351, %v2419
      %v2452 = vadd.f32 %v2352, %v2420
      %v2453 = vadd.f32 %v2353, %v2421
      %v2454 = vadd.f32 %v2354, %v2422
      %v2455 = vadd.f32 %v2355, %v2423
      %v2456 = vadd.f32 %v2356, %v2424
      %v2457 = vadd.f32 %v2357, %v2425
      %v2458 = vadd.f32 %v2358, %v2426
      %v2459 = vadd.f32 %v2359, %v2427
      %v2460 = vadd.f32 %v2360, %v2428
      %v2461 = vadd.f32 %v2361, %v2429
      %v2462 = vadd.f32 %v2362, %v2430
      %v2463 = vadd.f32 %v2363, %v2431
      %v2464 = vadd.f32 %v2364, %v2432
      %v2465 = vadd.f32 %v2365, %v2433
      %v2466 = vadd.f32 %v2366, %v2434
      %v2467 = vadd.f32 %v2367, %v2435
      %v2468 = vld [vmem:[%s979 + $0x2] sm:$0xff]
      %v2469 = vld [vmem:[%s979 + $0xa] sm:$0xff]
      %v2470 = vld [vmem:[%s979 + $0x1a] sm:$0xff]
      %v2471 = vld [vmem:[%s979 + $0x22] sm:$0xff]
      %v2472 = vld [vmem:[%s979 + $0x32] sm:$0xff]
      %v2473 = vld [vmem:[%s979 + $0x3a] sm:$0xff]
      %v2474 = vld [vmem:[%s979 + $0x4a] sm:$0xff]
      %v2475 = vld [vmem:[%s979 + $0x52] sm:$0xff]
      %v2476 = vld [vmem:[%s979 + $0x62] sm:$0xff]
      %v2477 = vld [vmem:[%s979 + $0x6a] sm:$0xff]
      %v2478 = vld [vmem:[%s979 + $0x7a] sm:$0xff]
      %v2479 = vld [vmem:[%s979 + $0x82] sm:$0xff]
      %v2480 = vld [vmem:[%s979 + $0x92] sm:$0xff]
      %v2481 = vld [vmem:[%s979 + $0x9a] sm:$0xff]
      %v2482 = vld [vmem:[%s979 + $0xaa] sm:$0xff]
      %v2483 = vld [vmem:[%s979 + $0xb2] sm:$0xff]
      %v2484 = vld [vmem:[%s979 + $0xc2] sm:$0xff]
      %v2485 = vld [vmem:[%s979 + $0xca] sm:$0xff]
      %v2486 = vld [vmem:[%s979 + $0xda] sm:$0xff]
      %v2487 = vld [vmem:[%s979 + $0xe2] sm:$0xff]
      %v2488 = vld [vmem:[%s979 + $0xf2] sm:$0xff]
      %v2489 = vld [vmem:[%s979 + $0xfa] sm:$0xff]
      %v2490 = vld [vmem:[%s979 + $0x10a] sm:$0xff]
      %v2491 = vld [vmem:[%s979 + $0x112] sm:$0xff]
      %v2492 = vld [vmem:[%s979 + $0x122] sm:$0xff]
      %v2493 = vld [vmem:[%s979 + $0x12a] sm:$0xff]
      %v2494 = vld [vmem:[%s979 + $0x13a] sm:$0xff]
      %v2495 = vld [vmem:[%s979 + $0x142] sm:$0xff]
      %v2496 = vld [vmem:[%s979 + $0x152] sm:$0xff]
      %v2497 = vld [vmem:[%s979 + $0x15a] sm:$0xff]
      %v2498 = vld [vmem:[%s979 + $0x16a] sm:$0xff]
      %v2499 = vld [vmem:[%s979 + $0x172] sm:$0xff]
      %v2500 = vlaneseq
      %v2501 = vshrl.u32 %v2500, 7
      %v2502 = vsub.s32 2, %v2501
      %v2503 = vrot.slane %v1257, %v2502
      %v2504 = vmul.f32 %v2468, %v2503
      %v2505 = vmul.f32 %v2469, %v2503
      %v2506 = vmul.f32 %v2470, %v2503
      %v2507 = vmul.f32 %v2471, %v2503
      %v2508 = vmul.f32 %v2472, %v2503
      %v2509 = vmul.f32 %v2473, %v2503
      %v2510 = vmul.f32 %v2474, %v2503
      %v2511 = vmul.f32 %v2475, %v2503
      %v2512 = vmul.f32 %v2476, %v2503
      %v2513 = vmul.f32 %v2477, %v2503
      %v2514 = vmul.f32 %v2478, %v2503
      %v2515 = vmul.f32 %v2479, %v2503
      %v2516 = vmul.f32 %v2480, %v2503
      %v2517 = vmul.f32 %v2481, %v2503
      %v2518 = vmul.f32 %v2482, %v2503
      %v2519 = vmul.f32 %v2483, %v2503
      %v2520 = vmul.f32 %v2484, %v2503
      %v2521 = vmul.f32 %v2485, %v2503
      %v2522 = vmul.f32 %v2486, %v2503
      %v2523 = vmul.f32 %v2487, %v2503
      %v2524 = vmul.f32 %v2488, %v2503
      %v2525 = vmul.f32 %v2489, %v2503
      %v2526 = vmul.f32 %v2490, %v2503
      %v2527 = vmul.f32 %v2491, %v2503
      %v2528 = vmul.f32 %v2492, %v2503
      %v2529 = vmul.f32 %v2493, %v2503
      %v2530 = vmul.f32 %v2494, %v2503
      %v2531 = vmul.f32 %v2495, %v2503
      %v2532 = vmul.f32 %v2496, %v2503
      %v2533 = vmul.f32 %v2497, %v2503
      %v2534 = vmul.f32 %v2498, %v2503
      %v2535 = vmul.f32 %v2499, %v2503
      %v2536 = vadd.f32 %v2436, %v2504
      %v2537 = vadd.f32 %v2437, %v2505
      %v2538 = vadd.f32 %v2438, %v2506
      %v2539 = vadd.f32 %v2439, %v2507
      %v2540 = vadd.f32 %v2440, %v2508
      %v2541 = vadd.f32 %v2441, %v2509
      %v2542 = vadd.f32 %v2442, %v2510
      %v2543 = vadd.f32 %v2443, %v2511
      %v2544 = vadd.f32 %v2444, %v2512
      %v2545 = vadd.f32 %v2445, %v2513
      %v2546 = vadd.f32 %v2446, %v2514
      %v2547 = vadd.f32 %v2447, %v2515
      %v2548 = vadd.f32 %v2448, %v2516
      %v2549 = vadd.f32 %v2449, %v2517
      %v2550 = vadd.f32 %v2450, %v2518
      %v2551 = vadd.f32 %v2451, %v2519
      %v2552 = vadd.f32 %v2452, %v2520
      %v2553 = vadd.f32 %v2453, %v2521
      %v2554 = vadd.f32 %v2454, %v2522
      %v2555 = vadd.f32 %v2455, %v2523
      %v2556 = vadd.f32 %v2456, %v2524
      %v2557 = vadd.f32 %v2457, %v2525
      %v2558 = vadd.f32 %v2458, %v2526
      %v2559 = vadd.f32 %v2459, %v2527
      %v2560 = vadd.f32 %v2460, %v2528
      %v2561 = vadd.f32 %v2461, %v2529
      %v2562 = vadd.f32 %v2462, %v2530
      %v2563 = vadd.f32 %v2463, %v2531
      %v2564 = vadd.f32 %v2464, %v2532
      %v2565 = vadd.f32 %v2465, %v2533
      %v2566 = vadd.f32 %v2466, %v2534
      %v2567 = vadd.f32 %v2467, %v2535
      %v2568 = vld [vmem:[%s979 + $0x3] sm:$0xff]
      %v2569 = vld [vmem:[%s979 + $0xb] sm:$0xff]
      %v2570 = vld [vmem:[%s979 + $0x1b] sm:$0xff]
      %v2571 = vld [vmem:[%s979 + $0x23] sm:$0xff]
      %v2572 = vld [vmem:[%s979 + $0x33] sm:$0xff]
      %v2573 = vld [vmem:[%s979 + $0x3b] sm:$0xff]
      %v2574 = vld [vmem:[%s979 + $0x4b] sm:$0xff]
      %v2575 = vld [vmem:[%s979 + $0x53] sm:$0xff]
      %v2576 = vld [vmem:[%s979 + $0x63] sm:$0xff]
      %v2577 = vld [vmem:[%s979 + $0x6b] sm:$0xff]
      %v2578 = vld [vmem:[%s979 + $0x7b] sm:$0xff]
      %v2579 = vld [vmem:[%s979 + $0x83] sm:$0xff]
      %v2580 = vld [vmem:[%s979 + $0x93] sm:$0xff]
      %v2581 = vld [vmem:[%s979 + $0x9b] sm:$0xff]
      %v2582 = vld [vmem:[%s979 + $0xab] sm:$0xff]
      %v2583 = vld [vmem:[%s979 + $0xb3] sm:$0xff]
      %v2584 = vld [vmem:[%s979 + $0xc3] sm:$0xff]
      %v2585 = vld [vmem:[%s979 + $0xcb] sm:$0xff]
      %v2586 = vld [vmem:[%s979 + $0xdb] sm:$0xff]
      %v2587 = vld [vmem:[%s979 + $0xe3] sm:$0xff]
      %v2588 = vld [vmem:[%s979 + $0xf3] sm:$0xff]
      %v2589 = vld [vmem:[%s979 + $0xfb] sm:$0xff]
      %v2590 = vld [vmem:[%s979 + $0x10b] sm:$0xff]
      %v2591 = vld [vmem:[%s979 + $0x113] sm:$0xff]
      %v2592 = vld [vmem:[%s979 + $0x123] sm:$0xff]
      %v2593 = vld [vmem:[%s979 + $0x12b] sm:$0xff]
      %v2594 = vld [vmem:[%s979 + $0x13b] sm:$0xff]
      %v2595 = vld [vmem:[%s979 + $0x143] sm:$0xff]
      %v2596 = vld [vmem:[%s979 + $0x153] sm:$0xff]
      %v2597 = vld [vmem:[%s979 + $0x15b] sm:$0xff]
      %v2598 = vld [vmem:[%s979 + $0x16b] sm:$0xff]
      %v2599 = vld [vmem:[%s979 + $0x173] sm:$0xff]
      %v2600 = vlaneseq
      %v2601 = vshrl.u32 %v2600, 7
      %v2602 = vsub.s32 3, %v2601
      %v2603 = vrot.slane %v1257, %v2602
      %v2604 = vmul.f32 %v2568, %v2603
      %v2605 = vmul.f32 %v2569, %v2603
      %v2606 = vmul.f32 %v2570, %v2603
      %v2607 = vmul.f32 %v2571, %v2603
      %v2608 = vmul.f32 %v2572, %v2603
      %v2609 = vmul.f32 %v2573, %v2603
      %v2610 = vmul.f32 %v2574, %v2603
      %v2611 = vmul.f32 %v2575, %v2603
      %v2612 = vmul.f32 %v2576, %v2603
      %v2613 = vmul.f32 %v2577, %v2603
      %v2614 = vmul.f32 %v2578, %v2603
      %v2615 = vmul.f32 %v2579, %v2603
      %v2616 = vmul.f32 %v2580, %v2603
      %v2617 = vmul.f32 %v2581, %v2603
      %v2618 = vmul.f32 %v2582, %v2603
      %v2619 = vmul.f32 %v2583, %v2603
      %v2620 = vmul.f32 %v2584, %v2603
      %v2621 = vmul.f32 %v2585, %v2603
      %v2622 = vmul.f32 %v2586, %v2603
      %v2623 = vmul.f32 %v2587, %v2603
      %v2624 = vmul.f32 %v2588, %v2603
      %v2625 = vmul.f32 %v2589, %v2603
      %v2626 = vmul.f32 %v2590, %v2603
      %v2627 = vmul.f32 %v2591, %v2603
      %v2628 = vmul.f32 %v2592, %v2603
      %v2629 = vmul.f32 %v2593, %v2603
      %v2630 = vmul.f32 %v2594, %v2603
      %v2631 = vmul.f32 %v2595, %v2603
      %v2632 = vmul.f32 %v2596, %v2603
      %v2633 = vmul.f32 %v2597, %v2603
      %v2634 = vmul.f32 %v2598, %v2603
      %v2635 = vmul.f32 %v2599, %v2603
      %v2636 = vadd.f32 %v2536, %v2604
      %v2637 = vadd.f32 %v2537, %v2605
      %v2638 = vadd.f32 %v2538, %v2606
      %v2639 = vadd.f32 %v2539, %v2607
      %v2640 = vadd.f32 %v2540, %v2608
      %v2641 = vadd.f32 %v2541, %v2609
      %v2642 = vadd.f32 %v2542, %v2610
      %v2643 = vadd.f32 %v2543, %v2611
      %v2644 = vadd.f32 %v2544, %v2612
      %v2645 = vadd.f32 %v2545, %v2613
      %v2646 = vadd.f32 %v2546, %v2614
      %v2647 = vadd.f32 %v2547, %v2615
      %v2648 = vadd.f32 %v2548, %v2616
      %v2649 = vadd.f32 %v2549, %v2617
      %v2650 = vadd.f32 %v2550, %v2618
      %v2651 = vadd.f32 %v2551, %v2619
      %v2652 = vadd.f32 %v2552, %v2620
      %v2653 = vadd.f32 %v2553, %v2621
      %v2654 = vadd.f32 %v2554, %v2622
      %v2655 = vadd.f32 %v2555, %v2623
      %v2656 = vadd.f32 %v2556, %v2624
      %v2657 = vadd.f32 %v2557, %v2625
      %v2658 = vadd.f32 %v2558, %v2626
      %v2659 = vadd.f32 %v2559, %v2627
      %v2660 = vadd.f32 %v2560, %v2628
      %v2661 = vadd.f32 %v2561, %v2629
      %v2662 = vadd.f32 %v2562, %v2630
      %v2663 = vadd.f32 %v2563, %v2631
      %v2664 = vadd.f32 %v2564, %v2632
      %v2665 = vadd.f32 %v2565, %v2633
      %v2666 = vadd.f32 %v2566, %v2634
      %v2667 = vadd.f32 %v2567, %v2635
      %v2668 = vld [vmem:[%s979 + $0x4] sm:$0xff]
      %v2669 = vld [vmem:[%s979 + $0xc] sm:$0xff]
      %v2670 = vld [vmem:[%s979 + $0x1c] sm:$0xff]
      %v2671 = vld [vmem:[%s979 + $0x24] sm:$0xff]
      %v2672 = vld [vmem:[%s979 + $0x34] sm:$0xff]
      %v2673 = vld [vmem:[%s979 + $0x3c] sm:$0xff]
      %v2674 = vld [vmem:[%s979 + $0x4c] sm:$0xff]
      %v2675 = vld [vmem:[%s979 + $0x54] sm:$0xff]
      %v2676 = vld [vmem:[%s979 + $0x64] sm:$0xff]
      %v2677 = vld [vmem:[%s979 + $0x6c] sm:$0xff]
      %v2678 = vld [vmem:[%s979 + $0x7c] sm:$0xff]
      %v2679 = vld [vmem:[%s979 + $0x84] sm:$0xff]
      %v2680 = vld [vmem:[%s979 + $0x94] sm:$0xff]
      %v2681 = vld [vmem:[%s979 + $0x9c] sm:$0xff]
      %v2682 = vld [vmem:[%s979 + $0xac] sm:$0xff]
      %v2683 = vld [vmem:[%s979 + $0xb4] sm:$0xff]
      %v2684 = vld [vmem:[%s979 + $0xc4] sm:$0xff]
      %v2685 = vld [vmem:[%s979 + $0xcc] sm:$0xff]
      %v2686 = vld [vmem:[%s979 + $0xdc] sm:$0xff]
      %v2687 = vld [vmem:[%s979 + $0xe4] sm:$0xff]
      %v2688 = vld [vmem:[%s979 + $0xf4] sm:$0xff]
      %v2689 = vld [vmem:[%s979 + $0xfc] sm:$0xff]
      %v2690 = vld [vmem:[%s979 + $0x10c] sm:$0xff]
      %v2691 = vld [vmem:[%s979 + $0x114] sm:$0xff]
      %v2692 = vld [vmem:[%s979 + $0x124] sm:$0xff]
      %v2693 = vld [vmem:[%s979 + $0x12c] sm:$0xff]
      %v2694 = vld [vmem:[%s979 + $0x13c] sm:$0xff]
      %v2695 = vld [vmem:[%s979 + $0x144] sm:$0xff]
      %v2696 = vld [vmem:[%s979 + $0x154] sm:$0xff]
      %v2697 = vld [vmem:[%s979 + $0x15c] sm:$0xff]
      %v2698 = vld [vmem:[%s979 + $0x16c] sm:$0xff]
      %v2699 = vld [vmem:[%s979 + $0x174] sm:$0xff]
      %v2700 = vlaneseq
      %v2701 = vshrl.u32 %v2700, 7
      %v2702 = vsub.s32 4, %v2701
      %v2703 = vrot.slane %v1257, %v2702
      %v2704 = vmul.f32 %v2668, %v2703
      %v2705 = vmul.f32 %v2669, %v2703
      %v2706 = vmul.f32 %v2670, %v2703
      %v2707 = vmul.f32 %v2671, %v2703
      %v2708 = vmul.f32 %v2672, %v2703
      %v2709 = vmul.f32 %v2673, %v2703
      %v2710 = vmul.f32 %v2674, %v2703
      %v2711 = vmul.f32 %v2675, %v2703
      %v2712 = vmul.f32 %v2676, %v2703
      %v2713 = vmul.f32 %v2677, %v2703
      %v2714 = vmul.f32 %v2678, %v2703
      %v2715 = vmul.f32 %v2679, %v2703
      %v2716 = vmul.f32 %v2680, %v2703
      %v2717 = vmul.f32 %v2681, %v2703
      %v2718 = vmul.f32 %v2682, %v2703
      %v2719 = vmul.f32 %v2683, %v2703
      %v2720 = vmul.f32 %v2684, %v2703
      %v2721 = vmul.f32 %v2685, %v2703
      %v2722 = vmul.f32 %v2686, %v2703
      %v2723 = vmul.f32 %v2687, %v2703
      %v2724 = vmul.f32 %v2688, %v2703
      %v2725 = vmul.f32 %v2689, %v2703
      %v2726 = vmul.f32 %v2690, %v2703
      %v2727 = vmul.f32 %v2691, %v2703
      %v2728 = vmul.f32 %v2692, %v2703
      %v2729 = vmul.f32 %v2693, %v2703
      %v2730 = vmul.f32 %v2694, %v2703
      %v2731 = vmul.f32 %v2695, %v2703
      %v2732 = vmul.f32 %v2696, %v2703
      %v2733 = vmul.f32 %v2697, %v2703
      %v2734 = vmul.f32 %v2698, %v2703
      %v2735 = vmul.f32 %v2699, %v2703
      %v2736 = vadd.f32 %v2636, %v2704
      %v2737 = vadd.f32 %v2637, %v2705
      %v2738 = vadd.f32 %v2638, %v2706
      %v2739 = vadd.f32 %v2639, %v2707
      %v2740 = vadd.f32 %v2640, %v2708
      %v2741 = vadd.f32 %v2641, %v2709
      %v2742 = vadd.f32 %v2642, %v2710
      %v2743 = vadd.f32 %v2643, %v2711
      %v2744 = vadd.f32 %v2644, %v2712
      %v2745 = vadd.f32 %v2645, %v2713
      %v2746 = vadd.f32 %v2646, %v2714
      %v2747 = vadd.f32 %v2647, %v2715
      %v2748 = vadd.f32 %v2648, %v2716
      %v2749 = vadd.f32 %v2649, %v2717
      %v2750 = vadd.f32 %v2650, %v2718
      %v2751 = vadd.f32 %v2651, %v2719
      %v2752 = vadd.f32 %v2652, %v2720
      %v2753 = vadd.f32 %v2653, %v2721
      %v2754 = vadd.f32 %v2654, %v2722
      %v2755 = vadd.f32 %v2655, %v2723
      %v2756 = vadd.f32 %v2656, %v2724
      %v2757 = vadd.f32 %v2657, %v2725
      %v2758 = vadd.f32 %v2658, %v2726
      %v2759 = vadd.f32 %v2659, %v2727
      %v2760 = vadd.f32 %v2660, %v2728
      %v2761 = vadd.f32 %v2661, %v2729
      %v2762 = vadd.f32 %v2662, %v2730
      %v2763 = vadd.f32 %v2663, %v2731
      %v2764 = vadd.f32 %v2664, %v2732
      %v2765 = vadd.f32 %v2665, %v2733
      %v2766 = vadd.f32 %v2666, %v2734
      %v2767 = vadd.f32 %v2667, %v2735
      %s2768 = scalar_lea.vmem [#allocation2], 72
      %v2769 = vld [vmem:[%s2768] sm:$0xff]
      %v2770 = vld [vmem:[%s2768 + $0x8] sm:$0xff]
      %v2771 = vld [vmem:[%s2768 + $0x18] sm:$0xff]
      %v2772 = vld [vmem:[%s2768 + $0x20] sm:$0xff]
      %v2773 = vld [vmem:[%s2768 + $0x30] sm:$0xff]
      %v2774 = vld [vmem:[%s2768 + $0x38] sm:$0xff]
      %v2775 = vld [vmem:[%s2768 + $0x48] sm:$0xff]
      %v2776 = vld [vmem:[%s2768 + $0x50] sm:$0xff]
      %v2777 = vld [vmem:[%s2768 + $0x60] sm:$0xff]
      %v2778 = vld [vmem:[%s2768 + $0x68] sm:$0xff]
      %v2779 = vld [vmem:[%s2768 + $0x78] sm:$0xff]
      %v2780 = vld [vmem:[%s2768 + $0x80] sm:$0xff]
      %v2781 = vld [vmem:[%s2768 + $0x90] sm:$0xff]
      %v2782 = vld [vmem:[%s2768 + $0x98] sm:$0xff]
      %v2783 = vld [vmem:[%s2768 + $0xa8] sm:$0xff]
      %v2784 = vld [vmem:[%s2768 + $0xb0] sm:$0xff]
      %v2785 = vld [vmem:[%s2768 + $0xc0] sm:$0xff]
      %v2786 = vld [vmem:[%s2768 + $0xc8] sm:$0xff]
      %v2787 = vld [vmem:[%s2768 + $0xd8] sm:$0xff]
      %v2788 = vld [vmem:[%s2768 + $0xe0] sm:$0xff]
      %v2789 = vld [vmem:[%s2768 + $0xf0] sm:$0xff]
      %v2790 = vld [vmem:[%s2768 + $0xf8] sm:$0xff]
      %v2791 = vld [vmem:[%s2768 + $0x108] sm:$0xff]
      %v2792 = vld [vmem:[%s2768 + $0x110] sm:$0xff]
      %v2793 = vld [vmem:[%s2768 + $0x120] sm:$0xff]
      %v2794 = vld [vmem:[%s2768 + $0x128] sm:$0xff]
      %v2795 = vld [vmem:[%s2768 + $0x138] sm:$0xff]
      %v2796 = vld [vmem:[%s2768 + $0x140] sm:$0xff]
      %v2797 = vld [vmem:[%s2768 + $0x150] sm:$0xff]
      %v2798 = vld [vmem:[%s2768 + $0x158] sm:$0xff]
      %v2799 = vld [vmem:[%s2768 + $0x168] sm:$0xff]
      %v2800 = vld [vmem:[%s2768 + $0x170] sm:$0xff]
      %v2801 = vlaneseq
      %v2802 = vshrl.u32 %v2801, 7
      %v2803 = vsub.s32 0, %v2802
      %v2804 = vrot.slane %v1258, %v2803
      %v2805 = vmul.f32 %v2769, %v2804
      %v2806 = vmul.f32 %v2770, %v2804
      %v2807 = vmul.f32 %v2771, %v2804
      %v2808 = vmul.f32 %v2772, %v2804
      %v2809 = vmul.f32 %v2773, %v2804
      %v2810 = vmul.f32 %v2774, %v2804
      %v2811 = vmul.f32 %v2775, %v2804
      %v2812 = vmul.f32 %v2776, %v2804
      %v2813 = vmul.f32 %v2777, %v2804
      %v2814 = vmul.f32 %v2778, %v2804
      %v2815 = vmul.f32 %v2779, %v2804
      %v2816 = vmul.f32 %v2780, %v2804
      %v2817 = vmul.f32 %v2781, %v2804
      %v2818 = vmul.f32 %v2782, %v2804
      %v2819 = vmul.f32 %v2783, %v2804
      %v2820 = vmul.f32 %v2784, %v2804
      %v2821 = vmul.f32 %v2785, %v2804
      %v2822 = vmul.f32 %v2786, %v2804
      %v2823 = vmul.f32 %v2787, %v2804
      %v2824 = vmul.f32 %v2788, %v2804
      %v2825 = vmul.f32 %v2789, %v2804
      %v2826 = vmul.f32 %v2790, %v2804
      %v2827 = vmul.f32 %v2791, %v2804
      %v2828 = vmul.f32 %v2792, %v2804
      %v2829 = vmul.f32 %v2793, %v2804
      %v2830 = vmul.f32 %v2794, %v2804
      %v2831 = vmul.f32 %v2795, %v2804
      %v2832 = vmul.f32 %v2796, %v2804
      %v2833 = vmul.f32 %v2797, %v2804
      %v2834 = vmul.f32 %v2798, %v2804
      %v2835 = vmul.f32 %v2799, %v2804
      %v2836 = vmul.f32 %v2800, %v2804
      %v2837 = vadd.f32 %v2736, %v2805
      %v2838 = vadd.f32 %v2737, %v2806
      %v2839 = vadd.f32 %v2738, %v2807
      %v2840 = vadd.f32 %v2739, %v2808
      %v2841 = vadd.f32 %v2740, %v2809
      %v2842 = vadd.f32 %v2741, %v2810
      %v2843 = vadd.f32 %v2742, %v2811
      %v2844 = vadd.f32 %v2743, %v2812
      %v2845 = vadd.f32 %v2744, %v2813
      %v2846 = vadd.f32 %v2745, %v2814
      %v2847 = vadd.f32 %v2746, %v2815
      %v2848 = vadd.f32 %v2747, %v2816
      %v2849 = vadd.f32 %v2748, %v2817
      %v2850 = vadd.f32 %v2749, %v2818
      %v2851 = vadd.f32 %v2750, %v2819
      %v2852 = vadd.f32 %v2751, %v2820
      %v2853 = vadd.f32 %v2752, %v2821
      %v2854 = vadd.f32 %v2753, %v2822
      %v2855 = vadd.f32 %v2754, %v2823
      %v2856 = vadd.f32 %v2755, %v2824
      %v2857 = vadd.f32 %v2756, %v2825
      %v2858 = vadd.f32 %v2757, %v2826
      %v2859 = vadd.f32 %v2758, %v2827
      %v2860 = vadd.f32 %v2759, %v2828
      %v2861 = vadd.f32 %v2760, %v2829
      %v2862 = vadd.f32 %v2761, %v2830
      %v2863 = vadd.f32 %v2762, %v2831
      %v2864 = vadd.f32 %v2763, %v2832
      %v2865 = vadd.f32 %v2764, %v2833
      %v2866 = vadd.f32 %v2765, %v2834
      %v2867 = vadd.f32 %v2766, %v2835
      %v2868 = vadd.f32 %v2767, %v2836
      %v2869 = vld [vmem:[%s2768 + $0x1] sm:$0xff]
      %v2870 = vld [vmem:[%s2768 + $0x9] sm:$0xff]
      %v2871 = vld [vmem:[%s2768 + $0x19] sm:$0xff]
      %v2872 = vld [vmem:[%s2768 + $0x21] sm:$0xff]
      %v2873 = vld [vmem:[%s2768 + $0x31] sm:$0xff]
      %v2874 = vld [vmem:[%s2768 + $0x39] sm:$0xff]
      %v2875 = vld [vmem:[%s2768 + $0x49] sm:$0xff]
      %v2876 = vld [vmem:[%s2768 + $0x51] sm:$0xff]
      %v2877 = vld [vmem:[%s2768 + $0x61] sm:$0xff]
      %v2878 = vld [vmem:[%s2768 + $0x69] sm:$0xff]
      %v2879 = vld [vmem:[%s2768 + $0x79] sm:$0xff]
      %v2880 = vld [vmem:[%s2768 + $0x81] sm:$0xff]
      %v2881 = vld [vmem:[%s2768 + $0x91] sm:$0xff]
      %v2882 = vld [vmem:[%s2768 + $0x99] sm:$0xff]
      %v2883 = vld [vmem:[%s2768 + $0xa9] sm:$0xff]
      %v2884 = vld [vmem:[%s2768 + $0xb1] sm:$0xff]
      %v2885 = vld [vmem:[%s2768 + $0xc1] sm:$0xff]
      %v2886 = vld [vmem:[%s2768 + $0xc9] sm:$0xff]
      %v2887 = vld [vmem:[%s2768 + $0xd9] sm:$0xff]
      %v2888 = vld [vmem:[%s2768 + $0xe1] sm:$0xff]
      %v2889 = vld [vmem:[%s2768 + $0xf1] sm:$0xff]
      %v2890 = vld [vmem:[%s2768 + $0xf9] sm:$0xff]
      %v2891 = vld [vmem:[%s2768 + $0x109] sm:$0xff]
      %v2892 = vld [vmem:[%s2768 + $0x111] sm:$0xff]
      %v2893 = vld [vmem:[%s2768 + $0x121] sm:$0xff]
      %v2894 = vld [vmem:[%s2768 + $0x129] sm:$0xff]
      %v2895 = vld [vmem:[%s2768 + $0x139] sm:$0xff]
      %v2896 = vld [vmem:[%s2768 + $0x141] sm:$0xff]
      %v2897 = vld [vmem:[%s2768 + $0x151] sm:$0xff]
      %v2898 = vld [vmem:[%s2768 + $0x159] sm:$0xff]
      %v2899 = vld [vmem:[%s2768 + $0x169] sm:$0xff]
      %v2900 = vld [vmem:[%s2768 + $0x171] sm:$0xff]
      %v2901 = vlaneseq
      %v2902 = vshrl.u32 %v2901, 7
      %v2903 = vsub.s32 1, %v2902
      %v2904 = vrot.slane %v1258, %v2903
      %v2905 = vmul.f32 %v2869, %v2904
      %v2906 = vmul.f32 %v2870, %v2904
      %v2907 = vmul.f32 %v2871, %v2904
      %v2908 = vmul.f32 %v2872, %v2904
      %v2909 = vmul.f32 %v2873, %v2904
      %v2910 = vmul.f32 %v2874, %v2904
      %v2911 = vmul.f32 %v2875, %v2904
      %v2912 = vmul.f32 %v2876, %v2904
      %v2913 = vmul.f32 %v2877, %v2904
      %v2914 = vmul.f32 %v2878, %v2904
      %v2915 = vmul.f32 %v2879, %v2904
      %v2916 = vmul.f32 %v2880, %v2904
      %v2917 = vmul.f32 %v2881, %v2904
      %v2918 = vmul.f32 %v2882, %v2904
      %v2919 = vmul.f32 %v2883, %v2904
      %v2920 = vmul.f32 %v2884, %v2904
      %v2921 = vmul.f32 %v2885, %v2904
      %v2922 = vmul.f32 %v2886, %v2904
      %v2923 = vmul.f32 %v2887, %v2904
      %v2924 = vmul.f32 %v2888, %v2904
      %v2925 = vmul.f32 %v2889, %v2904
      %v2926 = vmul.f32 %v2890, %v2904
      %v2927 = vmul.f32 %v2891, %v2904
      %v2928 = vmul.f32 %v2892, %v2904
      %v2929 = vmul.f32 %v2893, %v2904
      %v2930 = vmul.f32 %v2894, %v2904
      %v2931 = vmul.f32 %v2895, %v2904
      %v2932 = vmul.f32 %v2896, %v2904
      %v2933 = vmul.f32 %v2897, %v2904
      %v2934 = vmul.f32 %v2898, %v2904
      %v2935 = vmul.f32 %v2899, %v2904
      %v2936 = vmul.f32 %v2900, %v2904
      %v2937 = vadd.f32 %v2837, %v2905
      %v2938 = vadd.f32 %v2838, %v2906
      %v2939 = vadd.f32 %v2839, %v2907
      %v2940 = vadd.f32 %v2840, %v2908
      %v2941 = vadd.f32 %v2841, %v2909
      %v2942 = vadd.f32 %v2842, %v2910
      %v2943 = vadd.f32 %v2843, %v2911
      %v2944 = vadd.f32 %v2844, %v2912
      %v2945 = vadd.f32 %v2845, %v2913
      %v2946 = vadd.f32 %v2846, %v2914
      %v2947 = vadd.f32 %v2847, %v2915
      %v2948 = vadd.f32 %v2848, %v2916
      %v2949 = vadd.f32 %v2849, %v2917
      %v2950 = vadd.f32 %v2850, %v2918
      %v2951 = vadd.f32 %v2851, %v2919
      %v2952 = vadd.f32 %v2852, %v2920
      %v2953 = vadd.f32 %v2853, %v2921
      %v2954 = vadd.f32 %v2854, %v2922
      %v2955 = vadd.f32 %v2855, %v2923
      %v2956 = vadd.f32 %v2856, %v2924
      %v2957 = vadd.f32 %v2857, %v2925
      %v2958 = vadd.f32 %v2858, %v2926
      %v2959 = vadd.f32 %v2859, %v2927
      %v2960 = vadd.f32 %v2860, %v2928
      %v2961 = vadd.f32 %v2861, %v2929
      %v2962 = vadd.f32 %v2862, %v2930
      %v2963 = vadd.f32 %v2863, %v2931
      %v2964 = vadd.f32 %v2864, %v2932
      %v2965 = vadd.f32 %v2865, %v2933
      %v2966 = vadd.f32 %v2866, %v2934
      %v2967 = vadd.f32 %v2867, %v2935
      %v2968 = vadd.f32 %v2868, %v2936
      %v2969 = vld [vmem:[%s2768 + $0x2] sm:$0xff]
      %v2970 = vld [vmem:[%s2768 + $0xa] sm:$0xff]
      %v2971 = vld [vmem:[%s2768 + $0x1a] sm:$0xff]
      %v2972 = vld [vmem:[%s2768 + $0x22] sm:$0xff]
      %v2973 = vld [vmem:[%s2768 + $0x32] sm:$0xff]
      %v2974 = vld [vmem:[%s2768 + $0x3a] sm:$0xff]
      %v2975 = vld [vmem:[%s2768 + $0x4a] sm:$0xff]
      %v2976 = vld [vmem:[%s2768 + $0x52] sm:$0xff]
      %v2977 = vld [vmem:[%s2768 + $0x62] sm:$0xff]
      %v2978 = vld [vmem:[%s2768 + $0x6a] sm:$0xff]
      %v2979 = vld [vmem:[%s2768 + $0x7a] sm:$0xff]
      %v2980 = vld [vmem:[%s2768 + $0x82] sm:$0xff]
      %v2981 = vld [vmem:[%s2768 + $0x92] sm:$0xff]
      %v2982 = vld [vmem:[%s2768 + $0x9a] sm:$0xff]
      %v2983 = vld [vmem:[%s2768 + $0xaa] sm:$0xff]
      %v2984 = vld [vmem:[%s2768 + $0xb2] sm:$0xff]
      %v2985 = vld [vmem:[%s2768 + $0xc2] sm:$0xff]
      %v2986 = vld [vmem:[%s2768 + $0xca] sm:$0xff]
      %v2987 = vld [vmem:[%s2768 + $0xda] sm:$0xff]
      %v2988 = vld [vmem:[%s2768 + $0xe2] sm:$0xff]
      %v2989 = vld [vmem:[%s2768 + $0xf2] sm:$0xff]
      %v2990 = vld [vmem:[%s2768 + $0xfa] sm:$0xff]
      %v2991 = vld [vmem:[%s2768 + $0x10a] sm:$0xff]
      %v2992 = vld [vmem:[%s2768 + $0x112] sm:$0xff]
      %v2993 = vld [vmem:[%s2768 + $0x122] sm:$0xff]
      %v2994 = vld [vmem:[%s2768 + $0x12a] sm:$0xff]
      %v2995 = vld [vmem:[%s2768 + $0x13a] sm:$0xff]
      %v2996 = vld [vmem:[%s2768 + $0x142] sm:$0xff]
      %v2997 = vld [vmem:[%s2768 + $0x152] sm:$0xff]
      %v2998 = vld [vmem:[%s2768 + $0x15a] sm:$0xff]
      %v2999 = vld [vmem:[%s2768 + $0x16a] sm:$0xff]
      %v3000 = vld [vmem:[%s2768 + $0x172] sm:$0xff]
      %v3001 = vlaneseq
      %v3002 = vshrl.u32 %v3001, 7
      %v3003 = vsub.s32 2, %v3002
      %v3004 = vrot.slane %v1258, %v3003
      %v3005 = vmul.f32 %v2969, %v3004
      %v3006 = vmul.f32 %v2970, %v3004
      %v3007 = vmul.f32 %v2971, %v3004
      %v3008 = vmul.f32 %v2972, %v3004
      %v3009 = vmul.f32 %v2973, %v3004
      %v3010 = vmul.f32 %v2974, %v3004
      %v3011 = vmul.f32 %v2975, %v3004
      %v3012 = vmul.f32 %v2976, %v3004
      %v3013 = vmul.f32 %v2977, %v3004
      %v3014 = vmul.f32 %v2978, %v3004
      %v3015 = vmul.f32 %v2979, %v3004
      %v3016 = vmul.f32 %v2980, %v3004
      %v3017 = vmul.f32 %v2981, %v3004
      %v3018 = vmul.f32 %v2982, %v3004
      %v3019 = vmul.f32 %v2983, %v3004
      %v3020 = vmul.f32 %v2984, %v3004
      %v3021 = vmul.f32 %v2985, %v3004
      %v3022 = vmul.f32 %v2986, %v3004
      %v3023 = vmul.f32 %v2987, %v3004
      %v3024 = vmul.f32 %v2988, %v3004
      %v3025 = vmul.f32 %v2989, %v3004
      %v3026 = vmul.f32 %v2990, %v3004
      %v3027 = vmul.f32 %v2991, %v3004
      %v3028 = vmul.f32 %v2992, %v3004
      %v3029 = vmul.f32 %v2993, %v3004
      %v3030 = vmul.f32 %v2994, %v3004
      %v3031 = vmul.f32 %v2995, %v3004
      %v3032 = vmul.f32 %v2996, %v3004
      %v3033 = vmul.f32 %v2997, %v3004
      %v3034 = vmul.f32 %v2998, %v3004
      %v3035 = vmul.f32 %v2999, %v3004
      %v3036 = vmul.f32 %v3000, %v3004
      %v3037 = vadd.f32 %v2937, %v3005
      %v3038 = vadd.f32 %v2938, %v3006
      %v3039 = vadd.f32 %v2939, %v3007
      %v3040 = vadd.f32 %v2940, %v3008
      %v3041 = vadd.f32 %v2941, %v3009
      %v3042 = vadd.f32 %v2942, %v3010
      %v3043 = vadd.f32 %v2943, %v3011
      %v3044 = vadd.f32 %v2944, %v3012
      %v3045 = vadd.f32 %v2945, %v3013
      %v3046 = vadd.f32 %v2946, %v3014
      %v3047 = vadd.f32 %v2947, %v3015
      %v3048 = vadd.f32 %v2948, %v3016
      %v3049 = vadd.f32 %v2949, %v3017
      %v3050 = vadd.f32 %v2950, %v3018
      %v3051 = vadd.f32 %v2951, %v3019
      %v3052 = vadd.f32 %v2952, %v3020
      %v3053 = vadd.f32 %v2953, %v3021
      %v3054 = vadd.f32 %v2954, %v3022
      %v3055 = vadd.f32 %v2955, %v3023
      %v3056 = vadd.f32 %v2956, %v3024
      %v3057 = vadd.f32 %v2957, %v3025
      %v3058 = vadd.f32 %v2958, %v3026
      %v3059 = vadd.f32 %v2959, %v3027
      %v3060 = vadd.f32 %v2960, %v3028
      %v3061 = vadd.f32 %v2961, %v3029
      %v3062 = vadd.f32 %v2962, %v3030
      %v3063 = vadd.f32 %v2963, %v3031
      %v3064 = vadd.f32 %v2964, %v3032
      %v3065 = vadd.f32 %v2965, %v3033
      %v3066 = vadd.f32 %v2966, %v3034
      %v3067 = vadd.f32 %v2967, %v3035
      %v3068 = vadd.f32 %v2968, %v3036
      %v3069 = vld [vmem:[%s2768 + $0x3] sm:$0xff]
      %v3070 = vld [vmem:[%s2768 + $0xb] sm:$0xff]
      %v3071 = vld [vmem:[%s2768 + $0x1b] sm:$0xff]
      %v3072 = vld [vmem:[%s2768 + $0x23] sm:$0xff]
      %v3073 = vld [vmem:[%s2768 + $0x33] sm:$0xff]
      %v3074 = vld [vmem:[%s2768 + $0x3b] sm:$0xff]
      %v3075 = vld [vmem:[%s2768 + $0x4b] sm:$0xff]
      %v3076 = vld [vmem:[%s2768 + $0x53] sm:$0xff]
      %v3077 = vld [vmem:[%s2768 + $0x63] sm:$0xff]
      %v3078 = vld [vmem:[%s2768 + $0x6b] sm:$0xff]
      %v3079 = vld [vmem:[%s2768 + $0x7b] sm:$0xff]
      %v3080 = vld [vmem:[%s2768 + $0x83] sm:$0xff]
      %v3081 = vld [vmem:[%s2768 + $0x93] sm:$0xff]
      %v3082 = vld [vmem:[%s2768 + $0x9b] sm:$0xff]
      %v3083 = vld [vmem:[%s2768 + $0xab] sm:$0xff]
      %v3084 = vld [vmem:[%s2768 + $0xb3] sm:$0xff]
      %v3085 = vld [vmem:[%s2768 + $0xc3] sm:$0xff]
      %v3086 = vld [vmem:[%s2768 + $0xcb] sm:$0xff]
      %v3087 = vld [vmem:[%s2768 + $0xdb] sm:$0xff]
      %v3088 = vld [vmem:[%s2768 + $0xe3] sm:$0xff]
      %v3089 = vld [vmem:[%s2768 + $0xf3] sm:$0xff]
      %v3090 = vld [vmem:[%s2768 + $0xfb] sm:$0xff]
      %v3091 = vld [vmem:[%s2768 + $0x10b] sm:$0xff]
      %v3092 = vld [vmem:[%s2768 + $0x113] sm:$0xff]
      %v3093 = vld [vmem:[%s2768 + $0x123] sm:$0xff]
      %v3094 = vld [vmem:[%s2768 + $0x12b] sm:$0xff]
      %v3095 = vld [vmem:[%s2768 + $0x13b] sm:$0xff]
      %v3096 = vld [vmem:[%s2768 + $0x143] sm:$0xff]
      %v3097 = vld [vmem:[%s2768 + $0x153] sm:$0xff]
      %v3098 = vld [vmem:[%s2768 + $0x15b] sm:$0xff]
      %v3099 = vld [vmem:[%s2768 + $0x16b] sm:$0xff]
      %v3100 = vld [vmem:[%s2768 + $0x173] sm:$0xff]
      %v3101 = vlaneseq
      %v3102 = vshrl.u32 %v3101, 7
      %v3103 = vsub.s32 3, %v3102
      %v3104 = vrot.slane %v1258, %v3103
      %v3105 = vmul.f32 %v3069, %v3104
      %v3106 = vmul.f32 %v3070, %v3104
      %v3107 = vmul.f32 %v3071, %v3104
      %v3108 = vmul.f32 %v3072, %v3104
      %v3109 = vmul.f32 %v3073, %v3104
      %v3110 = vmul.f32 %v3074, %v3104
      %v3111 = vmul.f32 %v3075, %v3104
      %v3112 = vmul.f32 %v3076, %v3104
      %v3113 = vmul.f32 %v3077, %v3104
      %v3114 = vmul.f32 %v3078, %v3104
      %v3115 = vmul.f32 %v3079, %v3104
      %v3116 = vmul.f32 %v3080, %v3104
      %v3117 = vmul.f32 %v3081, %v3104
      %v3118 = vmul.f32 %v3082, %v3104
      %v3119 = vmul.f32 %v3083, %v3104
      %v3120 = vmul.f32 %v3084, %v3104
      %v3121 = vmul.f32 %v3085, %v3104
      %v3122 = vmul.f32 %v3086, %v3104
      %v3123 = vmul.f32 %v3087, %v3104
      %v3124 = vmul.f32 %v3088, %v3104
      %v3125 = vmul.f32 %v3089, %v3104
      %v3126 = vmul.f32 %v3090, %v3104
      %v3127 = vmul.f32 %v3091, %v3104
      %v3128 = vmul.f32 %v3092, %v3104
      %v3129 = vmul.f32 %v3093, %v3104
      %v3130 = vmul.f32 %v3094, %v3104
      %v3131 = vmul.f32 %v3095, %v3104
      %v3132 = vmul.f32 %v3096, %v3104
      %v3133 = vmul.f32 %v3097, %v3104
      %v3134 = vmul.f32 %v3098, %v3104
      %v3135 = vmul.f32 %v3099, %v3104
      %v3136 = vmul.f32 %v3100, %v3104
      %v3137 = vadd.f32 %v3037, %v3105
      %v3138 = vadd.f32 %v3038, %v3106
      %v3139 = vadd.f32 %v3039, %v3107
      %v3140 = vadd.f32 %v3040, %v3108
      %v3141 = vadd.f32 %v3041, %v3109
      %v3142 = vadd.f32 %v3042, %v3110
      %v3143 = vadd.f32 %v3043, %v3111
      %v3144 = vadd.f32 %v3044, %v3112
      %v3145 = vadd.f32 %v3045, %v3113
      %v3146 = vadd.f32 %v3046, %v3114
      %v3147 = vadd.f32 %v3047, %v3115
      %v3148 = vadd.f32 %v3048, %v3116
      %v3149 = vadd.f32 %v3049, %v3117
      %v3150 = vadd.f32 %v3050, %v3118
      %v3151 = vadd.f32 %v3051, %v3119
      %v3152 = vadd.f32 %v3052, %v3120
      %v3153 = vadd.f32 %v3053, %v3121
      %v3154 = vadd.f32 %v3054, %v3122
      %v3155 = vadd.f32 %v3055, %v3123
      %v3156 = vadd.f32 %v3056, %v3124
      %v3157 = vadd.f32 %v3057, %v3125
      %v3158 = vadd.f32 %v3058, %v3126
      %v3159 = vadd.f32 %v3059, %v3127
      %v3160 = vadd.f32 %v3060, %v3128
      %v3161 = vadd.f32 %v3061, %v3129
      %v3162 = vadd.f32 %v3062, %v3130
      %v3163 = vadd.f32 %v3063, %v3131
      %v3164 = vadd.f32 %v3064, %v3132
      %v3165 = vadd.f32 %v3065, %v3133
      %v3166 = vadd.f32 %v3066, %v3134
      %v3167 = vadd.f32 %v3067, %v3135
      %v3168 = vadd.f32 %v3068, %v3136
      %v3169 = vld [vmem:[%s2768 + $0x4] sm:$0xff]
      %v3170 = vld [vmem:[%s2768 + $0xc] sm:$0xff]
      %v3171 = vld [vmem:[%s2768 + $0x1c] sm:$0xff]
      %v3172 = vld [vmem:[%s2768 + $0x24] sm:$0xff]
      %v3173 = vld [vmem:[%s2768 + $0x34] sm:$0xff]
      %v3174 = vld [vmem:[%s2768 + $0x3c] sm:$0xff]
      %v3175 = vld [vmem:[%s2768 + $0x4c] sm:$0xff]
      %v3176 = vld [vmem:[%s2768 + $0x54] sm:$0xff]
      %v3177 = vld [vmem:[%s2768 + $0x64] sm:$0xff]
      %v3178 = vld [vmem:[%s2768 + $0x6c] sm:$0xff]
      %v3179 = vld [vmem:[%s2768 + $0x7c] sm:$0xff]
      %v3180 = vld [vmem:[%s2768 + $0x84] sm:$0xff]
      %v3181 = vld [vmem:[%s2768 + $0x94] sm:$0xff]
      %v3182 = vld [vmem:[%s2768 + $0x9c] sm:$0xff]
      %v3183 = vld [vmem:[%s2768 + $0xac] sm:$0xff]
      %v3184 = vld [vmem:[%s2768 + $0xb4] sm:$0xff]
      %v3185 = vld [vmem:[%s2768 + $0xc4] sm:$0xff]
      %v3186 = vld [vmem:[%s2768 + $0xcc] sm:$0xff]
      %v3187 = vld [vmem:[%s2768 + $0xdc] sm:$0xff]
      %v3188 = vld [vmem:[%s2768 + $0xe4] sm:$0xff]
      %v3189 = vld [vmem:[%s2768 + $0xf4] sm:$0xff]
      %v3190 = vld [vmem:[%s2768 + $0xfc] sm:$0xff]
      %v3191 = vld [vmem:[%s2768 + $0x10c] sm:$0xff]
      %v3192 = vld [vmem:[%s2768 + $0x114] sm:$0xff]
      %v3193 = vld [vmem:[%s2768 + $0x124] sm:$0xff]
      %v3194 = vld [vmem:[%s2768 + $0x12c] sm:$0xff]
      %v3195 = vld [vmem:[%s2768 + $0x13c] sm:$0xff]
      %v3196 = vld [vmem:[%s2768 + $0x144] sm:$0xff]
      %v3197 = vld [vmem:[%s2768 + $0x154] sm:$0xff]
      %v3198 = vld [vmem:[%s2768 + $0x15c] sm:$0xff]
      %v3199 = vld [vmem:[%s2768 + $0x16c] sm:$0xff]
      %v3200 = vld [vmem:[%s2768 + $0x174] sm:$0xff]
      %v3201 = vlaneseq
      %v3202 = vshrl.u32 %v3201, 7
      %v3203 = vsub.s32 4, %v3202
      %v3204 = vrot.slane %v1258, %v3203
      %v3205 = vmul.f32 %v3169, %v3204
      %v3206 = vmul.f32 %v3170, %v3204
      %v3207 = vmul.f32 %v3171, %v3204
      %v3208 = vmul.f32 %v3172, %v3204
      %v3209 = vmul.f32 %v3173, %v3204
      %v3210 = vmul.f32 %v3174, %v3204
      %v3211 = vmul.f32 %v3175, %v3204
      %v3212 = vmul.f32 %v3176, %v3204
      %v3213 = vmul.f32 %v3177, %v3204
      %v3214 = vmul.f32 %v3178, %v3204
      %v3215 = vmul.f32 %v3179, %v3204
      %v3216 = vmul.f32 %v3180, %v3204
      %v3217 = vmul.f32 %v3181, %v3204
      %v3218 = vmul.f32 %v3182, %v3204
      %v3219 = vmul.f32 %v3183, %v3204
      %v3220 = vmul.f32 %v3184, %v3204
      %v3221 = vmul.f32 %v3185, %v3204
      %v3222 = vmul.f32 %v3186, %v3204
      %v3223 = vmul.f32 %v3187, %v3204
      %v3224 = vmul.f32 %v3188, %v3204
      %v3225 = vmul.f32 %v3189, %v3204
      %v3226 = vmul.f32 %v3190, %v3204
      %v3227 = vmul.f32 %v3191, %v3204
      %v3228 = vmul.f32 %v3192, %v3204
      %v3229 = vmul.f32 %v3193, %v3204
      %v3230 = vmul.f32 %v3194, %v3204
      %v3231 = vmul.f32 %v3195, %v3204
      %v3232 = vmul.f32 %v3196, %v3204
      %v3233 = vmul.f32 %v3197, %v3204
      %v3234 = vmul.f32 %v3198, %v3204
      %v3235 = vmul.f32 %v3199, %v3204
      %v3236 = vmul.f32 %v3200, %v3204
      %v3237 = vadd.f32 %v3137, %v3205
      %v3238 = vadd.f32 %v3138, %v3206
      %v3239 = vadd.f32 %v3139, %v3207
      %v3240 = vadd.f32 %v3140, %v3208
      %v3241 = vadd.f32 %v3141, %v3209
      %v3242 = vadd.f32 %v3142, %v3210
      %v3243 = vadd.f32 %v3143, %v3211
      %v3244 = vadd.f32 %v3144, %v3212
      %v3245 = vadd.f32 %v3145, %v3213
      %v3246 = vadd.f32 %v3146, %v3214
      %v3247 = vadd.f32 %v3147, %v3215
      %v3248 = vadd.f32 %v3148, %v3216
      %v3249 = vadd.f32 %v3149, %v3217
      %v3250 = vadd.f32 %v3150, %v3218
      %v3251 = vadd.f32 %v3151, %v3219
      %v3252 = vadd.f32 %v3152, %v3220
      %v3253 = vadd.f32 %v3153, %v3221
      %v3254 = vadd.f32 %v3154, %v3222
      %v3255 = vadd.f32 %v3155, %v3223
      %v3256 = vadd.f32 %v3156, %v3224
      %v3257 = vadd.f32 %v3157, %v3225
      %v3258 = vadd.f32 %v3158, %v3226
      %v3259 = vadd.f32 %v3159, %v3227
      %v3260 = vadd.f32 %v3160, %v3228
      %v3261 = vadd.f32 %v3161, %v3229
      %v3262 = vadd.f32 %v3162, %v3230
      %v3263 = vadd.f32 %v3163, %v3231
      %v3264 = vadd.f32 %v3164, %v3232
      %v3265 = vadd.f32 %v3165, %v3233
      %v3266 = vadd.f32 %v3166, %v3234
      %v3267 = vadd.f32 %v3167, %v3235
      %v3268 = vadd.f32 %v3168, %v3236
      %s3269 = scalar_lea.vmem [#allocation2], 96
      %v3270 = vld [vmem:[%s3269] sm:$0xff]
      %v3271 = vld [vmem:[%s3269 + $0x8] sm:$0xff]
      %v3272 = vld [vmem:[%s3269 + $0x18] sm:$0xff]
      %v3273 = vld [vmem:[%s3269 + $0x20] sm:$0xff]
      %v3274 = vld [vmem:[%s3269 + $0x30] sm:$0xff]
      %v3275 = vld [vmem:[%s3269 + $0x38] sm:$0xff]
      %v3276 = vld [vmem:[%s3269 + $0x48] sm:$0xff]
      %v3277 = vld [vmem:[%s3269 + $0x50] sm:$0xff]
      %v3278 = vld [vmem:[%s3269 + $0x60] sm:$0xff]
      %v3279 = vld [vmem:[%s3269 + $0x68] sm:$0xff]
      %v3280 = vld [vmem:[%s3269 + $0x78] sm:$0xff]
      %v3281 = vld [vmem:[%s3269 + $0x80] sm:$0xff]
      %v3282 = vld [vmem:[%s3269 + $0x90] sm:$0xff]
      %v3283 = vld [vmem:[%s3269 + $0x98] sm:$0xff]
      %v3284 = vld [vmem:[%s3269 + $0xa8] sm:$0xff]
      %v3285 = vld [vmem:[%s3269 + $0xb0] sm:$0xff]
      %v3286 = vld [vmem:[%s3269 + $0xc0] sm:$0xff]
      %v3287 = vld [vmem:[%s3269 + $0xc8] sm:$0xff]
      %v3288 = vld [vmem:[%s3269 + $0xd8] sm:$0xff]
      %v3289 = vld [vmem:[%s3269 + $0xe0] sm:$0xff]
      %v3290 = vld [vmem:[%s3269 + $0xf0] sm:$0xff]
      %v3291 = vld [vmem:[%s3269 + $0xf8] sm:$0xff]
      %v3292 = vld [vmem:[%s3269 + $0x108] sm:$0xff]
      %v3293 = vld [vmem:[%s3269 + $0x110] sm:$0xff]
      %v3294 = vld [vmem:[%s3269 + $0x120] sm:$0xff]
      %v3295 = vld [vmem:[%s3269 + $0x128] sm:$0xff]
      %v3296 = vld [vmem:[%s3269 + $0x138] sm:$0xff]
      %v3297 = vld [vmem:[%s3269 + $0x140] sm:$0xff]
      %v3298 = vld [vmem:[%s3269 + $0x150] sm:$0xff]
      %v3299 = vld [vmem:[%s3269 + $0x158] sm:$0xff]
      %v3300 = vld [vmem:[%s3269 + $0x168] sm:$0xff]
      %v3301 = vld [vmem:[%s3269 + $0x170] sm:$0xff]
      %v3302 = vlaneseq
      %v3303 = vshrl.u32 %v3302, 7
      %v3304 = vsub.s32 0, %v3303
      %v3305 = vrot.slane %v1259, %v3304
      %v3306 = vmul.f32 %v3270, %v3305
      %v3307 = vmul.f32 %v3271, %v3305
      %v3308 = vmul.f32 %v3272, %v3305
      %v3309 = vmul.f32 %v3273, %v3305
      %v3310 = vmul.f32 %v3274, %v3305
      %v3311 = vmul.f32 %v3275, %v3305
      %v3312 = vmul.f32 %v3276, %v3305
      %v3313 = vmul.f32 %v3277, %v3305
      %v3314 = vmul.f32 %v3278, %v3305
      %v3315 = vmul.f32 %v3279, %v3305
      %v3316 = vmul.f32 %v3280, %v3305
      %v3317 = vmul.f32 %v3281, %v3305
      %v3318 = vmul.f32 %v3282, %v3305
      %v3319 = vmul.f32 %v3283, %v3305
      %v3320 = vmul.f32 %v3284, %v3305
      %v3321 = vmul.f32 %v3285, %v3305
      %v3322 = vmul.f32 %v3286, %v3305
      %v3323 = vmul.f32 %v3287, %v3305
      %v3324 = vmul.f32 %v3288, %v3305
      %v3325 = vmul.f32 %v3289, %v3305
      %v3326 = vmul.f32 %v3290, %v3305
      %v3327 = vmul.f32 %v3291, %v3305
      %v3328 = vmul.f32 %v3292, %v3305
      %v3329 = vmul.f32 %v3293, %v3305
      %v3330 = vmul.f32 %v3294, %v3305
      %v3331 = vmul.f32 %v3295, %v3305
      %v3332 = vmul.f32 %v3296, %v3305
      %v3333 = vmul.f32 %v3297, %v3305
      %v3334 = vmul.f32 %v3298, %v3305
      %v3335 = vmul.f32 %v3299, %v3305
      %v3336 = vmul.f32 %v3300, %v3305
      %v3337 = vmul.f32 %v3301, %v3305
      %v3338 = vadd.f32 %v3237, %v3306
      %v3339 = vadd.f32 %v3238, %v3307
      %v3340 = vadd.f32 %v3239, %v3308
      %v3341 = vadd.f32 %v3240, %v3309
      %v3342 = vadd.f32 %v3241, %v3310
      %v3343 = vadd.f32 %v3242, %v3311
      %v3344 = vadd.f32 %v3243, %v3312
      %v3345 = vadd.f32 %v3244, %v3313
      %v3346 = vadd.f32 %v3245, %v3314
      %v3347 = vadd.f32 %v3246, %v3315
      %v3348 = vadd.f32 %v3247, %v3316
      %v3349 = vadd.f32 %v3248, %v3317
      %v3350 = vadd.f32 %v3249, %v3318
      %v3351 = vadd.f32 %v3250, %v3319
      %v3352 = vadd.f32 %v3251, %v3320
      %v3353 = vadd.f32 %v3252, %v3321
      %v3354 = vadd.f32 %v3253, %v3322
      %v3355 = vadd.f32 %v3254, %v3323
      %v3356 = vadd.f32 %v3255, %v3324
      %v3357 = vadd.f32 %v3256, %v3325
      %v3358 = vadd.f32 %v3257, %v3326
      %v3359 = vadd.f32 %v3258, %v3327
      %v3360 = vadd.f32 %v3259, %v3328
      %v3361 = vadd.f32 %v3260, %v3329
      %v3362 = vadd.f32 %v3261, %v3330
      %v3363 = vadd.f32 %v3262, %v3331
      %v3364 = vadd.f32 %v3263, %v3332
      %v3365 = vadd.f32 %v3264, %v3333
      %v3366 = vadd.f32 %v3265, %v3334
      %v3367 = vadd.f32 %v3266, %v3335
      %v3368 = vadd.f32 %v3267, %v3336
      %v3369 = vadd.f32 %v3268, %v3337
      %v3370 = vld [vmem:[%s3269 + $0x1] sm:$0xff]
      %v3371 = vld [vmem:[%s3269 + $0x9] sm:$0xff]
      %v3372 = vld [vmem:[%s3269 + $0x19] sm:$0xff]
      %v3373 = vld [vmem:[%s3269 + $0x21] sm:$0xff]
      %v3374 = vld [vmem:[%s3269 + $0x31] sm:$0xff]
      %v3375 = vld [vmem:[%s3269 + $0x39] sm:$0xff]
      %v3376 = vld [vmem:[%s3269 + $0x49] sm:$0xff]
      %v3377 = vld [vmem:[%s3269 + $0x51] sm:$0xff]
      %v3378 = vld [vmem:[%s3269 + $0x61] sm:$0xff]
      %v3379 = vld [vmem:[%s3269 + $0x69] sm:$0xff]
      %v3380 = vld [vmem:[%s3269 + $0x79] sm:$0xff]
      %v3381 = vld [vmem:[%s3269 + $0x81] sm:$0xff]
      %v3382 = vld [vmem:[%s3269 + $0x91] sm:$0xff]
      %v3383 = vld [vmem:[%s3269 + $0x99] sm:$0xff]
      %v3384 = vld [vmem:[%s3269 + $0xa9] sm:$0xff]
      %v3385 = vld [vmem:[%s3269 + $0xb1] sm:$0xff]
      %v3386 = vld [vmem:[%s3269 + $0xc1] sm:$0xff]
      %v3387 = vld [vmem:[%s3269 + $0xc9] sm:$0xff]
      %v3388 = vld [vmem:[%s3269 + $0xd9] sm:$0xff]
      %v3389 = vld [vmem:[%s3269 + $0xe1] sm:$0xff]
      %v3390 = vld [vmem:[%s3269 + $0xf1] sm:$0xff]
      %v3391 = vld [vmem:[%s3269 + $0xf9] sm:$0xff]
      %v3392 = vld [vmem:[%s3269 + $0x109] sm:$0xff]
      %v3393 = vld [vmem:[%s3269 + $0x111] sm:$0xff]
      %v3394 = vld [vmem:[%s3269 + $0x121] sm:$0xff]
      %v3395 = vld [vmem:[%s3269 + $0x129] sm:$0xff]
      %v3396 = vld [vmem:[%s3269 + $0x139] sm:$0xff]
      %v3397 = vld [vmem:[%s3269 + $0x141] sm:$0xff]
      %v3398 = vld [vmem:[%s3269 + $0x151] sm:$0xff]
      %v3399 = vld [vmem:[%s3269 + $0x159] sm:$0xff]
      %v3400 = vld [vmem:[%s3269 + $0x169] sm:$0xff]
      %v3401 = vld [vmem:[%s3269 + $0x171] sm:$0xff]
      %v3402 = vlaneseq
      %v3403 = vshrl.u32 %v3402, 7
      %v3404 = vsub.s32 1, %v3403
      %v3405 = vrot.slane %v1259, %v3404
      %v3406 = vmul.f32 %v3370, %v3405
      %v3407 = vmul.f32 %v3371, %v3405
      %v3408 = vmul.f32 %v3372, %v3405
      %v3409 = vmul.f32 %v3373, %v3405
      %v3410 = vmul.f32 %v3374, %v3405
      %v3411 = vmul.f32 %v3375, %v3405
      %v3412 = vmul.f32 %v3376, %v3405
      %v3413 = vmul.f32 %v3377, %v3405
      %v3414 = vmul.f32 %v3378, %v3405
      %v3415 = vmul.f32 %v3379, %v3405
      %v3416 = vmul.f32 %v3380, %v3405
      %v3417 = vmul.f32 %v3381, %v3405
      %v3418 = vmul.f32 %v3382, %v3405
      %v3419 = vmul.f32 %v3383, %v3405
      %v3420 = vmul.f32 %v3384, %v3405
      %v3421 = vmul.f32 %v3385, %v3405
      %v3422 = vmul.f32 %v3386, %v3405
      %v3423 = vmul.f32 %v3387, %v3405
      %v3424 = vmul.f32 %v3388, %v3405
      %v3425 = vmul.f32 %v3389, %v3405
      %v3426 = vmul.f32 %v3390, %v3405
      %v3427 = vmul.f32 %v3391, %v3405
      %v3428 = vmul.f32 %v3392, %v3405
      %v3429 = vmul.f32 %v3393, %v3405
      %v3430 = vmul.f32 %v3394, %v3405
      %v3431 = vmul.f32 %v3395, %v3405
      %v3432 = vmul.f32 %v3396, %v3405
      %v3433 = vmul.f32 %v3397, %v3405
      %v3434 = vmul.f32 %v3398, %v3405
      %v3435 = vmul.f32 %v3399, %v3405
      %v3436 = vmul.f32 %v3400, %v3405
      %v3437 = vmul.f32 %v3401, %v3405
      %v3438 = vadd.f32 %v3338, %v3406
      %v3439 = vadd.f32 %v3339, %v3407
      %v3440 = vadd.f32 %v3340, %v3408
      %v3441 = vadd.f32 %v3341, %v3409
      %v3442 = vadd.f32 %v3342, %v3410
      %v3443 = vadd.f32 %v3343, %v3411
      %v3444 = vadd.f32 %v3344, %v3412
      %v3445 = vadd.f32 %v3345, %v3413
      %v3446 = vadd.f32 %v3346, %v3414
      %v3447 = vadd.f32 %v3347, %v3415
      %v3448 = vadd.f32 %v3348, %v3416
      %v3449 = vadd.f32 %v3349, %v3417
      %v3450 = vadd.f32 %v3350, %v3418
      %v3451 = vadd.f32 %v3351, %v3419
      %v3452 = vadd.f32 %v3352, %v3420
      %v3453 = vadd.f32 %v3353, %v3421
      %v3454 = vadd.f32 %v3354, %v3422
      %v3455 = vadd.f32 %v3355, %v3423
      %v3456 = vadd.f32 %v3356, %v3424
      %v3457 = vadd.f32 %v3357, %v3425
      %v3458 = vadd.f32 %v3358, %v3426
      %v3459 = vadd.f32 %v3359, %v3427
      %v3460 = vadd.f32 %v3360, %v3428
      %v3461 = vadd.f32 %v3361, %v3429
      %v3462 = vadd.f32 %v3362, %v3430
      %v3463 = vadd.f32 %v3363, %v3431
      %v3464 = vadd.f32 %v3364, %v3432
      %v3465 = vadd.f32 %v3365, %v3433
      %v3466 = vadd.f32 %v3366, %v3434
      %v3467 = vadd.f32 %v3367, %v3435
      %v3468 = vadd.f32 %v3368, %v3436
      %v3469 = vadd.f32 %v3369, %v3437
      %v3470 = vld [vmem:[%s3269 + $0x2] sm:$0xff]
      %v3471 = vld [vmem:[%s3269 + $0xa] sm:$0xff]
      %v3472 = vld [vmem:[%s3269 + $0x1a] sm:$0xff]
      %v3473 = vld [vmem:[%s3269 + $0x22] sm:$0xff]
      %v3474 = vld [vmem:[%s3269 + $0x32] sm:$0xff]
      %v3475 = vld [vmem:[%s3269 + $0x3a] sm:$0xff]
      %v3476 = vld [vmem:[%s3269 + $0x4a] sm:$0xff]
      %v3477 = vld [vmem:[%s3269 + $0x52] sm:$0xff]
      %v3478 = vld [vmem:[%s3269 + $0x62] sm:$0xff]
      %v3479 = vld [vmem:[%s3269 + $0x6a] sm:$0xff]
      %v3480 = vld [vmem:[%s3269 + $0x7a] sm:$0xff]
      %v3481 = vld [vmem:[%s3269 + $0x82] sm:$0xff]
      %v3482 = vld [vmem:[%s3269 + $0x92] sm:$0xff]
      %v3483 = vld [vmem:[%s3269 + $0x9a] sm:$0xff]
      %v3484 = vld [vmem:[%s3269 + $0xaa] sm:$0xff]
      %v3485 = vld [vmem:[%s3269 + $0xb2] sm:$0xff]
      %v3486 = vld [vmem:[%s3269 + $0xc2] sm:$0xff]
      %v3487 = vld [vmem:[%s3269 + $0xca] sm:$0xff]
      %v3488 = vld [vmem:[%s3269 + $0xda] sm:$0xff]
      %v3489 = vld [vmem:[%s3269 + $0xe2] sm:$0xff]
      %v3490 = vld [vmem:[%s3269 + $0xf2] sm:$0xff]
      %v3491 = vld [vmem:[%s3269 + $0xfa] sm:$0xff]
      %v3492 = vld [vmem:[%s3269 + $0x10a] sm:$0xff]
      %v3493 = vld [vmem:[%s3269 + $0x112] sm:$0xff]
      %v3494 = vld [vmem:[%s3269 + $0x122] sm:$0xff]
      %v3495 = vld [vmem:[%s3269 + $0x12a] sm:$0xff]
      %v3496 = vld [vmem:[%s3269 + $0x13a] sm:$0xff]
      %v3497 = vld [vmem:[%s3269 + $0x142] sm:$0xff]
      %v3498 = vld [vmem:[%s3269 + $0x152] sm:$0xff]
      %v3499 = vld [vmem:[%s3269 + $0x15a] sm:$0xff]
      %v3500 = vld [vmem:[%s3269 + $0x16a] sm:$0xff]
      %v3501 = vld [vmem:[%s3269 + $0x172] sm:$0xff]
      %v3502 = vlaneseq
      %v3503 = vshrl.u32 %v3502, 7
      %v3504 = vsub.s32 2, %v3503
      %v3505 = vrot.slane %v1259, %v3504
      %v3506 = vmul.f32 %v3470, %v3505
      %v3507 = vmul.f32 %v3471, %v3505
      %v3508 = vmul.f32 %v3472, %v3505
      %v3509 = vmul.f32 %v3473, %v3505
      %v3510 = vmul.f32 %v3474, %v3505
      %v3511 = vmul.f32 %v3475, %v3505
      %v3512 = vmul.f32 %v3476, %v3505
      %v3513 = vmul.f32 %v3477, %v3505
      %v3514 = vmul.f32 %v3478, %v3505
      %v3515 = vmul.f32 %v3479, %v3505
      %v3516 = vmul.f32 %v3480, %v3505
      %v3517 = vmul.f32 %v3481, %v3505
      %v3518 = vmul.f32 %v3482, %v3505
      %v3519 = vmul.f32 %v3483, %v3505
      %v3520 = vmul.f32 %v3484, %v3505
      %v3521 = vmul.f32 %v3485, %v3505
      %v3522 = vmul.f32 %v3486, %v3505
      %v3523 = vmul.f32 %v3487, %v3505
      %v3524 = vmul.f32 %v3488, %v3505
      %v3525 = vmul.f32 %v3489, %v3505
      %v3526 = vmul.f32 %v3490, %v3505
      %v3527 = vmul.f32 %v3491, %v3505
      %v3528 = vmul.f32 %v3492, %v3505
      %v3529 = vmul.f32 %v3493, %v3505
      %v3530 = vmul.f32 %v3494, %v3505
      %v3531 = vmul.f32 %v3495, %v3505
      %v3532 = vmul.f32 %v3496, %v3505
      %v3533 = vmul.f32 %v3497, %v3505
      %v3534 = vmul.f32 %v3498, %v3505
      %v3535 = vmul.f32 %v3499, %v3505
      %v3536 = vmul.f32 %v3500, %v3505
      %v3537 = vmul.f32 %v3501, %v3505
      %v3538 = vadd.f32 %v3438, %v3506
      %v3539 = vadd.f32 %v3439, %v3507
      %v3540 = vadd.f32 %v3440, %v3508
      %v3541 = vadd.f32 %v3441, %v3509
      %v3542 = vadd.f32 %v3442, %v3510
      %v3543 = vadd.f32 %v3443, %v3511
      %v3544 = vadd.f32 %v3444, %v3512
      %v3545 = vadd.f32 %v3445, %v3513
      %v3546 = vadd.f32 %v3446, %v3514
      %v3547 = vadd.f32 %v3447, %v3515
      %v3548 = vadd.f32 %v3448, %v3516
      %v3549 = vadd.f32 %v3449, %v3517
      %v3550 = vadd.f32 %v3450, %v3518
      %v3551 = vadd.f32 %v3451, %v3519
      %v3552 = vadd.f32 %v3452, %v3520
      %v3553 = vadd.f32 %v3453, %v3521
      %v3554 = vadd.f32 %v3454, %v3522
      %v3555 = vadd.f32 %v3455, %v3523
      %v3556 = vadd.f32 %v3456, %v3524
      %v3557 = vadd.f32 %v3457, %v3525
      %v3558 = vadd.f32 %v3458, %v3526
      %v3559 = vadd.f32 %v3459, %v3527
      %v3560 = vadd.f32 %v3460, %v3528
      %v3561 = vadd.f32 %v3461, %v3529
      %v3562 = vadd.f32 %v3462, %v3530
      %v3563 = vadd.f32 %v3463, %v3531
      %v3564 = vadd.f32 %v3464, %v3532
      %v3565 = vadd.f32 %v3465, %v3533
      %v3566 = vadd.f32 %v3466, %v3534
      %v3567 = vadd.f32 %v3467, %v3535
      %v3568 = vadd.f32 %v3468, %v3536
      %v3569 = vadd.f32 %v3469, %v3537
      %v3570 = vld [vmem:[%s3269 + $0x3] sm:$0xff]
      %v3571 = vld [vmem:[%s3269 + $0xb] sm:$0xff]
      %v3572 = vld [vmem:[%s3269 + $0x1b] sm:$0xff]
      %v3573 = vld [vmem:[%s3269 + $0x23] sm:$0xff]
      %v3574 = vld [vmem:[%s3269 + $0x33] sm:$0xff]
      %v3575 = vld [vmem:[%s3269 + $0x3b] sm:$0xff]
      %v3576 = vld [vmem:[%s3269 + $0x4b] sm:$0xff]
      %v3577 = vld [vmem:[%s3269 + $0x53] sm:$0xff]
      %v3578 = vld [vmem:[%s3269 + $0x63] sm:$0xff]
      %v3579 = vld [vmem:[%s3269 + $0x6b] sm:$0xff]
      %v3580 = vld [vmem:[%s3269 + $0x7b] sm:$0xff]
      %v3581 = vld [vmem:[%s3269 + $0x83] sm:$0xff]
      %v3582 = vld [vmem:[%s3269 + $0x93] sm:$0xff]
      %v3583 = vld [vmem:[%s3269 + $0x9b] sm:$0xff]
      %v3584 = vld [vmem:[%s3269 + $0xab] sm:$0xff]
      %v3585 = vld [vmem:[%s3269 + $0xb3] sm:$0xff]
      %v3586 = vld [vmem:[%s3269 + $0xc3] sm:$0xff]
      %v3587 = vld [vmem:[%s3269 + $0xcb] sm:$0xff]
      %v3588 = vld [vmem:[%s3269 + $0xdb] sm:$0xff]
      %v3589 = vld [vmem:[%s3269 + $0xe3] sm:$0xff]
      %v3590 = vld [vmem:[%s3269 + $0xf3] sm:$0xff]
      %v3591 = vld [vmem:[%s3269 + $0xfb] sm:$0xff]
      %v3592 = vld [vmem:[%s3269 + $0x10b] sm:$0xff]
      %v3593 = vld [vmem:[%s3269 + $0x113] sm:$0xff]
      %v3594 = vld [vmem:[%s3269 + $0x123] sm:$0xff]
      %v3595 = vld [vmem:[%s3269 + $0x12b] sm:$0xff]
      %v3596 = vld [vmem:[%s3269 + $0x13b] sm:$0xff]
      %v3597 = vld [vmem:[%s3269 + $0x143] sm:$0xff]
      %v3598 = vld [vmem:[%s3269 + $0x153] sm:$0xff]
      %v3599 = vld [vmem:[%s3269 + $0x15b] sm:$0xff]
      %v3600 = vld [vmem:[%s3269 + $0x16b] sm:$0xff]
      %v3601 = vld [vmem:[%s3269 + $0x173] sm:$0xff]
      %v3602 = vlaneseq
      %v3603 = vshrl.u32 %v3602, 7
      %v3604 = vsub.s32 3, %v3603
      %v3605 = vrot.slane %v1259, %v3604
      %v3606 = vmul.f32 %v3570, %v3605
      %v3607 = vmul.f32 %v3571, %v3605
      %v3608 = vmul.f32 %v3572, %v3605
      %v3609 = vmul.f32 %v3573, %v3605
      %v3610 = vmul.f32 %v3574, %v3605
      %v3611 = vmul.f32 %v3575, %v3605
      %v3612 = vmul.f32 %v3576, %v3605
      %v3613 = vmul.f32 %v3577, %v3605
      %v3614 = vmul.f32 %v3578, %v3605
      %v3615 = vmul.f32 %v3579, %v3605
      %v3616 = vmul.f32 %v3580, %v3605
      %v3617 = vmul.f32 %v3581, %v3605
      %v3618 = vmul.f32 %v3582, %v3605
      %v3619 = vmul.f32 %v3583, %v3605
      %v3620 = vmul.f32 %v3584, %v3605
      %v3621 = vmul.f32 %v3585, %v3605
      %v3622 = vmul.f32 %v3586, %v3605
      %v3623 = vmul.f32 %v3587, %v3605
      %v3624 = vmul.f32 %v3588, %v3605
      %v3625 = vmul.f32 %v3589, %v3605
      %v3626 = vmul.f32 %v3590, %v3605
      %v3627 = vmul.f32 %v3591, %v3605
      %v3628 = vmul.f32 %v3592, %v3605
      %v3629 = vmul.f32 %v3593, %v3605
      %v3630 = vmul.f32 %v3594, %v3605
      %v3631 = vmul.f32 %v3595, %v3605
      %v3632 = vmul.f32 %v3596, %v3605
      %v3633 = vmul.f32 %v3597, %v3605
      %v3634 = vmul.f32 %v3598, %v3605
      %v3635 = vmul.f32 %v3599, %v3605
      %v3636 = vmul.f32 %v3600, %v3605
      %v3637 = vmul.f32 %v3601, %v3605
      %v3638 = vadd.f32 %v3538, %v3606
      %v3639 = vadd.f32 %v3539, %v3607
      %v3640 = vadd.f32 %v3540, %v3608
      %v3641 = vadd.f32 %v3541, %v3609
      %v3642 = vadd.f32 %v3542, %v3610
      %v3643 = vadd.f32 %v3543, %v3611
      %v3644 = vadd.f32 %v3544, %v3612
      %v3645 = vadd.f32 %v3545, %v3613
      %v3646 = vadd.f32 %v3546, %v3614
      %v3647 = vadd.f32 %v3547, %v3615
      %v3648 = vadd.f32 %v3548, %v3616
      %v3649 = vadd.f32 %v3549, %v3617
      %v3650 = vadd.f32 %v3550, %v3618
      %v3651 = vadd.f32 %v3551, %v3619
      %v3652 = vadd.f32 %v3552, %v3620
      %v3653 = vadd.f32 %v3553, %v3621
      %v3654 = vadd.f32 %v3554, %v3622
      %v3655 = vadd.f32 %v3555, %v3623
      %v3656 = vadd.f32 %v3556, %v3624
      %v3657 = vadd.f32 %v3557, %v3625
      %v3658 = vadd.f32 %v3558, %v3626
      %v3659 = vadd.f32 %v3559, %v3627
      %v3660 = vadd.f32 %v3560, %v3628
      %v3661 = vadd.f32 %v3561, %v3629
      %v3662 = vadd.f32 %v3562, %v3630
      %v3663 = vadd.f32 %v3563, %v3631
      %v3664 = vadd.f32 %v3564, %v3632
      %v3665 = vadd.f32 %v3565, %v3633
      %v3666 = vadd.f32 %v3566, %v3634
      %v3667 = vadd.f32 %v3567, %v3635
      %v3668 = vadd.f32 %v3568, %v3636
      %v3669 = vadd.f32 %v3569, %v3637
      %v3670 = vld [vmem:[%s3269 + $0x4] sm:$0xff]
      %v3671 = vld [vmem:[%s3269 + $0xc] sm:$0xff]
      %v3672 = vld [vmem:[%s3269 + $0x1c] sm:$0xff]
      %v3673 = vld [vmem:[%s3269 + $0x24] sm:$0xff]
      %v3674 = vld [vmem:[%s3269 + $0x34] sm:$0xff]
      %v3675 = vld [vmem:[%s3269 + $0x3c] sm:$0xff]
      %v3676 = vld [vmem:[%s3269 + $0x4c] sm:$0xff]
      %v3677 = vld [vmem:[%s3269 + $0x54] sm:$0xff]
      %v3678 = vld [vmem:[%s3269 + $0x64] sm:$0xff]
      %v3679 = vld [vmem:[%s3269 + $0x6c] sm:$0xff]
      %v3680 = vld [vmem:[%s3269 + $0x7c] sm:$0xff]
      %v3681 = vld [vmem:[%s3269 + $0x84] sm:$0xff]
      %v3682 = vld [vmem:[%s3269 + $0x94] sm:$0xff]
      %v3683 = vld [vmem:[%s3269 + $0x9c] sm:$0xff]
      %v3684 = vld [vmem:[%s3269 + $0xac] sm:$0xff]
      %v3685 = vld [vmem:[%s3269 + $0xb4] sm:$0xff]
      %v3686 = vld [vmem:[%s3269 + $0xc4] sm:$0xff]
      %v3687 = vld [vmem:[%s3269 + $0xcc] sm:$0xff]
      %v3688 = vld [vmem:[%s3269 + $0xdc] sm:$0xff]
      %v3689 = vld [vmem:[%s3269 + $0xe4] sm:$0xff]
      %v3690 = vld [vmem:[%s3269 + $0xf4] sm:$0xff]
      %v3691 = vld [vmem:[%s3269 + $0xfc] sm:$0xff]
      %v3692 = vld [vmem:[%s3269 + $0x10c] sm:$0xff]
      %v3693 = vld [vmem:[%s3269 + $0x114] sm:$0xff]
      %v3694 = vld [vmem:[%s3269 + $0x124] sm:$0xff]
      %v3695 = vld [vmem:[%s3269 + $0x12c] sm:$0xff]
      %v3696 = vld [vmem:[%s3269 + $0x13c] sm:$0xff]
      %v3697 = vld [vmem:[%s3269 + $0x144] sm:$0xff]
      %v3698 = vld [vmem:[%s3269 + $0x154] sm:$0xff]
      %v3699 = vld [vmem:[%s3269 + $0x15c] sm:$0xff]
      %v3700 = vld [vmem:[%s3269 + $0x16c] sm:$0xff]
      %v3701 = vld [vmem:[%s3269 + $0x174] sm:$0xff]
      %v3702 = vlaneseq
      %v3703 = vshrl.u32 %v3702, 7
      %v3704 = vsub.s32 4, %v3703
      %v3705 = vrot.slane %v1259, %v3704
      %v3706 = vmul.f32 %v3670, %v3705
      %v3707 = vmul.f32 %v3671, %v3705
      %v3708 = vmul.f32 %v3672, %v3705
      %v3709 = vmul.f32 %v3673, %v3705
      %v3710 = vmul.f32 %v3674, %v3705
      %v3711 = vmul.f32 %v3675, %v3705
      %v3712 = vmul.f32 %v3676, %v3705
      %v3713 = vmul.f32 %v3677, %v3705
      %v3714 = vmul.f32 %v3678, %v3705
      %v3715 = vmul.f32 %v3679, %v3705
      %v3716 = vmul.f32 %v3680, %v3705
      %v3717 = vmul.f32 %v3681, %v3705
      %v3718 = vmul.f32 %v3682, %v3705
      %v3719 = vmul.f32 %v3683, %v3705
      %v3720 = vmul.f32 %v3684, %v3705
      %v3721 = vmul.f32 %v3685, %v3705
      %v3722 = vmul.f32 %v3686, %v3705
      %v3723 = vmul.f32 %v3687, %v3705
      %v3724 = vmul.f32 %v3688, %v3705
      %v3725 = vmul.f32 %v3689, %v3705
      %v3726 = vmul.f32 %v3690, %v3705
      %v3727 = vmul.f32 %v3691, %v3705
      %v3728 = vmul.f32 %v3692, %v3705
      %v3729 = vmul.f32 %v3693, %v3705
      %v3730 = vmul.f32 %v3694, %v3705
      %v3731 = vmul.f32 %v3695, %v3705
      %v3732 = vmul.f32 %v3696, %v3705
      %v3733 = vmul.f32 %v3697, %v3705
      %v3734 = vmul.f32 %v3698, %v3705
      %v3735 = vmul.f32 %v3699, %v3705
      %v3736 = vmul.f32 %v3700, %v3705
      %v3737 = vmul.f32 %v3701, %v3705
      %v3738 = vadd.f32 %v3638, %v3706
      %v3739 = vadd.f32 %v3639, %v3707
      %v3740 = vadd.f32 %v3640, %v3708
      %v3741 = vadd.f32 %v3641, %v3709
      %v3742 = vadd.f32 %v3642, %v3710
      %v3743 = vadd.f32 %v3643, %v3711
      %v3744 = vadd.f32 %v3644, %v3712
      %v3745 = vadd.f32 %v3645, %v3713
      %v3746 = vadd.f32 %v3646, %v3714
      %v3747 = vadd.f32 %v3647, %v3715
      %v3748 = vadd.f32 %v3648, %v3716
      %v3749 = vadd.f32 %v3649, %v3717
      %v3750 = vadd.f32 %v3650, %v3718
      %v3751 = vadd.f32 %v3651, %v3719
      %v3752 = vadd.f32 %v3652, %v3720
      %v3753 = vadd.f32 %v3653, %v3721
      %v3754 = vadd.f32 %v3654, %v3722
      %v3755 = vadd.f32 %v3655, %v3723
      %v3756 = vadd.f32 %v3656, %v3724
      %v3757 = vadd.f32 %v3657, %v3725
      %v3758 = vadd.f32 %v3658, %v3726
      %v3759 = vadd.f32 %v3659, %v3727
      %v3760 = vadd.f32 %v3660, %v3728
      %v3761 = vadd.f32 %v3661, %v3729
      %v3762 = vadd.f32 %v3662, %v3730
      %v3763 = vadd.f32 %v3663, %v3731
      %v3764 = vadd.f32 %v3664, %v3732
      %v3765 = vadd.f32 %v3665, %v3733
      %v3766 = vadd.f32 %v3666, %v3734
      %v3767 = vadd.f32 %v3667, %v3735
      %v3768 = vadd.f32 %v3668, %v3736
      %v3769 = vadd.f32 %v3669, %v3737
      %vm3770 = vcmp.gt.f32.partialorder %v3738, 0.0
      %vm3771 = vcmp.gt.f32.partialorder %v3739, 0.0
      %vm3772 = vcmp.gt.f32.partialorder %v3740, 0.0
      %vm3773 = vcmp.gt.f32.partialorder %v3741, 0.0
      %vm3774 = vcmp.gt.f32.partialorder %v3742, 0.0
      %vm3775 = vcmp.gt.f32.partialorder %v3743, 0.0
      %vm3776 = vcmp.gt.f32.partialorder %v3744, 0.0
      %vm3777 = vcmp.gt.f32.partialorder %v3745, 0.0
      %vm3778 = vcmp.gt.f32.partialorder %v3746, 0.0
      %vm3779 = vcmp.gt.f32.partialorder %v3747, 0.0
      %vm3780 = vcmp.gt.f32.partialorder %v3748, 0.0
      %vm3781 = vcmp.gt.f32.partialorder %v3749, 0.0
      %vm3782 = vcmp.gt.f32.partialorder %v3750, 0.0
      %vm3783 = vcmp.gt.f32.partialorder %v3751, 0.0
      %vm3784 = vcmp.gt.f32.partialorder %v3752, 0.0
      %vm3785 = vcmp.gt.f32.partialorder %v3753, 0.0
      %vm3786 = vcmp.gt.f32.partialorder %v3754, 0.0
      %vm3787 = vcmp.gt.f32.partialorder %v3755, 0.0
      %vm3788 = vcmp.gt.f32.partialorder %v3756, 0.0
      %vm3789 = vcmp.gt.f32.partialorder %v3757, 0.0
      %vm3790 = vcmp.gt.f32.partialorder %v3758, 0.0
      %vm3791 = vcmp.gt.f32.partialorder %v3759, 0.0
      %vm3792 = vcmp.gt.f32.partialorder %v3760, 0.0
      %vm3793 = vcmp.gt.f32.partialorder %v3761, 0.0
      %vm3794 = vcmp.gt.f32.partialorder %v3762, 0.0
      %vm3795 = vcmp.gt.f32.partialorder %v3763, 0.0
      %vm3796 = vcmp.gt.f32.partialorder %v3764, 0.0
      %vm3797 = vcmp.gt.f32.partialorder %v3765, 0.0
      %vm3798 = vcmp.gt.f32.partialorder %v3766, 0.0
      %vm3799 = vcmp.gt.f32.partialorder %v3767, 0.0
      %vm3800 = vcmp.gt.f32.partialorder %v3768, 0.0
      %vm3801 = vcmp.gt.f32.partialorder %v3769, 0.0
      %v3802 = vmul.f32 %v3738, 0.01
      %v3803 = vmul.f32 %v3739, 0.01
      %v3804 = vmul.f32 %v3740, 0.01
      %v3805 = vmul.f32 %v3741, 0.01
      %v3806 = vmul.f32 %v3742, 0.01
      %v3807 = vmul.f32 %v3743, 0.01
      %v3808 = vmul.f32 %v3744, 0.01
      %v3809 = vmul.f32 %v3745, 0.01
      %v3810 = vmul.f32 %v3746, 0.01
      %v3811 = vmul.f32 %v3747, 0.01
      %v3812 = vmul.f32 %v3748, 0.01
      %v3813 = vmul.f32 %v3749, 0.01
      %v3814 = vmul.f32 %v3750, 0.01
      %v3815 = vmul.f32 %v3751, 0.01
      %v3816 = vmul.f32 %v3752, 0.01
      %v3817 = vmul.f32 %v3753, 0.01
      %v3818 = vmul.f32 %v3754, 0.01
      %v3819 = vmul.f32 %v3755, 0.01
      %v3820 = vmul.f32 %v3756, 0.01
      %v3821 = vmul.f32 %v3757, 0.01
      %v3822 = vmul.f32 %v3758, 0.01
      %v3823 = vmul.f32 %v3759, 0.01
      %v3824 = vmul.f32 %v3760, 0.01
      %v3825 = vmul.f32 %v3761, 0.01
      %v3826 = vmul.f32 %v3762, 0.01
      %v3827 = vmul.f32 %v3763, 0.01
      %v3828 = vmul.f32 %v3764, 0.01
      %v3829 = vmul.f32 %v3765, 0.01
      %v3830 = vmul.f32 %v3766, 0.01
      %v3831 = vmul.f32 %v3767, 0.01
      %v3832 = vmul.f32 %v3768, 0.01
      %v3833 = vmul.f32 %v3769, 0.01
      %v3834 = vsel %vm3770, %v3738, %v3802
      %v3835 = vsel %vm3771, %v3739, %v3803
      %v3836 = vsel %vm3772, %v3740, %v3804
      %v3837 = vsel %vm3773, %v3741, %v3805
      %v3838 = vsel %vm3774, %v3742, %v3806
      %v3839 = vsel %vm3775, %v3743, %v3807
      %v3840 = vsel %vm3776, %v3744, %v3808
      %v3841 = vsel %vm3777, %v3745, %v3809
      %v3842 = vsel %vm3778, %v3746, %v3810
      %v3843 = vsel %vm3779, %v3747, %v3811
      %v3844 = vsel %vm3780, %v3748, %v3812
      %v3845 = vsel %vm3781, %v3749, %v3813
      %v3846 = vsel %vm3782, %v3750, %v3814
      %v3847 = vsel %vm3783, %v3751, %v3815
      %v3848 = vsel %vm3784, %v3752, %v3816
      %v3849 = vsel %vm3785, %v3753, %v3817
      %v3850 = vsel %vm3786, %v3754, %v3818
      %v3851 = vsel %vm3787, %v3755, %v3819
      %v3852 = vsel %vm3788, %v3756, %v3820
      %v3853 = vsel %vm3789, %v3757, %v3821
      %v3854 = vsel %vm3790, %v3758, %v3822
      %v3855 = vsel %vm3791, %v3759, %v3823
      %v3856 = vsel %vm3792, %v3760, %v3824
      %v3857 = vsel %vm3793, %v3761, %v3825
      %v3858 = vsel %vm3794, %v3762, %v3826
      %v3859 = vsel %vm3795, %v3763, %v3827
      %v3860 = vsel %vm3796, %v3764, %v3828
      %v3861 = vsel %vm3797, %v3765, %v3829
      %v3862 = vsel %vm3798, %v3766, %v3830
      %v3863 = vsel %vm3799, %v3767, %v3831
      %v3864 = vsel %vm3800, %v3768, %v3832
      %v3865 = vsel %vm3801, %v3769, %v3833
      %vm3866 = vcmask 15360
      %3867 = vst.msk [vmem:[%s455] sm:$0xff] %vm3866, %v947
      %3868 = vst.msk [vmem:[%s455 + $0x8] sm:$0xff] %vm3866, %v948
      %3869 = vst.msk [vmem:[%s455 + $0x10] sm:$0xff] %vm3866, %v949
      %3870 = vst.msk [vmem:[%s455 + $0x18] sm:$0xff] %vm3866, %v950
      %3871 = vst.msk [vmem:[%s455 + $0x20] sm:$0xff] %vm3866, %v951
      %3872 = vst.msk [vmem:[%s455 + $0x28] sm:$0xff] %vm3866, %v952
      %3873 = vst.msk [vmem:[%s455 + $0x30] sm:$0xff] %vm3866, %v953
      %3874 = vst.msk [vmem:[%s455 + $0x38] sm:$0xff] %vm3866, %v954
      %3875 = vst.msk [vmem:[%s455 + $0x40] sm:$0xff] %vm3866, %v955
      %3876 = vst.msk [vmem:[%s455 + $0x48] sm:$0xff] %vm3866, %v956
      %3877 = vst.msk [vmem:[%s455 + $0x50] sm:$0xff] %vm3866, %v957
      %3878 = vst.msk [vmem:[%s455 + $0x58] sm:$0xff] %vm3866, %v958
      %3879 = vst.msk [vmem:[%s455 + $0x60] sm:$0xff] %vm3866, %v959
      %3880 = vst.msk [vmem:[%s455 + $0x68] sm:$0xff] %vm3866, %v960
      %3881 = vst.msk [vmem:[%s455 + $0x70] sm:$0xff] %vm3866, %v961
      %3882 = vst.msk [vmem:[%s455 + $0x78] sm:$0xff] %vm3866, %v962
      %3883 = vst.msk [vmem:[%s455 + $0x80] sm:$0xff] %vm3866, %v963
      %3884 = vst.msk [vmem:[%s455 + $0x88] sm:$0xff] %vm3866, %v964
      %3885 = vst.msk [vmem:[%s455 + $0x90] sm:$0xff] %vm3866, %v965
      %3886 = vst.msk [vmem:[%s455 + $0x98] sm:$0xff] %vm3866, %v966
      %3887 = vst.msk [vmem:[%s455 + $0xa0] sm:$0xff] %vm3866, %v967
      %3888 = vst.msk [vmem:[%s455 + $0xa8] sm:$0xff] %vm3866, %v968
      %3889 = vst.msk [vmem:[%s455 + $0xb0] sm:$0xff] %vm3866, %v969
      %3890 = vst.msk [vmem:[%s455 + $0xb8] sm:$0xff] %vm3866, %v970
      %3891 = vst.msk [vmem:[%s455 + $0xc0] sm:$0xff] %vm3866, %v971
      %3892 = vst.msk [vmem:[%s455 + $0xc8] sm:$0xff] %vm3866, %v972
      %3893 = vst.msk [vmem:[%s455 + $0xd0] sm:$0xff] %vm3866, %v973
      %3894 = vst.msk [vmem:[%s455 + $0xd8] sm:$0xff] %vm3866, %v974
      %3895 = vst.msk [vmem:[%s455 + $0xe0] sm:$0xff] %vm3866, %v975
      %3896 = vst.msk [vmem:[%s455 + $0xe8] sm:$0xff] %vm3866, %v976
      %3897 = vst.msk [vmem:[%s455 + $0xf0] sm:$0xff] %vm3866, %v977
      %3898 = vst.msk [vmem:[%s455 + $0xf8] sm:$0xff] %vm3866, %v978
      %3931 = vrot.lane.b32.xlu0 %v3834, 2
      %v3932 = vpop.permute.xlu0 %3931
      %3933 = vrot.lane.b32.xlu0 %v3835, 2
      %v3934 = vpop.permute.xlu0 %3933
      %3935 = vrot.lane.b32.xlu0 %v3836, 2
      %v3936 = vpop.permute.xlu0 %3935
      %3937 = vrot.lane.b32.xlu0 %v3837, 2
      %v3938 = vpop.permute.xlu0 %3937
      %3939 = vrot.lane.b32.xlu0 %v3838, 2
      %v3940 = vpop.permute.xlu0 %3939
      %3941 = vrot.lane.b32.xlu0 %v3839, 2
      %v3942 = vpop.permute.xlu0 %3941
      %3943 = vrot.lane.b32.xlu0 %v3840, 2
      %v3944 = vpop.permute.xlu0 %3943
      %3945 = vrot.lane.b32.xlu0 %v3841, 2
      %v3946 = vpop.permute.xlu0 %3945
      %3947 = vrot.lane.b32.xlu0 %v3842, 2
      %v3948 = vpop.permute.xlu0 %3947
      %3949 = vrot.lane.b32.xlu0 %v3843, 2
      %v3950 = vpop.permute.xlu0 %3949
      %3951 = vrot.lane.b32.xlu0 %v3844, 2
      %v3952 = vpop.permute.xlu0 %3951
      %3953 = vrot.lane.b32.xlu0 %v3845, 2
      %v3954 = vpop.permute.xlu0 %3953
      %3955 = vrot.lane.b32.xlu0 %v3846, 2
      %v3956 = vpop.permute.xlu0 %3955
      %3957 = vrot.lane.b32.xlu0 %v3847, 2
      %v3958 = vpop.permute.xlu0 %3957
      %3959 = vrot.lane.b32.xlu0 %v3848, 2
      %v3960 = vpop.permute.xlu0 %3959
      %3961 = vrot.lane.b32.xlu0 %v3849, 2
      %v3962 = vpop.permute.xlu0 %3961
      %3963 = vrot.lane.b32.xlu0 %v3850, 2
      %v3964 = vpop.permute.xlu0 %3963
      %3965 = vrot.lane.b32.xlu0 %v3851, 2
      %v3966 = vpop.permute.xlu0 %3965
      %3967 = vrot.lane.b32.xlu0 %v3852, 2
      %v3968 = vpop.permute.xlu0 %3967
      %3969 = vrot.lane.b32.xlu0 %v3853, 2
      %v3970 = vpop.permute.xlu0 %3969
      %3971 = vrot.lane.b32.xlu0 %v3854, 2
      %v3972 = vpop.permute.xlu0 %3971
      %3973 = vrot.lane.b32.xlu0 %v3855, 2
      %v3974 = vpop.permute.xlu0 %3973
      %3975 = vrot.lane.b32.xlu0 %v3856, 2
      %v3976 = vpop.permute.xlu0 %3975
      %3977 = vrot.lane.b32.xlu0 %v3857, 2
      %v3978 = vpop.permute.xlu0 %3977
      %3979 = vrot.lane.b32.xlu0 %v3858, 2
      %v3980 = vpop.permute.xlu0 %3979
      %3981 = vrot.lane.b32.xlu0 %v3859, 2
      %v3982 = vpop.permute.xlu0 %3981
      %3983 = vrot.lane.b32.xlu0 %v3860, 2
      %v3984 = vpop.permute.xlu0 %3983
      %3985 = vrot.lane.b32.xlu0 %v3861, 2
      %v3986 = vpop.permute.xlu0 %3985
      %3987 = vrot.lane.b32.xlu0 %v3862, 2
      %v3988 = vpop.permute.xlu0 %3987
      %3989 = vrot.lane.b32.xlu0 %v3863, 2
      %v3990 = vpop.permute.xlu0 %3989
      %3991 = vrot.lane.b32.xlu0 %v3864, 2
      %v3992 = vpop.permute.xlu0 %3991
      %3993 = vrot.lane.b32.xlu0 %v3865, 2
      %v3994 = vpop.permute.xlu0 %3993
      %vm4027 = vcmask 31760
      %4028 = vst.msk [vmem:[%s455] sm:$0xff] %vm4027, %v3932
      %4029 = vst.msk [vmem:[%s455 + $0x8] sm:$0xff] %vm4027, %v3934
      %4030 = vst.msk [vmem:[%s455 + $0x10] sm:$0xff] %vm4027, %v3936
      %4031 = vst.msk [vmem:[%s455 + $0x18] sm:$0xff] %vm4027, %v3938
      %4032 = vst.msk [vmem:[%s455 + $0x20] sm:$0xff] %vm4027, %v3940
      %4033 = vst.msk [vmem:[%s455 + $0x28] sm:$0xff] %vm4027, %v3942
      %4034 = vst.msk [vmem:[%s455 + $0x30] sm:$0xff] %vm4027, %v3944
      %4035 = vst.msk [vmem:[%s455 + $0x38] sm:$0xff] %vm4027, %v3946
      %4036 = vst.msk [vmem:[%s455 + $0x40] sm:$0xff] %vm4027, %v3948
      %4037 = vst.msk [vmem:[%s455 + $0x48] sm:$0xff] %vm4027, %v3950
      %4038 = vst.msk [vmem:[%s455 + $0x50] sm:$0xff] %vm4027, %v3952
      %4039 = vst.msk [vmem:[%s455 + $0x58] sm:$0xff] %vm4027, %v3954
      %4040 = vst.msk [vmem:[%s455 + $0x60] sm:$0xff] %vm4027, %v3956
      %4041 = vst.msk [vmem:[%s455 + $0x68] sm:$0xff] %vm4027, %v3958
      %4042 = vst.msk [vmem:[%s455 + $0x70] sm:$0xff] %vm4027, %v3960
      %4043 = vst.msk [vmem:[%s455 + $0x78] sm:$0xff] %vm4027, %v3962
      %4044 = vst.msk [vmem:[%s455 + $0x80] sm:$0xff] %vm4027, %v3964
      %4045 = vst.msk [vmem:[%s455 + $0x88] sm:$0xff] %vm4027, %v3966
      %4046 = vst.msk [vmem:[%s455 + $0x90] sm:$0xff] %vm4027, %v3968
      %4047 = vst.msk [vmem:[%s455 + $0x98] sm:$0xff] %vm4027, %v3970
      %4048 = vst.msk [vmem:[%s455 + $0xa0] sm:$0xff] %vm4027, %v3972
      %4049 = vst.msk [vmem:[%s455 + $0xa8] sm:$0xff] %vm4027, %v3974
      %4050 = vst.msk [vmem:[%s455 + $0xb0] sm:$0xff] %vm4027, %v3976
      %4051 = vst.msk [vmem:[%s455 + $0xb8] sm:$0xff] %vm4027, %v3978
      %4052 = vst.msk [vmem:[%s455 + $0xc0] sm:$0xff] %vm4027, %v3980
      %4053 = vst.msk [vmem:[%s455 + $0xc8] sm:$0xff] %vm4027, %v3982
      %4054 = vst.msk [vmem:[%s455 + $0xd0] sm:$0xff] %vm4027, %v3984
      %4055 = vst.msk [vmem:[%s455 + $0xd8] sm:$0xff] %vm4027, %v3986
      %4056 = vst.msk [vmem:[%s455 + $0xe0] sm:$0xff] %vm4027, %v3988
      %4057 = vst.msk [vmem:[%s455 + $0xe8] sm:$0xff] %vm4027, %v3990
      %4058 = vst.msk [vmem:[%s455 + $0xf0] sm:$0xff] %vm4027, %v3992
      %4059 = vst.msk [vmem:[%s455 + $0xf8] sm:$0xff] %vm4027, %v3994
      %4092 = vrot.lane.b32.xlu0 %v947, 2
      %v4093 = vpop.permute.xlu0 %4092
      %4094 = vrot.lane.b32.xlu0 %v948, 2
      %v4095 = vpop.permute.xlu0 %4094
      %4096 = vrot.lane.b32.xlu0 %v949, 2
      %v4097 = vpop.permute.xlu0 %4096
      %4098 = vrot.lane.b32.xlu0 %v950, 2
      %v4099 = vpop.permute.xlu0 %4098
      %4100 = vrot.lane.b32.xlu0 %v951, 2
      %v4101 = vpop.permute.xlu0 %4100
      %4102 = vrot.lane.b32.xlu0 %v952, 2
      %v4103 = vpop.permute.xlu0 %4102
      %4104 = vrot.lane.b32.xlu0 %v953, 2
      %v4105 = vpop.permute.xlu0 %4104
      %4106 = vrot.lane.b32.xlu0 %v954, 2
      %v4107 = vpop.permute.xlu0 %4106
      %4108 = vrot.lane.b32.xlu0 %v955, 2
      %v4109 = vpop.permute.xlu0 %4108
      %4110 = vrot.lane.b32.xlu0 %v956, 2
      %v4111 = vpop.permute.xlu0 %4110
      %4112 = vrot.lane.b32.xlu0 %v957, 2
      %v4113 = vpop.permute.xlu0 %4112
      %4114 = vrot.lane.b32.xlu0 %v958, 2
      %v4115 = vpop.permute.xlu0 %4114
      %4116 = vrot.lane.b32.xlu0 %v959, 2
      %v4117 = vpop.permute.xlu0 %4116
      %4118 = vrot.lane.b32.xlu0 %v960, 2
      %v4119 = vpop.permute.xlu0 %4118
      %4120 = vrot.lane.b32.xlu0 %v961, 2
      %v4121 = vpop.permute.xlu0 %4120
      %4122 = vrot.lane.b32.xlu0 %v962, 2
      %v4123 = vpop.permute.xlu0 %4122
      %4124 = vrot.lane.b32.xlu0 %v963, 2
      %v4125 = vpop.permute.xlu0 %4124
      %4126 = vrot.lane.b32.xlu0 %v964, 2
      %v4127 = vpop.permute.xlu0 %4126
      %4128 = vrot.lane.b32.xlu0 %v965, 2
      %v4129 = vpop.permute.xlu0 %4128
      %4130 = vrot.lane.b32.xlu0 %v966, 2
      %v4131 = vpop.permute.xlu0 %4130
      %4132 = vrot.lane.b32.xlu0 %v967, 2
      %v4133 = vpop.permute.xlu0 %4132
      %4134 = vrot.lane.b32.xlu0 %v968, 2
      %v4135 = vpop.permute.xlu0 %4134
      %4136 = vrot.lane.b32.xlu0 %v969, 2
      %v4137 = vpop.permute.xlu0 %4136
      %4138 = vrot.lane.b32.xlu0 %v970, 2
      %v4139 = vpop.permute.xlu0 %4138
      %4140 = vrot.lane.b32.xlu0 %v971, 2
      %v4141 = vpop.permute.xlu0 %4140
      %4142 = vrot.lane.b32.xlu0 %v972, 2
      %v4143 = vpop.permute.xlu0 %4142
      %4144 = vrot.lane.b32.xlu0 %v973, 2
      %v4145 = vpop.permute.xlu0 %4144
      %4146 = vrot.lane.b32.xlu0 %v974, 2
      %v4147 = vpop.permute.xlu0 %4146
      %4148 = vrot.lane.b32.xlu0 %v975, 2
      %v4149 = vpop.permute.xlu0 %4148
      %4150 = vrot.lane.b32.xlu0 %v976, 2
      %v4151 = vpop.permute.xlu0 %4150
      %4152 = vrot.lane.b32.xlu0 %v977, 2
      %v4153 = vpop.permute.xlu0 %4152
      %4154 = vrot.lane.b32.xlu0 %v978, 2
      %v4155 = vpop.permute.xlu0 %4154
      %vm4188 = vcmask 48160
      %4189 = vst.msk [vmem:[%s455] sm:$0xff] %vm4188, %v4093
      %4190 = vst.msk [vmem:[%s455 + $0x8] sm:$0xff] %vm4188, %v4095
      %4191 = vst.msk [vmem:[%s455 + $0x10] sm:$0xff] %vm4188, %v4097
      %4192 = vst.msk [vmem:[%s455 + $0x18] sm:$0xff] %vm4188, %v4099
      %4193 = vst.msk [vmem:[%s455 + $0x20] sm:$0xff] %vm4188, %v4101
      %4194 = vst.msk [vmem:[%s455 + $0x28] sm:$0xff] %vm4188, %v4103
      %4195 = vst.msk [vmem:[%s455 + $0x30] sm:$0xff] %vm4188, %v4105
      %4196 = vst.msk [vmem:[%s455 + $0x38] sm:$0xff] %vm4188, %v4107
      %4197 = vst.msk [vmem:[%s455 + $0x40] sm:$0xff] %vm4188, %v4109
      %4198 = vst.msk [vmem:[%s455 + $0x48] sm:$0xff] %vm4188, %v4111
      %4199 = vst.msk [vmem:[%s455 + $0x50] sm:$0xff] %vm4188, %v4113
      %4200 = vst.msk [vmem:[%s455 + $0x58] sm:$0xff] %vm4188, %v4115
      %4201 = vst.msk [vmem:[%s455 + $0x60] sm:$0xff] %vm4188, %v4117
      %4202 = vst.msk [vmem:[%s455 + $0x68] sm:$0xff] %vm4188, %v4119
      %4203 = vst.msk [vmem:[%s455 + $0x70] sm:$0xff] %vm4188, %v4121
      %4204 = vst.msk [vmem:[%s455 + $0x78] sm:$0xff] %vm4188, %v4123
      %4205 = vst.msk [vmem:[%s455 + $0x80] sm:$0xff] %vm4188, %v4125
      %4206 = vst.msk [vmem:[%s455 + $0x88] sm:$0xff] %vm4188, %v4127
      %4207 = vst.msk [vmem:[%s455 + $0x90] sm:$0xff] %vm4188, %v4129
      %4208 = vst.msk [vmem:[%s455 + $0x98] sm:$0xff] %vm4188, %v4131
      %4209 = vst.msk [vmem:[%s455 + $0xa0] sm:$0xff] %vm4188, %v4133
      %4210 = vst.msk [vmem:[%s455 + $0xa8] sm:$0xff] %vm4188, %v4135
      %4211 = vst.msk [vmem:[%s455 + $0xb0] sm:$0xff] %vm4188, %v4137
      %4212 = vst.msk [vmem:[%s455 + $0xb8] sm:$0xff] %vm4188, %v4139
      %4213 = vst.msk [vmem:[%s455 + $0xc0] sm:$0xff] %vm4188, %v4141
      %4214 = vst.msk [vmem:[%s455 + $0xc8] sm:$0xff] %vm4188, %v4143
      %4215 = vst.msk [vmem:[%s455 + $0xd0] sm:$0xff] %vm4188, %v4145
      %4216 = vst.msk [vmem:[%s455 + $0xd8] sm:$0xff] %vm4188, %v4147
      %4217 = vst.msk [vmem:[%s455 + $0xe0] sm:$0xff] %vm4188, %v4149
      %4218 = vst.msk [vmem:[%s455 + $0xe8] sm:$0xff] %vm4188, %v4151
      %4219 = vst.msk [vmem:[%s455 + $0xf0] sm:$0xff] %vm4188, %v4153
      %4220 = vst.msk [vmem:[%s455 + $0xf8] sm:$0xff] %vm4188, %v4155
      %4221 = vrot.lane.b32.xlu0 %v3834, 4
      %v4222 = vpop.permute.xlu0 %4221
      %4223 = vrot.lane.b32.xlu0 %v3835, 4
      %v4224 = vpop.permute.xlu0 %4223
      %4225 = vrot.lane.b32.xlu0 %v3836, 4
      %v4226 = vpop.permute.xlu0 %4225
      %4227 = vrot.lane.b32.xlu0 %v3837, 4
      %v4228 = vpop.permute.xlu0 %4227
      %4229 = vrot.lane.b32.xlu0 %v3838, 4
      %v4230 = vpop.permute.xlu0 %4229
      %4231 = vrot.lane.b32.xlu0 %v3839, 4
      %v4232 = vpop.permute.xlu0 %4231
      %4233 = vrot.lane.b32.xlu0 %v3840, 4
      %v4234 = vpop.permute.xlu0 %4233
      %4235 = vrot.lane.b32.xlu0 %v3841, 4
      %v4236 = vpop.permute.xlu0 %4235
      %4237 = vrot.lane.b32.xlu0 %v3842, 4
      %v4238 = vpop.permute.xlu0 %4237
      %4239 = vrot.lane.b32.xlu0 %v3843, 4
      %v4240 = vpop.permute.xlu0 %4239
      %4241 = vrot.lane.b32.xlu0 %v3844, 4
      %v4242 = vpop.permute.xlu0 %4241
      %4243 = vrot.lane.b32.xlu0 %v3845, 4
      %v4244 = vpop.permute.xlu0 %4243
      %4245 = vrot.lane.b32.xlu0 %v3846, 4
      %v4246 = vpop.permute.xlu0 %4245
      %4247 = vrot.lane.b32.xlu0 %v3847, 4
      %v4248 = vpop.permute.xlu0 %4247
      %4249 = vrot.lane.b32.xlu0 %v3848, 4
      %v4250 = vpop.permute.xlu0 %4249
      %4251 = vrot.lane.b32.xlu0 %v3849, 4
      %v4252 = vpop.permute.xlu0 %4251
      %4253 = vrot.lane.b32.xlu0 %v3850, 4
      %v4254 = vpop.permute.xlu0 %4253
      %4255 = vrot.lane.b32.xlu0 %v3851, 4
      %v4256 = vpop.permute.xlu0 %4255
      %4257 = vrot.lane.b32.xlu0 %v3852, 4
      %v4258 = vpop.permute.xlu0 %4257
      %4259 = vrot.lane.b32.xlu0 %v3853, 4
      %v4260 = vpop.permute.xlu0 %4259
      %4261 = vrot.lane.b32.xlu0 %v3854, 4
      %v4262 = vpop.permute.xlu0 %4261
      %4263 = vrot.lane.b32.xlu0 %v3855, 4
      %v4264 = vpop.permute.xlu0 %4263
      %4265 = vrot.lane.b32.xlu0 %v3856, 4
      %v4266 = vpop.permute.xlu0 %4265
      %4267 = vrot.lane.b32.xlu0 %v3857, 4
      %v4268 = vpop.permute.xlu0 %4267
      %4269 = vrot.lane.b32.xlu0 %v3858, 4
      %v4270 = vpop.permute.xlu0 %4269
      %4271 = vrot.lane.b32.xlu0 %v3859, 4
      %v4272 = vpop.permute.xlu0 %4271
      %4273 = vrot.lane.b32.xlu0 %v3860, 4
      %v4274 = vpop.permute.xlu0 %4273
      %4275 = vrot.lane.b32.xlu0 %v3861, 4
      %v4276 = vpop.permute.xlu0 %4275
      %4277 = vrot.lane.b32.xlu0 %v3862, 4
      %v4278 = vpop.permute.xlu0 %4277
      %4279 = vrot.lane.b32.xlu0 %v3863, 4
      %v4280 = vpop.permute.xlu0 %4279
      %4281 = vrot.lane.b32.xlu0 %v3864, 4
      %v4282 = vpop.permute.xlu0 %4281
      %4283 = vrot.lane.b32.xlu0 %v3865, 4
      %v4284 = vpop.permute.xlu0 %4283
      %vm4317 = vcmask 64560
      %4318 = vst.msk [vmem:[%s455] sm:$0xff] %vm4317, %v4222
      %4319 = vst.msk [vmem:[%s455 + $0x8] sm:$0xff] %vm4317, %v4224
      %4320 = vst.msk [vmem:[%s455 + $0x10] sm:$0xff] %vm4317, %v4226
      %4321 = vst.msk [vmem:[%s455 + $0x18] sm:$0xff] %vm4317, %v4228
      %4322 = vst.msk [vmem:[%s455 + $0x20] sm:$0xff] %vm4317, %v4230
      %4323 = vst.msk [vmem:[%s455 + $0x28] sm:$0xff] %vm4317, %v4232
      %4324 = vst.msk [vmem:[%s455 + $0x30] sm:$0xff] %vm4317, %v4234
      %4325 = vst.msk [vmem:[%s455 + $0x38] sm:$0xff] %vm4317, %v4236
      %4326 = vst.msk [vmem:[%s455 + $0x40] sm:$0xff] %vm4317, %v4238
      %4327 = vst.msk [vmem:[%s455 + $0x48] sm:$0xff] %vm4317, %v4240
      %4328 = vst.msk [vmem:[%s455 + $0x50] sm:$0xff] %vm4317, %v4242
      %4329 = vst.msk [vmem:[%s455 + $0x58] sm:$0xff] %vm4317, %v4244
      %4330 = vst.msk [vmem:[%s455 + $0x60] sm:$0xff] %vm4317, %v4246
      %4331 = vst.msk [vmem:[%s455 + $0x68] sm:$0xff] %vm4317, %v4248
      %4332 = vst.msk [vmem:[%s455 + $0x70] sm:$0xff] %vm4317, %v4250
      %4333 = vst.msk [vmem:[%s455 + $0x78] sm:$0xff] %vm4317, %v4252
      %4334 = vst.msk [vmem:[%s455 + $0x80] sm:$0xff] %vm4317, %v4254
      %4335 = vst.msk [vmem:[%s455 + $0x88] sm:$0xff] %vm4317, %v4256
      %4336 = vst.msk [vmem:[%s455 + $0x90] sm:$0xff] %vm4317, %v4258
      %4337 = vst.msk [vmem:[%s455 + $0x98] sm:$0xff] %vm4317, %v4260
      %4338 = vst.msk [vmem:[%s455 + $0xa0] sm:$0xff] %vm4317, %v4262
      %4339 = vst.msk [vmem:[%s455 + $0xa8] sm:$0xff] %vm4317, %v4264
      %4340 = vst.msk [vmem:[%s455 + $0xb0] sm:$0xff] %vm4317, %v4266
      %4341 = vst.msk [vmem:[%s455 + $0xb8] sm:$0xff] %vm4317, %v4268
      %4342 = vst.msk [vmem:[%s455 + $0xc0] sm:$0xff] %vm4317, %v4270
      %4343 = vst.msk [vmem:[%s455 + $0xc8] sm:$0xff] %vm4317, %v4272
      %4344 = vst.msk [vmem:[%s455 + $0xd0] sm:$0xff] %vm4317, %v4274
      %4345 = vst.msk [vmem:[%s455 + $0xd8] sm:$0xff] %vm4317, %v4276
      %4346 = vst.msk [vmem:[%s455 + $0xe0] sm:$0xff] %vm4317, %v4278
      %4347 = vst.msk [vmem:[%s455 + $0xe8] sm:$0xff] %vm4317, %v4280
      %4348 = vst.msk [vmem:[%s455 + $0xf0] sm:$0xff] %vm4317, %v4282
      %4349 = vst.msk [vmem:[%s455 + $0xf8] sm:$0xff] %vm4317, %v4284
      %s4350 = smul.u32 16, %s23
      %p4351 = scmp.lt.s32.totalorder %s22, 1
      %s4352 = scalar_select %p4351, %s22, 1
      %p4353 = scmp.lt.s32.totalorder %s4350, 15
      %s4354 = scalar_select %p4353, %s4350, 15
      %s4355 = smul.addr %s4354, 2
      %s4356 = smul.addr %s4352, 32
      %s4357 = sadd.s32 %s4355, %s4356
      %s4358 = smul.addr %s4357, 8
      %s4359 = scalar_lea.vmem %s7, %s4358
      // Predicated region
      $region61: #{tpu_custom_call.1} parent=47 // pred_check
        %p4360 = pneg %p234
      $region62: #{tpu_custom_call.1} parent=47 // pred_check_branch
        %4362 = sbr.rel (%p4360) target = $region64
      $region63: #{tpu_custom_call.1} parent=47 // pred_region
        %s4363 = smul.u32 16, %s23
      $region64: #{tpu_custom_call.1} parent=47 // pred_fallthru
        _
    $region48: #{tpu_custom_call.1} parent=5 // pred_fallthru
      _
    %p4364 = scmp.le.s32.totalorder 2, %s13
    // Predicated region
    $region65: #{tpu_custom_call.1} parent=5 // pred_check
      %p4365 = pneg %p4364
    $region66: #{tpu_custom_call.1} parent=5 // pred_check_branch
      %4367 = sbr.rel (%p4365) target = $region68
    $region67: #{tpu_custom_call.1} parent=5 // pred_region
      %s4368 = ssub.s32 %s13, 2
      // Predicated region
      $region69: #{tpu_custom_call.1} parent=67 // pred_check
        %p4369 = pneg %p240
      $region70: #{tpu_custom_call.1} parent=67 // pred_check_branch
        %4371 = sbr.rel (%p4369) target = $region72
      $region71: #{tpu_custom_call.1} parent=67 // pred_region
        %s4372 = smul.u32 16, %s25
        %p4373 = scmp.lt.s32.totalorder %s24, 1
        %s4374 = scalar_select %p4373, %s24, 1
        %p4375 = scmp.lt.s32.totalorder %s4372, 15
        %s4376 = scalar_select %p4375, %s4372, 15
        %s4377 = smul.addr %s4376, 2
        %s4378 = smul.addr %s4374, 32
        %s4379 = sadd.s32 %s4377, %s4378
        %s4380 = smul.addr %s4379, 8
        %s4381 = scalar_lea.vmem %s7, %s4380
      $region72: #{tpu_custom_call.1} parent=67 // pred_fallthru
        _
    $region68: #{tpu_custom_call.1} parent=5 // pred_fallthru
      _
  $region6: #{tpu_custom_call.1} parent=0 // loop_footer
    %s17 = sadd.s32 1, %s13
  $region7: #{tpu_custom_call.1} parent=0 // loop_footer_branch
    %12 = sbr.rel target = $region3
  $region8: #{tpu_custom_call.1} parent=0 // loop_exit
    _

</llo_original>
